<compile_context>
chip_gen: v7x
topology: tpu7x:2x2x1
jax: 0.10.0
libtpu: 0.0.40
codegen_flags: <defaults>
</compile_context>

<pallas_src>
import functools

import jax
import jax.numpy as jnp
from jax.experimental import pallas as pl
from jax.experimental.pallas import tpu as pltpu


# ----------------------------------------------------------------------------
# Fused kernel: all GRU layers + linear head in one invocation.
# Ref order: x2d, (w_ih^T, w_hh^T, bias_fused, b_hn) * L, lin_w^T, lin_b, h0,
#            logits_out, hT_out, gi_scratch
# ----------------------------------------------------------------------------
def _fused_gru_head_kernel(*refs, T, B, H, C, num_layers):
    n_in = 1 + 4 * num_layers + 3
    x_ref = refs[0]                                   # (T*B, I)
    layer_refs = [refs[1 + 4 * l: 1 + 4 * (l + 1)] for l in range(num_layers)]
    linw_ref = refs[1 + 4 * num_layers]               # (H, C)
    linb_ref = refs[2 + 4 * num_layers]               # (1, C)
    h0_ref = refs[3 + 4 * num_layers]                 # (L, B, H) (aliased w/ hT)
    logits_ref = refs[n_in]                           # (B, C)
    hT_ref = refs[n_in + 1]                           # (L, B, H)
    gi_scr = refs[n_in + 2]                           # VMEM (T, B, 3H)

    f32 = jnp.float32
    xs = None      # per-step (B, H) inputs for layers > 0 (kept as values)
    h = None
    for l in range(num_layers):
        wih_ref, whh_ref, bi_ref, bhn_ref = layer_refs[l]
        wih = wih_ref[...]            # (in, 3H)
        whh = whh_ref[...]            # (H, 3H)
        bi = bi_ref[...]              # (1, 3H)  = b_ih + [b_hr, b_hz, 0]
        bhn = bhn_ref[...]            # (1, H)   = b_hn

        # ---- hoisted input projection (off the serial h-chain) -------------
        if l == 0:
            # One big MXU matmul for the whole sequence, then distribute once
            # into the (T, B, 3H) scratch so the t-loop below only does free
            # leading-axis reads (no per-step sublane slicing).
            gi2d = jnp.dot(x_ref[...], wih, preferred_element_type=f32) + bi
            for t in range(T):
                gi_scr[t] = gi2d[t * B:(t + 1) * B, :]
        else:
            # T small, mutually independent matmuls on the previous layer's
            # per-step outputs; independent of this layer's recurrence, they
            # pipeline on the MXU and avoid any (T,B,H)->(T*B,H) relayout.
            for t in range(T):
                gi_scr[t] = (jnp.dot(xs[t], wih, preferred_element_type=f32)
                             + bi)

        # ---- serial recurrence (fully unrolled; T is small) -----------------
        h = h0_ref[l]                                 # (B, H)
        xs_next = []
        for t in range(T):
            gi_t = gi_scr[t]                          # (B, 3H) unmasked load
            gh = jnp.dot(h, whh, preferred_element_type=f32)  # (B, 3H)
            rz = jax.nn.sigmoid(gi_t[:, :2 * H] + gh[:, :2 * H])  # fused r,z
            r = rz[:, :H]
            z = rz[:, H:]
            n = jnp.tanh(gi_t[:, 2 * H:] + r * (gh[:, 2 * H:] + bhn))
            h = n + z * (h - n)
            if l < num_layers - 1:
                xs_next.append(h)                     # stays in vregs/VMEM
        hT_ref[l] = h.astype(hT_ref.dtype)            # final hidden only
        xs = xs_next

    # Linear head fused on the last layer's final hidden state.
    logits_ref[...] = (jnp.dot(h, linw_ref[...], preferred_element_type=f32)
                       + linb_ref[...]).astype(logits_ref.dtype)


# ----------------------------------------------------------------------------
# One-time parameter preparation (pre-transposed weights, fused biases) —
# keeps per-call wrapper overhead to a single reshape of x.
# ----------------------------------------------------------------------------
def prepare_params(params, hidden_size, num_layers):
    H = hidden_size
    prepped = []
    for l in range(num_layers):
        w_ih = params[f"w_ih_l{l}"]                       # (3H, in)
        w_hh = params[f"w_hh_l{l}"]                       # (3H, H)
        b_ih = params[f"b_ih_l{l}"]                       # (3H,)
        b_hh = params[f"b_hh_l{l}"]                       # (3H,)
        bias_fused = b_ih + jnp.concatenate(
            [b_hh[:2 * H], jnp.zeros((H,), b_hh.dtype)])
        prepped += [
            jnp.transpose(w_ih),                          # (in, 3H)
            jnp.transpose(w_hh),                          # (H, 3H)
            bias_fused.reshape(1, 3 * H),                 # (1, 3H)
            b_hh[2 * H:].reshape(1, H),                   # (1, H)
        ]
    prepped += [
        jnp.transpose(params["lin_w"]),                   # (H, C)
        params["lin_b"].reshape(1, -1),                   # (1, C)
    ]
    return prepped


# ----------------------------------------------------------------------------
# Full module forward:  (logits, hidden) = LSTM_RNN(x, hidden)
# x: (T, B, no_classes)   hidden: (num_layers, B, H)
# ----------------------------------------------------------------------------
def lstm_rnn_forward(prepped, x, hidden):
    T, B, I = x.shape
    num_layers, _, H = hidden.shape
    C = prepped[-1].shape[-1]

    kernel = functools.partial(_fused_gru_head_kernel,
                               T=T, B=B, H=H, C=C, num_layers=num_layers)
    logits, new_hidden = pl.pallas_call(
        kernel,
        out_shape=(
            jax.ShapeDtypeStruct((B, C), jnp.float32),
            jax.ShapeDtypeStruct((num_layers, B, H), jnp.float32),
        ),
        scratch_shapes=[pltpu.VMEM((T, B, 3 * H), jnp.float32)],
        # hidden (operand 1 + 4L + 2) aliases the new-hidden output (index 1).
        input_output_aliases={4 * num_layers + 3: 1},
    )(x.reshape(T * B, I), *prepped, hidden)
    return logits, new_hidden


# ----------------------------------------------------------------------------
# Deterministic parameter init (PyTorch-layout shapes, as in __init__)
# ----------------------------------------------------------------------------
def init_params(key, no_classes, hidden_size, num_layers):
    params = {}
    k = key
    for l in range(num_layers):
        in_sz = no_classes if l == 0 else hidden_size
        k, k1, k2, k3, k4 = jax.random.split(k, 5)
        std_ih = (2.0 / (in_sz + 3 * hidden_size)) ** 0.5
        std_hh = (2.0 / (hidden_size + 3 * hidden_size)) ** 0.5
        params[f"w_ih_l{l}"] = std_ih * jax.random.normal(
            k1, (3 * hidden_size, in_sz), jnp.float32)
        params[f"w_hh_l{l}"] = std_hh * jax.random.normal(
            k2, (3 * hidden_size, hidden_size), jnp.float32)
        bound = 1.0 / (hidden_size ** 0.5)
        params[f"b_ih_l{l}"] = jax.random.uniform(
            k3, (3 * hidden_size,), jnp.float32, -bound, bound)
        params[f"b_hh_l{l}"] = jax.random.uniform(
            k4, (3 * hidden_size,), jnp.float32, -bound, bound)
    k, k1, k2 = jax.random.split(k, 3)
    params["lin_w"] = 0.075 * jax.random.normal(
        k1, (no_classes, hidden_size), jnp.float32)
    params["lin_b"] = 0.075 * jax.random.normal(k2, (no_classes,), jnp.float32)
    return params


# ----------------------------------------------------------------------------
# Pure-JAX reference (PyTorch GRU semantics) for the correctness check
# ----------------------------------------------------------------------------
def _ref_forward(params, x, hidden):
    num_layers = hidden.shape[0]
    layer_in = x
    new_h = []
    for l in range(num_layers):
        w_ih = params[f"w_ih_l{l}"]; w_hh = params[f"w_hh_l{l}"]
        b_ih = params[f"b_ih_l{l}"]; b_hh = params[f"b_hh_l{l}"]
        H = w_hh.shape[1]
        h = hidden[l]
        outs = []
        for t in range(x.shape[0]):
            gi = layer_in[t] @ w_ih.T + b_ih
            gh = h @ w_hh.T + b_hh
            r = jax.nn.sigmoid(gi[:, :H] + gh[:, :H])
            z = jax.nn.sigmoid(gi[:, H:2 * H] + gh[:, H:2 * H])
            n = jnp.tanh(gi[:, 2 * H:] + r * gh[:, 2 * H:])
            h = (1.0 - z) * n + z * h
            outs.append(h)
        layer_in = jnp.stack(outs, axis=0)
        new_h.append(h)
    logits = layer_in[-1] @ params["lin_w"].T + params["lin_b"]
    return logits, jnp.stack(new_h, axis=0)


if __name__ == "__main__":
    # Shapes implied by the module: hidden_size=32, num_layers=2, batch=2,
    # no_classes=16, seq_len=8
    no_classes, hidden_size, num_layers, batch, seq = 16, 32, 2, 2, 8

    key = jax.random.PRNGKey(0)
    kp, kx = jax.random.split(key)
    params = init_params(kp, no_classes, hidden_size, num_layers)
    x = jax.random.normal(kx, (seq, batch, no_classes), jnp.float32)
    hidden0 = jnp.zeros((num_layers, batch, hidden_size), jnp.float32)

    # One-time (outside the hot path): weight transposes + bias fusion.
    prepped = prepare_params(params, hidden_size, num_layers)

    fwd = jax.jit(functools.partial(lstm_rnn_forward, prepped))
    logits, new_hidden = fwd(x, hidden0)
    jax.block_until_ready((logits, new_hidden))

    ref_logits, ref_hidden = _ref_forward(params, x, hidden0)
    assert logits.shape == (batch, no_classes)
    assert new_hidden.shape == (num_layers, batch, hidden_size)
    assert jnp.allclose(logits, ref_logits, atol=1e-5, rtol=1e-4)
    assert jnp.allclose(new_hidden, ref_hidden, atol=1e-5, rtol=1e-4)

    print("KERNEL_OK")
</pallas_src>

<mosaic_0001>
module attributes {stable_mosaic.version = 11 : i64} {
  func.func @_fused_gru_head_kernel(%arg0: memref<16x16xf32, #tpu.memory_space<vmem>>, %arg1: memref<16x96xf32, #tpu.memory_space<vmem>>, %arg2: memref<32x96xf32, #tpu.memory_space<vmem>>, %arg3: memref<1x96xf32, #tpu.memory_space<vmem>>, %arg4: memref<1x32xf32, #tpu.memory_space<vmem>>, %arg5: memref<32x96xf32, #tpu.memory_space<vmem>>, %arg6: memref<32x96xf32, #tpu.memory_space<vmem>>, %arg7: memref<1x96xf32, #tpu.memory_space<vmem>>, %arg8: memref<1x32xf32, #tpu.memory_space<vmem>>, %arg9: memref<32x16xf32, #tpu.memory_space<vmem>>, %arg10: memref<1x16xf32, #tpu.memory_space<vmem>>, %arg11: memref<2x2x32xf32, #tpu.memory_space<vmem>>, %arg12: memref<2x16xf32, #tpu.memory_space<vmem>>, %arg13: memref<2x2x32xf32, #tpu.memory_space<vmem>>, %arg14: memref<8x2x96xf32, #tpu.memory_space<vmem>>) attributes {dimension_semantics = [], scalar_prefetch = 0 : i64, scratch_operands = 1 : i64, tpu.core_type = #tpu.core_type<tc>} {
    %c0 = arith.constant 0 : index
    %c0_0 = arith.constant 0 : index
    %0 = vector.load %arg1[%c0, %c0_0] : memref<16x96xf32, #tpu.memory_space<vmem>>, vector<16x96xf32>
    %c0_1 = arith.constant 0 : index
    %c0_2 = arith.constant 0 : index
    %1 = vector.load %arg2[%c0_1, %c0_2] : memref<32x96xf32, #tpu.memory_space<vmem>>, vector<32x96xf32>
    %c0_3 = arith.constant 0 : index
    %c0_4 = arith.constant 0 : index
    %2 = vector.load %arg3[%c0_3, %c0_4] : memref<1x96xf32, #tpu.memory_space<vmem>>, vector<1x96xf32>
    %c0_5 = arith.constant 0 : index
    %c0_6 = arith.constant 0 : index
    %3 = vector.load %arg4[%c0_5, %c0_6] : memref<1x32xf32, #tpu.memory_space<vmem>>, vector<1x32xf32>
    %c0_7 = arith.constant 0 : index
    %c0_8 = arith.constant 0 : index
    %4 = vector.load %arg0[%c0_7, %c0_8] : memref<16x16xf32, #tpu.memory_space<vmem>>, vector<16x16xf32>
    %cst = arith.constant dense<0.000000e+00> : vector<16x96xf32>
    %5 = tpu.matmul %4, %0, %cst {dimension_numbers = #tpu.dot_dimension_numbers<[1], [0], [0], [1], [0, 0, 1, 1], [], []>} : vector<16x16xf32>, vector<16x96xf32>, vector<16x96xf32> -> vector<16x96xf32>
    %6 = vector.broadcast %2 : vector<1x96xf32> to vector<16x96xf32>
    %7 = arith.addf %5, %6 : vector<16x96xf32>
    %8 = vector.extract_strided_slice %7 {offsets = [0, 0], sizes = [2, 96], strides = [1, 1]} : vector<16x96xf32> to vector<2x96xf32>
    %c0_9 = arith.constant 0 : index
    %c0_10 = arith.constant 0 : index
    %c0_11 = arith.constant 0 : index
    %9 = vector.load %arg14[%c0_9, %c0_10, %c0_11] : memref<8x2x96xf32, #tpu.memory_space<vmem>>, vector<1x2x96xf32>
    %10 = vector.shape_cast %9 : vector<1x2x96xf32> to vector<2x96xf32>
    %11 = vector.shape_cast %8 : vector<2x96xf32> to vector<1x2x96xf32>
    tpu.vector_store %arg14[%c0_9, %c0_10, %c0_11], %11 {strides = array<i32>} : memref<8x2x96xf32, #tpu.memory_space<vmem>>, vector<1x2x96xf32>,
    %12 = vector.extract_strided_slice %7 {offsets = [2, 0], sizes = [2, 96], strides = [1, 1]} : vector<16x96xf32> to vector<2x96xf32>
    %c1 = arith.constant 1 : index
    %c0_12 = arith.constant 0 : index
    %c0_13 = arith.constant 0 : index
    %13 = vector.load %arg14[%c1, %c0_12, %c0_13] : memref<8x2x96xf32, #tpu.memory_space<vmem>>, vector<1x2x96xf32>
    %14 = vector.shape_cast %13 : vector<1x2x96xf32> to vector<2x96xf32>
    %15 = vector.shape_cast %12 : vector<2x96xf32> to vector<1x2x96xf32>
    tpu.vector_store %arg14[%c1, %c0_12, %c0_13], %15 {strides = array<i32>} : memref<8x2x96xf32, #tpu.memory_space<vmem>>, vector<1x2x96xf32>,
    %16 = vector.extract_strided_slice %7 {offsets = [4, 0], sizes = [2, 96], strides = [1, 1]} : vector<16x96xf32> to vector<2x96xf32>
    %c2 = arith.constant 2 : index
    %c0_14 = arith.constant 0 : index
    %c0_15 = arith.constant 0 : index
    %17 = vector.load %arg14[%c2, %c0_14, %c0_15] : memref<8x2x96xf32, #tpu.memory_space<vmem>>, vector<1x2x96xf32>
    %18 = vector.shape_cast %17 : vector<1x2x96xf32> to vector<2x96xf32>
    %19 = vector.shape_cast %16 : vector<2x96xf32> to vector<1x2x96xf32>
    tpu.vector_store %arg14[%c2, %c0_14, %c0_15], %19 {strides = array<i32>} : memref<8x2x96xf32, #tpu.memory_space<vmem>>, vector<1x2x96xf32>,
    %20 = vector.extract_strided_slice %7 {offsets = [6, 0], sizes = [2, 96], strides = [1, 1]} : vector<16x96xf32> to vector<2x96xf32>
    %c3 = arith.constant 3 : index
    %c0_16 = arith.constant 0 : index
    %c0_17 = arith.constant 0 : index
    %21 = vector.load %arg14[%c3, %c0_16, %c0_17] : memref<8x2x96xf32, #tpu.memory_space<vmem>>, vector<1x2x96xf32>
    %22 = vector.shape_cast %21 : vector<1x2x96xf32> to vector<2x96xf32>
    %23 = vector.shape_cast %20 : vector<2x96xf32> to vector<1x2x96xf32>
    tpu.vector_store %arg14[%c3, %c0_16, %c0_17], %23 {strides = array<i32>} : memref<8x2x96xf32, #tpu.memory_space<vmem>>, vector<1x2x96xf32>,
    %24 = vector.extract_strided_slice %7 {offsets = [8, 0], sizes = [2, 96], strides = [1, 1]} : vector<16x96xf32> to vector<2x96xf32>
    %c4 = arith.constant 4 : index
    %c0_18 = arith.constant 0 : index
    %c0_19 = arith.constant 0 : index
    %25 = vector.load %arg14[%c4, %c0_18, %c0_19] : memref<8x2x96xf32, #tpu.memory_space<vmem>>, vector<1x2x96xf32>
    %26 = vector.shape_cast %25 : vector<1x2x96xf32> to vector<2x96xf32>
    %27 = vector.shape_cast %24 : vector<2x96xf32> to vector<1x2x96xf32>
    tpu.vector_store %arg14[%c4, %c0_18, %c0_19], %27 {strides = array<i32>} : memref<8x2x96xf32, #tpu.memory_space<vmem>>, vector<1x2x96xf32>,
    %28 = vector.extract_strided_slice %7 {offsets = [10, 0], sizes = [2, 96], strides = [1, 1]} : vector<16x96xf32> to vector<2x96xf32>
    %c5 = arith.constant 5 : index
    %c0_20 = arith.constant 0 : index
    %c0_21 = arith.constant 0 : index
    %29 = vector.load %arg14[%c5, %c0_20, %c0_21] : memref<8x2x96xf32, #tpu.memory_space<vmem>>, vector<1x2x96xf32>
    %30 = vector.shape_cast %29 : vector<1x2x96xf32> to vector<2x96xf32>
    %31 = vector.shape_cast %28 : vector<2x96xf32> to vector<1x2x96xf32>
    tpu.vector_store %arg14[%c5, %c0_20, %c0_21], %31 {strides = array<i32>} : memref<8x2x96xf32, #tpu.memory_space<vmem>>, vector<1x2x96xf32>,
    %32 = vector.extract_strided_slice %7 {offsets = [12, 0], sizes = [2, 96], strides = [1, 1]} : vector<16x96xf32> to vector<2x96xf32>
    %c6 = arith.constant 6 : index
    %c0_22 = arith.constant 0 : index
    %c0_23 = arith.constant 0 : index
    %33 = vector.load %arg14[%c6, %c0_22, %c0_23] : memref<8x2x96xf32, #tpu.memory_space<vmem>>, vector<1x2x96xf32>
    %34 = vector.shape_cast %33 : vector<1x2x96xf32> to vector<2x96xf32>
    %35 = vector.shape_cast %32 : vector<2x96xf32> to vector<1x2x96xf32>
    tpu.vector_store %arg14[%c6, %c0_22, %c0_23], %35 {strides = array<i32>} : memref<8x2x96xf32, #tpu.memory_space<vmem>>, vector<1x2x96xf32>,
    %36 = vector.extract_strided_slice %7 {offsets = [14, 0], sizes = [2, 96], strides = [1, 1]} : vector<16x96xf32> to vector<2x96xf32>
    %c7 = arith.constant 7 : index
    %c0_24 = arith.constant 0 : index
    %c0_25 = arith.constant 0 : index
    %37 = vector.load %arg14[%c7, %c0_24, %c0_25] : memref<8x2x96xf32, #tpu.memory_space<vmem>>, vector<1x2x96xf32>
    %38 = vector.shape_cast %37 : vector<1x2x96xf32> to vector<2x96xf32>
    %39 = vector.shape_cast %36 : vector<2x96xf32> to vector<1x2x96xf32>
    tpu.vector_store %arg14[%c7, %c0_24, %c0_25], %39 {strides = array<i32>} : memref<8x2x96xf32, #tpu.memory_space<vmem>>, vector<1x2x96xf32>,
    %c0_26 = arith.constant 0 : index
    %c0_27 = arith.constant 0 : index
    %c0_28 = arith.constant 0 : index
    %40 = vector.load %arg11[%c0_26, %c0_27, %c0_28] : memref<2x2x32xf32, #tpu.memory_space<vmem>>, vector<1x2x32xf32>
    %41 = vector.shape_cast %40 : vector<1x2x32xf32> to vector<2x32xf32>
    %c0_29 = arith.constant 0 : index
    %c0_30 = arith.constant 0 : index
    %c0_31 = arith.constant 0 : index
    %42 = vector.load %arg14[%c0_29, %c0_30, %c0_31] : memref<8x2x96xf32, #tpu.memory_space<vmem>>, vector<1x2x96xf32>
    %43 = vector.shape_cast %42 : vector<1x2x96xf32> to vector<2x96xf32>
    %cst_32 = arith.constant dense<0.000000e+00> : vector<2x96xf32>
    %44 = tpu.matmul %41, %1, %cst_32 {dimension_numbers = #tpu.dot_dimension_numbers<[1], [0], [0], [1], [0, 0, 1, 1], [], []>} : vector<2x32xf32>, vector<32x96xf32>, vector<2x96xf32> -> vector<2x96xf32>
    %45 = vector.extract_strided_slice %43 {offsets = [0, 0], sizes = [2, 64], strides = [1, 1]} : vector<2x96xf32> to vector<2x64xf32>
    %46 = vector.extract_strided_slice %44 {offsets = [0, 0], sizes = [2, 64], strides = [1, 1]} : vector<2x96xf32> to vector<2x64xf32>
    %47 = arith.addf %45, %46 : vector<2x64xf32>
    %48 = arith.negf %47 : vector<2x64xf32>
    %49 = math.exp %48 : vector<2x64xf32>
    %cst_33 = arith.constant 1.000000e+00 : f32
    %50 = vector.broadcast %cst_33 : f32 to vector<2x64xf32>
    %51 = arith.addf %50, %49 : vector<2x64xf32>
    %52 = arith.divf %50, %51 : vector<2x64xf32>
    %53 = vector.extract_strided_slice %52 {offsets = [0, 0], sizes = [2, 32], strides = [1, 1]} : vector<2x64xf32> to vector<2x32xf32>
    %54 = vector.extract_strided_slice %52 {offsets = [0, 32], sizes = [2, 32], strides = [1, 1]} : vector<2x64xf32> to vector<2x32xf32>
    %55 = vector.extract_strided_slice %43 {offsets = [0, 64], sizes = [2, 32], strides = [1, 1]} : vector<2x96xf32> to vector<2x32xf32>
    %56 = vector.extract_strided_slice %44 {offsets = [0, 64], sizes = [2, 32], strides = [1, 1]} : vector<2x96xf32> to vector<2x32xf32>
    %57 = vector.broadcast %3 : vector<1x32xf32> to vector<2x32xf32>
    %58 = arith.addf %56, %57 : vector<2x32xf32>
    %59 = arith.mulf %53, %58 : vector<2x32xf32>
    %60 = arith.addf %55, %59 : vector<2x32xf32>
    %61 = math.tanh %60 : vector<2x32xf32>
    %62 = arith.subf %41, %61 : vector<2x32xf32>
    %63 = arith.mulf %54, %62 : vector<2x32xf32>
    %64 = arith.addf %61, %63 : vector<2x32xf32>
    %c1_34 = arith.constant 1 : index
    %c0_35 = arith.constant 0 : index
    %c0_36 = arith.constant 0 : index
    %65 = vector.load %arg14[%c1_34, %c0_35, %c0_36] : memref<8x2x96xf32, #tpu.memory_space<vmem>>, vector<1x2x96xf32>
    %66 = vector.shape_cast %65 : vector<1x2x96xf32> to vector<2x96xf32>
    %cst_37 = arith.constant dense<0.000000e+00> : vector<2x96xf32>
    %67 = tpu.matmul %64, %1, %cst_37 {dimension_numbers = #tpu.dot_dimension_numbers<[1], [0], [0], [1], [0, 0, 1, 1], [], []>} : vector<2x32xf32>, vector<32x96xf32>, vector<2x96xf32> -> vector<2x96xf32>
    %68 = vector.extract_strided_slice %66 {offsets = [0, 0], sizes = [2, 64], strides = [1, 1]} : vector<2x96xf32> to vector<2x64xf32>
    %69 = vector.extract_strided_slice %67 {offsets = [0, 0], sizes = [2, 64], strides = [1, 1]} : vector<2x96xf32> to vector<2x64xf32>
    %70 = arith.addf %68, %69 : vector<2x64xf32>
    %71 = arith.negf %70 : vector<2x64xf32>
    %72 = math.exp %71 : vector<2x64xf32>
    %cst_38 = arith.constant 1.000000e+00 : f32
    %73 = vector.broadcast %cst_38 : f32 to vector<2x64xf32>
    %74 = arith.addf %73, %72 : vector<2x64xf32>
    %75 = arith.divf %73, %74 : vector<2x64xf32>
    %76 = vector.extract_strided_slice %75 {offsets = [0, 0], sizes = [2, 32], strides = [1, 1]} : vector<2x64xf32> to vector<2x32xf32>
    %77 = vector.extract_strided_slice %75 {offsets = [0, 32], sizes = [2, 32], strides = [1, 1]} : vector<2x64xf32> to vector<2x32xf32>
    %78 = vector.extract_strided_slice %66 {offsets = [0, 64], sizes = [2, 32], strides = [1, 1]} : vector<2x96xf32> to vector<2x32xf32>
    %79 = vector.extract_strided_slice %67 {offsets = [0, 64], sizes = [2, 32], strides = [1, 1]} : vector<2x96xf32> to vector<2x32xf32>
    %80 = vector.broadcast %3 : vector<1x32xf32> to vector<2x32xf32>
    %81 = arith.addf %79, %80 : vector<2x32xf32>
    %82 = arith.mulf %76, %81 : vector<2x32xf32>
    %83 = arith.addf %78, %82 : vector<2x32xf32>
    %84 = math.tanh %83 : vector<2x32xf32>
    %85 = arith.subf %64, %84 : vector<2x32xf32>
    %86 = arith.mulf %77, %85 : vector<2x32xf32>
    %87 = arith.addf %84, %86 : vector<2x32xf32>
    %c2_39 = arith.constant 2 : index
    %c0_40 = arith.constant 0 : index
    %c0_41 = arith.constant 0 : index
    %88 = vector.load %arg14[%c2_39, %c0_40, %c0_41] : memref<8x2x96xf32, #tpu.memory_space<vmem>>, vector<1x2x96xf32>
    %89 = vector.shape_cast %88 : vector<1x2x96xf32> to vector<2x96xf32>
    %cst_42 = arith.constant dense<0.000000e+00> : vector<2x96xf32>
    %90 = tpu.matmul %87, %1, %cst_42 {dimension_numbers = #tpu.dot_dimension_numbers<[1], [0], [0], [1], [0, 0, 1, 1], [], []>} : vector<2x32xf32>, vector<32x96xf32>, vector<2x96xf32> -> vector<2x96xf32>
    %91 = vector.extract_strided_slice %89 {offsets = [0, 0], sizes = [2, 64], strides = [1, 1]} : vector<2x96xf32> to vector<2x64xf32>
    %92 = vector.extract_strided_slice %90 {offsets = [0, 0], sizes = [2, 64], strides = [1, 1]} : vector<2x96xf32> to vector<2x64xf32>
    %93 = arith.addf %91, %92 : vector<2x64xf32>
    %94 = arith.negf %93 : vector<2x64xf32>
    %95 = math.exp %94 : vector<2x64xf32>
    %cst_43 = arith.constant 1.000000e+00 : f32
    %96 = vector.broadcast %cst_43 : f32 to vector<2x64xf32>
    %97 = arith.addf %96, %95 : vector<2x64xf32>
    %98 = arith.divf %96, %97 : vector<2x64xf32>
    %99 = vector.extract_strided_slice %98 {offsets = [0, 0], sizes = [2, 32], strides = [1, 1]} : vector<2x64xf32> to vector<2x32xf32>
    %100 = vector.extract_strided_slice %98 {offsets = [0, 32], sizes = [2, 32], strides = [1, 1]} : vector<2x64xf32> to vector<2x32xf32>
    %101 = vector.extract_strided_slice %89 {offsets = [0, 64], sizes = [2, 32], strides = [1, 1]} : vector<2x96xf32> to vector<2x32xf32>
    %102 = vector.extract_strided_slice %90 {offsets = [0, 64], sizes = [2, 32], strides = [1, 1]} : vector<2x96xf32> to vector<2x32xf32>
    %103 = vector.broadcast %3 : vector<1x32xf32> to vector<2x32xf32>
    %104 = arith.addf %102, %103 : vector<2x32xf32>
    %105 = arith.mulf %99, %104 : vector<2x32xf32>
    %106 = arith.addf %101, %105 : vector<2x32xf32>
    %107 = math.tanh %106 : vector<2x32xf32>
    %108 = arith.subf %87, %107 : vector<2x32xf32>
    %109 = arith.mulf %100, %108 : vector<2x32xf32>
    %110 = arith.addf %107, %109 : vector<2x32xf32>
    %c3_44 = arith.constant 3 : index
    %c0_45 = arith.constant 0 : index
    %c0_46 = arith.constant 0 : index
    %111 = vector.load %arg14[%c3_44, %c0_45, %c0_46] : memref<8x2x96xf32, #tpu.memory_space<vmem>>, vector<1x2x96xf32>
    %112 = vector.shape_cast %111 : vector<1x2x96xf32> to vector<2x96xf32>
    %cst_47 = arith.constant dense<0.000000e+00> : vector<2x96xf32>
    %113 = tpu.matmul %110, %1, %cst_47 {dimension_numbers = #tpu.dot_dimension_numbers<[1], [0], [0], [1], [0, 0, 1, 1], [], []>} : vector<2x32xf32>, vector<32x96xf32>, vector<2x96xf32> -> vector<2x96xf32>
    %114 = vector.extract_strided_slice %112 {offsets = [0, 0], sizes = [2, 64], strides = [1, 1]} : vector<2x96xf32> to vector<2x64xf32>
    %115 = vector.extract_strided_slice %113 {offsets = [0, 0], sizes = [2, 64], strides = [1, 1]} : vector<2x96xf32> to vector<2x64xf32>
    %116 = arith.addf %114, %115 : vector<2x64xf32>
    %117 = arith.negf %116 : vector<2x64xf32>
    %118 = math.exp %117 : vector<2x64xf32>
    %cst_48 = arith.constant 1.000000e+00 : f32
    %119 = vector.broadcast %cst_48 : f32 to vector<2x64xf32>
    %120 = arith.addf %119, %118 : vector<2x64xf32>
    %121 = arith.divf %119, %120 : vector<2x64xf32>
    %122 = vector.extract_strided_slice %121 {offsets = [0, 0], sizes = [2, 32], strides = [1, 1]} : vector<2x64xf32> to vector<2x32xf32>
    %123 = vector.extract_strided_slice %121 {offsets = [0, 32], sizes = [2, 32], strides = [1, 1]} : vector<2x64xf32> to vector<2x32xf32>
    %124 = vector.extract_strided_slice %112 {offsets = [0, 64], sizes = [2, 32], strides = [1, 1]} : vector<2x96xf32> to vector<2x32xf32>
    %125 = vector.extract_strided_slice %113 {offsets = [0, 64], sizes = [2, 32], strides = [1, 1]} : vector<2x96xf32> to vector<2x32xf32>
    %126 = vector.broadcast %3 : vector<1x32xf32> to vector<2x32xf32>
    %127 = arith.addf %125, %126 : vector<2x32xf32>
    %128 = arith.mulf %122, %127 : vector<2x32xf32>
    %129 = arith.addf %124, %128 : vector<2x32xf32>
    %130 = math.tanh %129 : vector<2x32xf32>
    %131 = arith.subf %110, %130 : vector<2x32xf32>
    %132 = arith.mulf %123, %131 : vector<2x32xf32>
    %133 = arith.addf %130, %132 : vector<2x32xf32>
    %c4_49 = arith.constant 4 : index
    %c0_50 = arith.constant 0 : index
    %c0_51 = arith.constant 0 : index
    %134 = vector.load %arg14[%c4_49, %c0_50, %c0_51] : memref<8x2x96xf32, #tpu.memory_space<vmem>>, vector<1x2x96xf32>
    %135 = vector.shape_cast %134 : vector<1x2x96xf32> to vector<2x96xf32>
    %cst_52 = arith.constant dense<0.000000e+00> : vector<2x96xf32>
    %136 = tpu.matmul %133, %1, %cst_52 {dimension_numbers = #tpu.dot_dimension_numbers<[1], [0], [0], [1], [0, 0, 1, 1], [], []>} : vector<2x32xf32>, vector<32x96xf32>, vector<2x96xf32> -> vector<2x96xf32>
    %137 = vector.extract_strided_slice %135 {offsets = [0, 0], sizes = [2, 64], strides = [1, 1]} : vector<2x96xf32> to vector<2x64xf32>
    %138 = vector.extract_strided_slice %136 {offsets = [0, 0], sizes = [2, 64], strides = [1, 1]} : vector<2x96xf32> to vector<2x64xf32>
    %139 = arith.addf %137, %138 : vector<2x64xf32>
    %140 = arith.negf %139 : vector<2x64xf32>
    %141 = math.exp %140 : vector<2x64xf32>
    %cst_53 = arith.constant 1.000000e+00 : f32
    %142 = vector.broadcast %cst_53 : f32 to vector<2x64xf32>
    %143 = arith.addf %142, %141 : vector<2x64xf32>
    %144 = arith.divf %142, %143 : vector<2x64xf32>
    %145 = vector.extract_strided_slice %144 {offsets = [0, 0], sizes = [2, 32], strides = [1, 1]} : vector<2x64xf32> to vector<2x32xf32>
    %146 = vector.extract_strided_slice %144 {offsets = [0, 32], sizes = [2, 32], strides = [1, 1]} : vector<2x64xf32> to vector<2x32xf32>
    %147 = vector.extract_strided_slice %135 {offsets = [0, 64], sizes = [2, 32], strides = [1, 1]} : vector<2x96xf32> to vector<2x32xf32>
    %148 = vector.extract_strided_slice %136 {offsets = [0, 64], sizes = [2, 32], strides = [1, 1]} : vector<2x96xf32> to vector<2x32xf32>
    %149 = vector.broadcast %3 : vector<1x32xf32> to vector<2x32xf32>
    %150 = arith.addf %148, %149 : vector<2x32xf32>
    %151 = arith.mulf %145, %150 : vector<2x32xf32>
    %152 = arith.addf %147, %151 : vector<2x32xf32>
    %153 = math.tanh %152 : vector<2x32xf32>
    %154 = arith.subf %133, %153 : vector<2x32xf32>
    %155 = arith.mulf %146, %154 : vector<2x32xf32>
    %156 = arith.addf %153, %155 : vector<2x32xf32>
    %c5_54 = arith.constant 5 : index
    %c0_55 = arith.constant 0 : index
    %c0_56 = arith.constant 0 : index
    %157 = vector.load %arg14[%c5_54, %c0_55, %c0_56] : memref<8x2x96xf32, #tpu.memory_space<vmem>>, vector<1x2x96xf32>
    %158 = vector.shape_cast %157 : vector<1x2x96xf32> to vector<2x96xf32>
    %cst_57 = arith.constant dense<0.000000e+00> : vector<2x96xf32>
    %159 = tpu.matmul %156, %1, %cst_57 {dimension_numbers = #tpu.dot_dimension_numbers<[1], [0], [0], [1], [0, 0, 1, 1], [], []>} : vector<2x32xf32>, vector<32x96xf32>, vector<2x96xf32> -> vector<2x96xf32>
    %160 = vector.extract_strided_slice %158 {offsets = [0, 0], sizes = [2, 64], strides = [1, 1]} : vector<2x96xf32> to vector<2x64xf32>
    %161 = vector.extract_strided_slice %159 {offsets = [0, 0], sizes = [2, 64], strides = [1, 1]} : vector<2x96xf32> to vector<2x64xf32>
    %162 = arith.addf %160, %161 : vector<2x64xf32>
    %163 = arith.negf %162 : vector<2x64xf32>
    %164 = math.exp %163 : vector<2x64xf32>
    %cst_58 = arith.constant 1.000000e+00 : f32
    %165 = vector.broadcast %cst_58 : f32 to vector<2x64xf32>
    %166 = arith.addf %165, %164 : vector<2x64xf32>
    %167 = arith.divf %165, %166 : vector<2x64xf32>
    %168 = vector.extract_strided_slice %167 {offsets = [0, 0], sizes = [2, 32], strides = [1, 1]} : vector<2x64xf32> to vector<2x32xf32>
    %169 = vector.extract_strided_slice %167 {offsets = [0, 32], sizes = [2, 32], strides = [1, 1]} : vector<2x64xf32> to vector<2x32xf32>
    %170 = vector.extract_strided_slice %158 {offsets = [0, 64], sizes = [2, 32], strides = [1, 1]} : vector<2x96xf32> to vector<2x32xf32>
    %171 = vector.extract_strided_slice %159 {offsets = [0, 64], sizes = [2, 32], strides = [1, 1]} : vector<2x96xf32> to vector<2x32xf32>
    %172 = vector.broadcast %3 : vector<1x32xf32> to vector<2x32xf32>
    %173 = arith.addf %171, %172 : vector<2x32xf32>
    %174 = arith.mulf %168, %173 : vector<2x32xf32>
    %175 = arith.addf %170, %174 : vector<2x32xf32>
    %176 = math.tanh %175 : vector<2x32xf32>
    %177 = arith.subf %156, %176 : vector<2x32xf32>
    %178 = arith.mulf %169, %177 : vector<2x32xf32>
    %179 = arith.addf %176, %178 : vector<2x32xf32>
    %c6_59 = arith.constant 6 : index
    %c0_60 = arith.constant 0 : index
    %c0_61 = arith.constant 0 : index
    %180 = vector.load %arg14[%c6_59, %c0_60, %c0_61] : memref<8x2x96xf32, #tpu.memory_space<vmem>>, vector<1x2x96xf32>
    %181 = vector.shape_cast %180 : vector<1x2x96xf32> to vector<2x96xf32>
    %cst_62 = arith.constant dense<0.000000e+00> : vector<2x96xf32>
    %182 = tpu.matmul %179, %1, %cst_62 {dimension_numbers = #tpu.dot_dimension_numbers<[1], [0], [0], [1], [0, 0, 1, 1], [], []>} : vector<2x32xf32>, vector<32x96xf32>, vector<2x96xf32> -> vector<2x96xf32>
    %183 = vector.extract_strided_slice %181 {offsets = [0, 0], sizes = [2, 64], strides = [1, 1]} : vector<2x96xf32> to vector<2x64xf32>
    %184 = vector.extract_strided_slice %182 {offsets = [0, 0], sizes = [2, 64], strides = [1, 1]} : vector<2x96xf32> to vector<2x64xf32>
    %185 = arith.addf %183, %184 : vector<2x64xf32>
    %186 = arith.negf %185 : vector<2x64xf32>
    %187 = math.exp %186 : vector<2x64xf32>
    %cst_63 = arith.constant 1.000000e+00 : f32
    %188 = vector.broadcast %cst_63 : f32 to vector<2x64xf32>
    %189 = arith.addf %188, %187 : vector<2x64xf32>
    %190 = arith.divf %188, %189 : vector<2x64xf32>
    %191 = vector.extract_strided_slice %190 {offsets = [0, 0], sizes = [2, 32], strides = [1, 1]} : vector<2x64xf32> to vector<2x32xf32>
    %192 = vector.extract_strided_slice %190 {offsets = [0, 32], sizes = [2, 32], strides = [1, 1]} : vector<2x64xf32> to vector<2x32xf32>
    %193 = vector.extract_strided_slice %181 {offsets = [0, 64], sizes = [2, 32], strides = [1, 1]} : vector<2x96xf32> to vector<2x32xf32>
    %194 = vector.extract_strided_slice %182 {offsets = [0, 64], sizes = [2, 32], strides = [1, 1]} : vector<2x96xf32> to vector<2x32xf32>
    %195 = vector.broadcast %3 : vector<1x32xf32> to vector<2x32xf32>
    %196 = arith.addf %194, %195 : vector<2x32xf32>
    %197 = arith.mulf %191, %196 : vector<2x32xf32>
    %198 = arith.addf %193, %197 : vector<2x32xf32>
    %199 = math.tanh %198 : vector<2x32xf32>
    %200 = arith.subf %179, %199 : vector<2x32xf32>
    %201 = arith.mulf %192, %200 : vector<2x32xf32>
    %202 = arith.addf %199, %201 : vector<2x32xf32>
    %c7_64 = arith.constant 7 : index
    %c0_65 = arith.constant 0 : index
    %c0_66 = arith.constant 0 : index
    %203 = vector.load %arg14[%c7_64, %c0_65, %c0_66] : memref<8x2x96xf32, #tpu.memory_space<vmem>>, vector<1x2x96xf32>
    %204 = vector.shape_cast %203 : vector<1x2x96xf32> to vector<2x96xf32>
    %cst_67 = arith.constant dense<0.000000e+00> : vector<2x96xf32>
    %205 = tpu.matmul %202, %1, %cst_67 {dimension_numbers = #tpu.dot_dimension_numbers<[1], [0], [0], [1], [0, 0, 1, 1], [], []>} : vector<2x32xf32>, vector<32x96xf32>, vector<2x96xf32> -> vector<2x96xf32>
    %206 = vector.extract_strided_slice %204 {offsets = [0, 0], sizes = [2, 64], strides = [1, 1]} : vector<2x96xf32> to vector<2x64xf32>
    %207 = vector.extract_strided_slice %205 {offsets = [0, 0], sizes = [2, 64], strides = [1, 1]} : vector<2x96xf32> to vector<2x64xf32>
    %208 = arith.addf %206, %207 : vector<2x64xf32>
    %209 = arith.negf %208 : vector<2x64xf32>
    %210 = math.exp %209 : vector<2x64xf32>
    %cst_68 = arith.constant 1.000000e+00 : f32
    %211 = vector.broadcast %cst_68 : f32 to vector<2x64xf32>
    %212 = arith.addf %211, %210 : vector<2x64xf32>
    %213 = arith.divf %211, %212 : vector<2x64xf32>
    %214 = vector.extract_strided_slice %213 {offsets = [0, 0], sizes = [2, 32], strides = [1, 1]} : vector<2x64xf32> to vector<2x32xf32>
    %215 = vector.extract_strided_slice %213 {offsets = [0, 32], sizes = [2, 32], strides = [1, 1]} : vector<2x64xf32> to vector<2x32xf32>
    %216 = vector.extract_strided_slice %204 {offsets = [0, 64], sizes = [2, 32], strides = [1, 1]} : vector<2x96xf32> to vector<2x32xf32>
    %217 = vector.extract_strided_slice %205 {offsets = [0, 64], sizes = [2, 32], strides = [1, 1]} : vector<2x96xf32> to vector<2x32xf32>
    %218 = vector.broadcast %3 : vector<1x32xf32> to vector<2x32xf32>
    %219 = arith.addf %217, %218 : vector<2x32xf32>
    %220 = arith.mulf %214, %219 : vector<2x32xf32>
    %221 = arith.addf %216, %220 : vector<2x32xf32>
    %222 = math.tanh %221 : vector<2x32xf32>
    %223 = arith.subf %202, %222 : vector<2x32xf32>
    %224 = arith.mulf %215, %223 : vector<2x32xf32>
    %225 = arith.addf %222, %224 : vector<2x32xf32>
    %c0_69 = arith.constant 0 : index
    %c0_70 = arith.constant 0 : index
    %c0_71 = arith.constant 0 : index
    %226 = vector.load %arg13[%c0_69, %c0_70, %c0_71] : memref<2x2x32xf32, #tpu.memory_space<vmem>>, vector<1x2x32xf32>
    %227 = vector.shape_cast %226 : vector<1x2x32xf32> to vector<2x32xf32>
    %228 = vector.shape_cast %225 : vector<2x32xf32> to vector<1x2x32xf32>
    tpu.vector_store %arg13[%c0_69, %c0_70, %c0_71], %228 {strides = array<i32>} : memref<2x2x32xf32, #tpu.memory_space<vmem>>, vector<1x2x32xf32>,
    %c0_72 = arith.constant 0 : index
    %c0_73 = arith.constant 0 : index
    %229 = vector.load %arg5[%c0_72, %c0_73] : memref<32x96xf32, #tpu.memory_space<vmem>>, vector<32x96xf32>
    %c0_74 = arith.constant 0 : index
    %c0_75 = arith.constant 0 : index
    %230 = vector.load %arg6[%c0_74, %c0_75] : memref<32x96xf32, #tpu.memory_space<vmem>>, vector<32x96xf32>
    %c0_76 = arith.constant 0 : index
    %c0_77 = arith.constant 0 : index
    %231 = vector.load %arg7[%c0_76, %c0_77] : memref<1x96xf32, #tpu.memory_space<vmem>>, vector<1x96xf32>
    %c0_78 = arith.constant 0 : index
    %c0_79 = arith.constant 0 : index
    %232 = vector.load %arg8[%c0_78, %c0_79] : memref<1x32xf32, #tpu.memory_space<vmem>>, vector<1x32xf32>
    %cst_80 = arith.constant dense<0.000000e+00> : vector<2x96xf32>
    %233 = tpu.matmul %64, %229, %cst_80 {dimension_numbers = #tpu.dot_dimension_numbers<[1], [0], [0], [1], [0, 0, 1, 1], [], []>} : vector<2x32xf32>, vector<32x96xf32>, vector<2x96xf32> -> vector<2x96xf32>
    %234 = vector.broadcast %231 : vector<1x96xf32> to vector<2x96xf32>
    %235 = arith.addf %233, %234 : vector<2x96xf32>
    %c0_81 = arith.constant 0 : index
    %c0_82 = arith.constant 0 : index
    %c0_83 = arith.constant 0 : index
    %236 = vector.load %arg14[%c0_81, %c0_82, %c0_83] : memref<8x2x96xf32, #tpu.memory_space<vmem>>, vector<1x2x96xf32>
    %237 = vector.shape_cast %236 : vector<1x2x96xf32> to vector<2x96xf32>
    %238 = vector.shape_cast %235 : vector<2x96xf32> to vector<1x2x96xf32>
    tpu.vector_store %arg14[%c0_81, %c0_82, %c0_83], %238 {strides = array<i32>} : memref<8x2x96xf32, #tpu.memory_space<vmem>>, vector<1x2x96xf32>,
    %cst_84 = arith.constant dense<0.000000e+00> : vector<2x96xf32>
    %239 = tpu.matmul %87, %229, %cst_84 {dimension_numbers = #tpu.dot_dimension_numbers<[1], [0], [0], [1], [0, 0, 1, 1], [], []>} : vector<2x32xf32>, vector<32x96xf32>, vector<2x96xf32> -> vector<2x96xf32>
    %240 = vector.broadcast %231 : vector<1x96xf32> to vector<2x96xf32>
    %241 = arith.addf %239, %240 : vector<2x96xf32>
    %c1_85 = arith.constant 1 : index
    %c0_86 = arith.constant 0 : index
    %c0_87 = arith.constant 0 : index
    %242 = vector.load %arg14[%c1_85, %c0_86, %c0_87] : memref<8x2x96xf32, #tpu.memory_space<vmem>>, vector<1x2x96xf32>
    %243 = vector.shape_cast %242 : vector<1x2x96xf32> to vector<2x96xf32>
    %244 = vector.shape_cast %241 : vector<2x96xf32> to vector<1x2x96xf32>
    tpu.vector_store %arg14[%c1_85, %c0_86, %c0_87], %244 {strides = array<i32>} : memref<8x2x96xf32, #tpu.memory_space<vmem>>, vector<1x2x96xf32>,
    %cst_88 = arith.constant dense<0.000000e+00> : vector<2x96xf32>
    %245 = tpu.matmul %110, %229, %cst_88 {dimension_numbers = #tpu.dot_dimension_numbers<[1], [0], [0], [1], [0, 0, 1, 1], [], []>} : vector<2x32xf32>, vector<32x96xf32>, vector<2x96xf32> -> vector<2x96xf32>
    %246 = vector.broadcast %231 : vector<1x96xf32> to vector<2x96xf32>
    %247 = arith.addf %245, %246 : vector<2x96xf32>
    %c2_89 = arith.constant 2 : index
    %c0_90 = arith.constant 0 : index
    %c0_91 = arith.constant 0 : index
    %248 = vector.load %arg14[%c2_89, %c0_90, %c0_91] : memref<8x2x96xf32, #tpu.memory_space<vmem>>, vector<1x2x96xf32>
    %249 = vector.shape_cast %248 : vector<1x2x96xf32> to vector<2x96xf32>
    %250 = vector.shape_cast %247 : vector<2x96xf32> to vector<1x2x96xf32>
    tpu.vector_store %arg14[%c2_89, %c0_90, %c0_91], %250 {strides = array<i32>} : memref<8x2x96xf32, #tpu.memory_space<vmem>>, vector<1x2x96xf32>,
    %cst_92 = arith.constant dense<0.000000e+00> : vector<2x96xf32>
    %251 = tpu.matmul %133, %229, %cst_92 {dimension_numbers = #tpu.dot_dimension_numbers<[1], [0], [0], [1], [0, 0, 1, 1], [], []>} : vector<2x32xf32>, vector<32x96xf32>, vector<2x96xf32> -> vector<2x96xf32>
    %252 = vector.broadcast %231 : vector<1x96xf32> to vector<2x96xf32>
    %253 = arith.addf %251, %252 : vector<2x96xf32>
    %c3_93 = arith.constant 3 : index
    %c0_94 = arith.constant 0 : index
    %c0_95 = arith.constant 0 : index
    %254 = vector.load %arg14[%c3_93, %c0_94, %c0_95] : memref<8x2x96xf32, #tpu.memory_space<vmem>>, vector<1x2x96xf32>
    %255 = vector.shape_cast %254 : vector<1x2x96xf32> to vector<2x96xf32>
    %256 = vector.shape_cast %253 : vector<2x96xf32> to vector<1x2x96xf32>
    tpu.vector_store %arg14[%c3_93, %c0_94, %c0_95], %256 {strides = array<i32>} : memref<8x2x96xf32, #tpu.memory_space<vmem>>, vector<1x2x96xf32>,
    %cst_96 = arith.constant dense<0.000000e+00> : vector<2x96xf32>
    %257 = tpu.matmul %156, %229, %cst_96 {dimension_numbers = #tpu.dot_dimension_numbers<[1], [0], [0], [1], [0, 0, 1, 1], [], []>} : vector<2x32xf32>, vector<32x96xf32>, vector<2x96xf32> -> vector<2x96xf32>
    %258 = vector.broadcast %231 : vector<1x96xf32> to vector<2x96xf32>
    %259 = arith.addf %257, %258 : vector<2x96xf32>
    %c4_97 = arith.constant 4 : index
    %c0_98 = arith.constant 0 : index
    %c0_99 = arith.constant 0 : index
    %260 = vector.load %arg14[%c4_97, %c0_98, %c0_99] : memref<8x2x96xf32, #tpu.memory_space<vmem>>, vector<1x2x96xf32>
    %261 = vector.shape_cast %260 : vector<1x2x96xf32> to vector<2x96xf32>
    %262 = vector.shape_cast %259 : vector<2x96xf32> to vector<1x2x96xf32>
    tpu.vector_store %arg14[%c4_97, %c0_98, %c0_99], %262 {strides = array<i32>} : memref<8x2x96xf32, #tpu.memory_space<vmem>>, vector<1x2x96xf32>,
    %cst_100 = arith.constant dense<0.000000e+00> : vector<2x96xf32>
    %263 = tpu.matmul %179, %229, %cst_100 {dimension_numbers = #tpu.dot_dimension_numbers<[1], [0], [0], [1], [0, 0, 1, 1], [], []>} : vector<2x32xf32>, vector<32x96xf32>, vector<2x96xf32> -> vector<2x96xf32>
    %264 = vector.broadcast %231 : vector<1x96xf32> to vector<2x96xf32>
    %265 = arith.addf %263, %264 : vector<2x96xf32>
    %c5_101 = arith.constant 5 : index
    %c0_102 = arith.constant 0 : index
    %c0_103 = arith.constant 0 : index
    %266 = vector.load %arg14[%c5_101, %c0_102, %c0_103] : memref<8x2x96xf32, #tpu.memory_space<vmem>>, vector<1x2x96xf32>
    %267 = vector.shape_cast %266 : vector<1x2x96xf32> to vector<2x96xf32>
    %268 = vector.shape_cast %265 : vector<2x96xf32> to vector<1x2x96xf32>
    tpu.vector_store %arg14[%c5_101, %c0_102, %c0_103], %268 {strides = array<i32>} : memref<8x2x96xf32, #tpu.memory_space<vmem>>, vector<1x2x96xf32>,
    %cst_104 = arith.constant dense<0.000000e+00> : vector<2x96xf32>
    %269 = tpu.matmul %202, %229, %cst_104 {dimension_numbers = #tpu.dot_dimension_numbers<[1], [0], [0], [1], [0, 0, 1, 1], [], []>} : vector<2x32xf32>, vector<32x96xf32>, vector<2x96xf32> -> vector<2x96xf32>
    %270 = vector.broadcast %231 : vector<1x96xf32> to vector<2x96xf32>
    %271 = arith.addf %269, %270 : vector<2x96xf32>
    %c6_105 = arith.constant 6 : index
    %c0_106 = arith.constant 0 : index
    %c0_107 = arith.constant 0 : index
    %272 = vector.load %arg14[%c6_105, %c0_106, %c0_107] : memref<8x2x96xf32, #tpu.memory_space<vmem>>, vector<1x2x96xf32>
    %273 = vector.shape_cast %272 : vector<1x2x96xf32> to vector<2x96xf32>
    %274 = vector.shape_cast %271 : vector<2x96xf32> to vector<1x2x96xf32>
    tpu.vector_store %arg14[%c6_105, %c0_106, %c0_107], %274 {strides = array<i32>} : memref<8x2x96xf32, #tpu.memory_space<vmem>>, vector<1x2x96xf32>,
    %cst_108 = arith.constant dense<0.000000e+00> : vector<2x96xf32>
    %275 = tpu.matmul %225, %229, %cst_108 {dimension_numbers = #tpu.dot_dimension_numbers<[1], [0], [0], [1], [0, 0, 1, 1], [], []>} : vector<2x32xf32>, vector<32x96xf32>, vector<2x96xf32> -> vector<2x96xf32>
    %276 = vector.broadcast %231 : vector<1x96xf32> to vector<2x96xf32>
    %277 = arith.addf %275, %276 : vector<2x96xf32>
    %c7_109 = arith.constant 7 : index
    %c0_110 = arith.constant 0 : index
    %c0_111 = arith.constant 0 : index
    %278 = vector.load %arg14[%c7_109, %c0_110, %c0_111] : memref<8x2x96xf32, #tpu.memory_space<vmem>>, vector<1x2x96xf32>
    %279 = vector.shape_cast %278 : vector<1x2x96xf32> to vector<2x96xf32>
    %280 = vector.shape_cast %277 : vector<2x96xf32> to vector<1x2x96xf32>
    tpu.vector_store %arg14[%c7_109, %c0_110, %c0_111], %280 {strides = array<i32>} : memref<8x2x96xf32, #tpu.memory_space<vmem>>, vector<1x2x96xf32>,
    %c1_112 = arith.constant 1 : index
    %c0_113 = arith.constant 0 : index
    %c0_114 = arith.constant 0 : index
    %281 = vector.load %arg11[%c1_112, %c0_113, %c0_114] : memref<2x2x32xf32, #tpu.memory_space<vmem>>, vector<1x2x32xf32>
    %282 = vector.shape_cast %281 : vector<1x2x32xf32> to vector<2x32xf32>
    %c0_115 = arith.constant 0 : index
    %c0_116 = arith.constant 0 : index
    %c0_117 = arith.constant 0 : index
    %283 = vector.load %arg14[%c0_115, %c0_116, %c0_117] : memref<8x2x96xf32, #tpu.memory_space<vmem>>, vector<1x2x96xf32>
    %284 = vector.shape_cast %283 : vector<1x2x96xf32> to vector<2x96xf32>
    %cst_118 = arith.constant dense<0.000000e+00> : vector<2x96xf32>
    %285 = tpu.matmul %282, %230, %cst_118 {dimension_numbers = #tpu.dot_dimension_numbers<[1], [0], [0], [1], [0, 0, 1, 1], [], []>} : vector<2x32xf32>, vector<32x96xf32>, vector<2x96xf32> -> vector<2x96xf32>
    %286 = vector.extract_strided_slice %284 {offsets = [0, 0], sizes = [2, 64], strides = [1, 1]} : vector<2x96xf32> to vector<2x64xf32>
    %287 = vector.extract_strided_slice %285 {offsets = [0, 0], sizes = [2, 64], strides = [1, 1]} : vector<2x96xf32> to vector<2x64xf32>
    %288 = arith.addf %286, %287 : vector<2x64xf32>
    %289 = arith.negf %288 : vector<2x64xf32>
    %290 = math.exp %289 : vector<2x64xf32>
    %cst_119 = arith.constant 1.000000e+00 : f32
    %291 = vector.broadcast %cst_119 : f32 to vector<2x64xf32>
    %292 = arith.addf %291, %290 : vector<2x64xf32>
    %293 = arith.divf %291, %292 : vector<2x64xf32>
    %294 = vector.extract_strided_slice %293 {offsets = [0, 0], sizes = [2, 32], strides = [1, 1]} : vector<2x64xf32> to vector<2x32xf32>
    %295 = vector.extract_strided_slice %293 {offsets = [0, 32], sizes = [2, 32], strides = [1, 1]} : vector<2x64xf32> to vector<2x32xf32>
    %296 = vector.extract_strided_slice %284 {offsets = [0, 64], sizes = [2, 32], strides = [1, 1]} : vector<2x96xf32> to vector<2x32xf32>
    %297 = vector.extract_strided_slice %285 {offsets = [0, 64], sizes = [2, 32], strides = [1, 1]} : vector<2x96xf32> to vector<2x32xf32>
    %298 = vector.broadcast %232 : vector<1x32xf32> to vector<2x32xf32>
    %299 = arith.addf %297, %298 : vector<2x32xf32>
    %300 = arith.mulf %294, %299 : vector<2x32xf32>
    %301 = arith.addf %296, %300 : vector<2x32xf32>
    %302 = math.tanh %301 : vector<2x32xf32>
    %303 = arith.subf %282, %302 : vector<2x32xf32>
    %304 = arith.mulf %295, %303 : vector<2x32xf32>
    %305 = arith.addf %302, %304 : vector<2x32xf32>
    %c1_120 = arith.constant 1 : index
    %c0_121 = arith.constant 0 : index
    %c0_122 = arith.constant 0 : index
    %306 = vector.load %arg14[%c1_120, %c0_121, %c0_122] : memref<8x2x96xf32, #tpu.memory_space<vmem>>, vector<1x2x96xf32>
    %307 = vector.shape_cast %306 : vector<1x2x96xf32> to vector<2x96xf32>
    %cst_123 = arith.constant dense<0.000000e+00> : vector<2x96xf32>
    %308 = tpu.matmul %305, %230, %cst_123 {dimension_numbers = #tpu.dot_dimension_numbers<[1], [0], [0], [1], [0, 0, 1, 1], [], []>} : vector<2x32xf32>, vector<32x96xf32>, vector<2x96xf32> -> vector<2x96xf32>
    %309 = vector.extract_strided_slice %307 {offsets = [0, 0], sizes = [2, 64], strides = [1, 1]} : vector<2x96xf32> to vector<2x64xf32>
    %310 = vector.extract_strided_slice %308 {offsets = [0, 0], sizes = [2, 64], strides = [1, 1]} : vector<2x96xf32> to vector<2x64xf32>
    %311 = arith.addf %309, %310 : vector<2x64xf32>
    %312 = arith.negf %311 : vector<2x64xf32>
    %313 = math.exp %312 : vector<2x64xf32>
    %cst_124 = arith.constant 1.000000e+00 : f32
    %314 = vector.broadcast %cst_124 : f32 to vector<2x64xf32>
    %315 = arith.addf %314, %313 : vector<2x64xf32>
    %316 = arith.divf %314, %315 : vector<2x64xf32>
    %317 = vector.extract_strided_slice %316 {offsets = [0, 0], sizes = [2, 32], strides = [1, 1]} : vector<2x64xf32> to vector<2x32xf32>
    %318 = vector.extract_strided_slice %316 {offsets = [0, 32], sizes = [2, 32], strides = [1, 1]} : vector<2x64xf32> to vector<2x32xf32>
    %319 = vector.extract_strided_slice %307 {offsets = [0, 64], sizes = [2, 32], strides = [1, 1]} : vector<2x96xf32> to vector<2x32xf32>
    %320 = vector.extract_strided_slice %308 {offsets = [0, 64], sizes = [2, 32], strides = [1, 1]} : vector<2x96xf32> to vector<2x32xf32>
    %321 = vector.broadcast %232 : vector<1x32xf32> to vector<2x32xf32>
    %322 = arith.addf %320, %321 : vector<2x32xf32>
    %323 = arith.mulf %317, %322 : vector<2x32xf32>
    %324 = arith.addf %319, %323 : vector<2x32xf32>
    %325 = math.tanh %324 : vector<2x32xf32>
    %326 = arith.subf %305, %325 : vector<2x32xf32>
    %327 = arith.mulf %318, %326 : vector<2x32xf32>
    %328 = arith.addf %325, %327 : vector<2x32xf32>
    %c2_125 = arith.constant 2 : index
    %c0_126 = arith.constant 0 : index
    %c0_127 = arith.constant 0 : index
    %329 = vector.load %arg14[%c2_125, %c0_126, %c0_127] : memref<8x2x96xf32, #tpu.memory_space<vmem>>, vector<1x2x96xf32>
    %330 = vector.shape_cast %329 : vector<1x2x96xf32> to vector<2x96xf32>
    %cst_128 = arith.constant dense<0.000000e+00> : vector<2x96xf32>
    %331 = tpu.matmul %328, %230, %cst_128 {dimension_numbers = #tpu.dot_dimension_numbers<[1], [0], [0], [1], [0, 0, 1, 1], [], []>} : vector<2x32xf32>, vector<32x96xf32>, vector<2x96xf32> -> vector<2x96xf32>
    %332 = vector.extract_strided_slice %330 {offsets = [0, 0], sizes = [2, 64], strides = [1, 1]} : vector<2x96xf32> to vector<2x64xf32>
    %333 = vector.extract_strided_slice %331 {offsets = [0, 0], sizes = [2, 64], strides = [1, 1]} : vector<2x96xf32> to vector<2x64xf32>
    %334 = arith.addf %332, %333 : vector<2x64xf32>
    %335 = arith.negf %334 : vector<2x64xf32>
    %336 = math.exp %335 : vector<2x64xf32>
    %cst_129 = arith.constant 1.000000e+00 : f32
    %337 = vector.broadcast %cst_129 : f32 to vector<2x64xf32>
    %338 = arith.addf %337, %336 : vector<2x64xf32>
    %339 = arith.divf %337, %338 : vector<2x64xf32>
    %340 = vector.extract_strided_slice %339 {offsets = [0, 0], sizes = [2, 32], strides = [1, 1]} : vector<2x64xf32> to vector<2x32xf32>
    %341 = vector.extract_strided_slice %339 {offsets = [0, 32], sizes = [2, 32], strides = [1, 1]} : vector<2x64xf32> to vector<2x32xf32>
    %342 = vector.extract_strided_slice %330 {offsets = [0, 64], sizes = [2, 32], strides = [1, 1]} : vector<2x96xf32> to vector<2x32xf32>
    %343 = vector.extract_strided_slice %331 {offsets = [0, 64], sizes = [2, 32], strides = [1, 1]} : vector<2x96xf32> to vector<2x32xf32>
    %344 = vector.broadcast %232 : vector<1x32xf32> to vector<2x32xf32>
    %345 = arith.addf %343, %344 : vector<2x32xf32>
    %346 = arith.mulf %340, %345 : vector<2x32xf32>
    %347 = arith.addf %342, %346 : vector<2x32xf32>
    %348 = math.tanh %347 : vector<2x32xf32>
    %349 = arith.subf %328, %348 : vector<2x32xf32>
    %350 = arith.mulf %341, %349 : vector<2x32xf32>
    %351 = arith.addf %348, %350 : vector<2x32xf32>
    %c3_130 = arith.constant 3 : index
    %c0_131 = arith.constant 0 : index
    %c0_132 = arith.constant 0 : index
    %352 = vector.load %arg14[%c3_130, %c0_131, %c0_132] : memref<8x2x96xf32, #tpu.memory_space<vmem>>, vector<1x2x96xf32>
    %353 = vector.shape_cast %352 : vector<1x2x96xf32> to vector<2x96xf32>
    %cst_133 = arith.constant dense<0.000000e+00> : vector<2x96xf32>
    %354 = tpu.matmul %351, %230, %cst_133 {dimension_numbers = #tpu.dot_dimension_numbers<[1], [0], [0], [1], [0, 0, 1, 1], [], []>} : vector<2x32xf32>, vector<32x96xf32>, vector<2x96xf32> -> vector<2x96xf32>
    %355 = vector.extract_strided_slice %353 {offsets = [0, 0], sizes = [2, 64], strides = [1, 1]} : vector<2x96xf32> to vector<2x64xf32>
    %356 = vector.extract_strided_slice %354 {offsets = [0, 0], sizes = [2, 64], strides = [1, 1]} : vector<2x96xf32> to vector<2x64xf32>
    %357 = arith.addf %355, %356 : vector<2x64xf32>
    %358 = arith.negf %357 : vector<2x64xf32>
    %359 = math.exp %358 : vector<2x64xf32>
    %cst_134 = arith.constant 1.000000e+00 : f32
    %360 = vector.broadcast %cst_134 : f32 to vector<2x64xf32>
    %361 = arith.addf %360, %359 : vector<2x64xf32>
    %362 = arith.divf %360, %361 : vector<2x64xf32>
    %363 = vector.extract_strided_slice %362 {offsets = [0, 0], sizes = [2, 32], strides = [1, 1]} : vector<2x64xf32> to vector<2x32xf32>
    %364 = vector.extract_strided_slice %362 {offsets = [0, 32], sizes = [2, 32], strides = [1, 1]} : vector<2x64xf32> to vector<2x32xf32>
    %365 = vector.extract_strided_slice %353 {offsets = [0, 64], sizes = [2, 32], strides = [1, 1]} : vector<2x96xf32> to vector<2x32xf32>
    %366 = vector.extract_strided_slice %354 {offsets = [0, 64], sizes = [2, 32], strides = [1, 1]} : vector<2x96xf32> to vector<2x32xf32>
    %367 = vector.broadcast %232 : vector<1x32xf32> to vector<2x32xf32>
    %368 = arith.addf %366, %367 : vector<2x32xf32>
    %369 = arith.mulf %363, %368 : vector<2x32xf32>
    %370 = arith.addf %365, %369 : vector<2x32xf32>
    %371 = math.tanh %370 : vector<2x32xf32>
    %372 = arith.subf %351, %371 : vector<2x32xf32>
    %373 = arith.mulf %364, %372 : vector<2x32xf32>
    %374 = arith.addf %371, %373 : vector<2x32xf32>
    %c4_135 = arith.constant 4 : index
    %c0_136 = arith.constant 0 : index
    %c0_137 = arith.constant 0 : index
    %375 = vector.load %arg14[%c4_135, %c0_136, %c0_137] : memref<8x2x96xf32, #tpu.memory_space<vmem>>, vector<1x2x96xf32>
    %376 = vector.shape_cast %375 : vector<1x2x96xf32> to vector<2x96xf32>
    %cst_138 = arith.constant dense<0.000000e+00> : vector<2x96xf32>
    %377 = tpu.matmul %374, %230, %cst_138 {dimension_numbers = #tpu.dot_dimension_numbers<[1], [0], [0], [1], [0, 0, 1, 1], [], []>} : vector<2x32xf32>, vector<32x96xf32>, vector<2x96xf32> -> vector<2x96xf32>
    %378 = vector.extract_strided_slice %376 {offsets = [0, 0], sizes = [2, 64], strides = [1, 1]} : vector<2x96xf32> to vector<2x64xf32>
    %379 = vector.extract_strided_slice %377 {offsets = [0, 0], sizes = [2, 64], strides = [1, 1]} : vector<2x96xf32> to vector<2x64xf32>
    %380 = arith.addf %378, %379 : vector<2x64xf32>
    %381 = arith.negf %380 : vector<2x64xf32>
    %382 = math.exp %381 : vector<2x64xf32>
    %cst_139 = arith.constant 1.000000e+00 : f32
    %383 = vector.broadcast %cst_139 : f32 to vector<2x64xf32>
    %384 = arith.addf %383, %382 : vector<2x64xf32>
    %385 = arith.divf %383, %384 : vector<2x64xf32>
    %386 = vector.extract_strided_slice %385 {offsets = [0, 0], sizes = [2, 32], strides = [1, 1]} : vector<2x64xf32> to vector<2x32xf32>
    %387 = vector.extract_strided_slice %385 {offsets = [0, 32], sizes = [2, 32], strides = [1, 1]} : vector<2x64xf32> to vector<2x32xf32>
    %388 = vector.extract_strided_slice %376 {offsets = [0, 64], sizes = [2, 32], strides = [1, 1]} : vector<2x96xf32> to vector<2x32xf32>
    %389 = vector.extract_strided_slice %377 {offsets = [0, 64], sizes = [2, 32], strides = [1, 1]} : vector<2x96xf32> to vector<2x32xf32>
    %390 = vector.broadcast %232 : vector<1x32xf32> to vector<2x32xf32>
    %391 = arith.addf %389, %390 : vector<2x32xf32>
    %392 = arith.mulf %386, %391 : vector<2x32xf32>
    %393 = arith.addf %388, %392 : vector<2x32xf32>
    %394 = math.tanh %393 : vector<2x32xf32>
    %395 = arith.subf %374, %394 : vector<2x32xf32>
    %396 = arith.mulf %387, %395 : vector<2x32xf32>
    %397 = arith.addf %394, %396 : vector<2x32xf32>
    %c5_140 = arith.constant 5 : index
    %c0_141 = arith.constant 0 : index
    %c0_142 = arith.constant 0 : index
    %398 = vector.load %arg14[%c5_140, %c0_141, %c0_142] : memref<8x2x96xf32, #tpu.memory_space<vmem>>, vector<1x2x96xf32>
    %399 = vector.shape_cast %398 : vector<1x2x96xf32> to vector<2x96xf32>
    %cst_143 = arith.constant dense<0.000000e+00> : vector<2x96xf32>
    %400 = tpu.matmul %397, %230, %cst_143 {dimension_numbers = #tpu.dot_dimension_numbers<[1], [0], [0], [1], [0, 0, 1, 1], [], []>} : vector<2x32xf32>, vector<32x96xf32>, vector<2x96xf32> -> vector<2x96xf32>
    %401 = vector.extract_strided_slice %399 {offsets = [0, 0], sizes = [2, 64], strides = [1, 1]} : vector<2x96xf32> to vector<2x64xf32>
    %402 = vector.extract_strided_slice %400 {offsets = [0, 0], sizes = [2, 64], strides = [1, 1]} : vector<2x96xf32> to vector<2x64xf32>
    %403 = arith.addf %401, %402 : vector<2x64xf32>
    %404 = arith.negf %403 : vector<2x64xf32>
    %405 = math.exp %404 : vector<2x64xf32>
    %cst_144 = arith.constant 1.000000e+00 : f32
    %406 = vector.broadcast %cst_144 : f32 to vector<2x64xf32>
    %407 = arith.addf %406, %405 : vector<2x64xf32>
    %408 = arith.divf %406, %407 : vector<2x64xf32>
    %409 = vector.extract_strided_slice %408 {offsets = [0, 0], sizes = [2, 32], strides = [1, 1]} : vector<2x64xf32> to vector<2x32xf32>
    %410 = vector.extract_strided_slice %408 {offsets = [0, 32], sizes = [2, 32], strides = [1, 1]} : vector<2x64xf32> to vector<2x32xf32>
    %411 = vector.extract_strided_slice %399 {offsets = [0, 64], sizes = [2, 32], strides = [1, 1]} : vector<2x96xf32> to vector<2x32xf32>
    %412 = vector.extract_strided_slice %400 {offsets = [0, 64], sizes = [2, 32], strides = [1, 1]} : vector<2x96xf32> to vector<2x32xf32>
    %413 = vector.broadcast %232 : vector<1x32xf32> to vector<2x32xf32>
    %414 = arith.addf %412, %413 : vector<2x32xf32>
    %415 = arith.mulf %409, %414 : vector<2x32xf32>
    %416 = arith.addf %411, %415 : vector<2x32xf32>
    %417 = math.tanh %416 : vector<2x32xf32>
    %418 = arith.subf %397, %417 : vector<2x32xf32>
    %419 = arith.mulf %410, %418 : vector<2x32xf32>
    %420 = arith.addf %417, %419 : vector<2x32xf32>
    %c6_145 = arith.constant 6 : index
    %c0_146 = arith.constant 0 : index
    %c0_147 = arith.constant 0 : index
    %421 = vector.load %arg14[%c6_145, %c0_146, %c0_147] : memref<8x2x96xf32, #tpu.memory_space<vmem>>, vector<1x2x96xf32>
    %422 = vector.shape_cast %421 : vector<1x2x96xf32> to vector<2x96xf32>
    %cst_148 = arith.constant dense<0.000000e+00> : vector<2x96xf32>
    %423 = tpu.matmul %420, %230, %cst_148 {dimension_numbers = #tpu.dot_dimension_numbers<[1], [0], [0], [1], [0, 0, 1, 1], [], []>} : vector<2x32xf32>, vector<32x96xf32>, vector<2x96xf32> -> vector<2x96xf32>
    %424 = vector.extract_strided_slice %422 {offsets = [0, 0], sizes = [2, 64], strides = [1, 1]} : vector<2x96xf32> to vector<2x64xf32>
    %425 = vector.extract_strided_slice %423 {offsets = [0, 0], sizes = [2, 64], strides = [1, 1]} : vector<2x96xf32> to vector<2x64xf32>
    %426 = arith.addf %424, %425 : vector<2x64xf32>
    %427 = arith.negf %426 : vector<2x64xf32>
    %428 = math.exp %427 : vector<2x64xf32>
    %cst_149 = arith.constant 1.000000e+00 : f32
    %429 = vector.broadcast %cst_149 : f32 to vector<2x64xf32>
    %430 = arith.addf %429, %428 : vector<2x64xf32>
    %431 = arith.divf %429, %430 : vector<2x64xf32>
    %432 = vector.extract_strided_slice %431 {offsets = [0, 0], sizes = [2, 32], strides = [1, 1]} : vector<2x64xf32> to vector<2x32xf32>
    %433 = vector.extract_strided_slice %431 {offsets = [0, 32], sizes = [2, 32], strides = [1, 1]} : vector<2x64xf32> to vector<2x32xf32>
    %434 = vector.extract_strided_slice %422 {offsets = [0, 64], sizes = [2, 32], strides = [1, 1]} : vector<2x96xf32> to vector<2x32xf32>
    %435 = vector.extract_strided_slice %423 {offsets = [0, 64], sizes = [2, 32], strides = [1, 1]} : vector<2x96xf32> to vector<2x32xf32>
    %436 = vector.broadcast %232 : vector<1x32xf32> to vector<2x32xf32>
    %437 = arith.addf %435, %436 : vector<2x32xf32>
    %438 = arith.mulf %432, %437 : vector<2x32xf32>
    %439 = arith.addf %434, %438 : vector<2x32xf32>
    %440 = math.tanh %439 : vector<2x32xf32>
    %441 = arith.subf %420, %440 : vector<2x32xf32>
    %442 = arith.mulf %433, %441 : vector<2x32xf32>
    %443 = arith.addf %440, %442 : vector<2x32xf32>
    %c7_150 = arith.constant 7 : index
    %c0_151 = arith.constant 0 : index
    %c0_152 = arith.constant 0 : index
    %444 = vector.load %arg14[%c7_150, %c0_151, %c0_152] : memref<8x2x96xf32, #tpu.memory_space<vmem>>, vector<1x2x96xf32>
    %445 = vector.shape_cast %444 : vector<1x2x96xf32> to vector<2x96xf32>
    %cst_153 = arith.constant dense<0.000000e+00> : vector<2x96xf32>
    %446 = tpu.matmul %443, %230, %cst_153 {dimension_numbers = #tpu.dot_dimension_numbers<[1], [0], [0], [1], [0, 0, 1, 1], [], []>} : vector<2x32xf32>, vector<32x96xf32>, vector<2x96xf32> -> vector<2x96xf32>
    %447 = vector.extract_strided_slice %445 {offsets = [0, 0], sizes = [2, 64], strides = [1, 1]} : vector<2x96xf32> to vector<2x64xf32>
    %448 = vector.extract_strided_slice %446 {offsets = [0, 0], sizes = [2, 64], strides = [1, 1]} : vector<2x96xf32> to vector<2x64xf32>
    %449 = arith.addf %447, %448 : vector<2x64xf32>
    %450 = arith.negf %449 : vector<2x64xf32>
    %451 = math.exp %450 : vector<2x64xf32>
    %cst_154 = arith.constant 1.000000e+00 : f32
    %452 = vector.broadcast %cst_154 : f32 to vector<2x64xf32>
    %453 = arith.addf %452, %451 : vector<2x64xf32>
    %454 = arith.divf %452, %453 : vector<2x64xf32>
    %455 = vector.extract_strided_slice %454 {offsets = [0, 0], sizes = [2, 32], strides = [1, 1]} : vector<2x64xf32> to vector<2x32xf32>
    %456 = vector.extract_strided_slice %454 {offsets = [0, 32], sizes = [2, 32], strides = [1, 1]} : vector<2x64xf32> to vector<2x32xf32>
    %457 = vector.extract_strided_slice %445 {offsets = [0, 64], sizes = [2, 32], strides = [1, 1]} : vector<2x96xf32> to vector<2x32xf32>
    %458 = vector.extract_strided_slice %446 {offsets = [0, 64], sizes = [2, 32], strides = [1, 1]} : vector<2x96xf32> to vector<2x32xf32>
    %459 = vector.broadcast %232 : vector<1x32xf32> to vector<2x32xf32>
    %460 = arith.addf %458, %459 : vector<2x32xf32>
    %461 = arith.mulf %455, %460 : vector<2x32xf32>
    %462 = arith.addf %457, %461 : vector<2x32xf32>
    %463 = math.tanh %462 : vector<2x32xf32>
    %464 = arith.subf %443, %463 : vector<2x32xf32>
    %465 = arith.mulf %456, %464 : vector<2x32xf32>
    %466 = arith.addf %463, %465 : vector<2x32xf32>
    %c1_155 = arith.constant 1 : index
    %c0_156 = arith.constant 0 : index
    %c0_157 = arith.constant 0 : index
    %467 = vector.load %arg13[%c1_155, %c0_156, %c0_157] : memref<2x2x32xf32, #tpu.memory_space<vmem>>, vector<1x2x32xf32>
    %468 = vector.shape_cast %467 : vector<1x2x32xf32> to vector<2x32xf32>
    %469 = vector.shape_cast %466 : vector<2x32xf32> to vector<1x2x32xf32>
    tpu.vector_store %arg13[%c1_155, %c0_156, %c0_157], %469 {strides = array<i32>} : memref<2x2x32xf32, #tpu.memory_space<vmem>>, vector<1x2x32xf32>,
    %c0_158 = arith.constant 0 : index
    %c0_159 = arith.constant 0 : index
    %470 = vector.load %arg9[%c0_158, %c0_159] : memref<32x16xf32, #tpu.memory_space<vmem>>, vector<32x16xf32>
    %cst_160 = arith.constant dense<0.000000e+00> : vector<2x16xf32>
    %471 = tpu.matmul %466, %470, %cst_160 {dimension_numbers = #tpu.dot_dimension_numbers<[1], [0], [0], [1], [0, 0, 1, 1], [], []>} : vector<2x32xf32>, vector<32x16xf32>, vector<2x16xf32> -> vector<2x16xf32>
    %c0_161 = arith.constant 0 : index
    %c0_162 = arith.constant 0 : index
    %472 = vector.load %arg10[%c0_161, %c0_162] : memref<1x16xf32, #tpu.memory_space<vmem>>, vector<1x16xf32>
    %473 = vector.broadcast %472 : vector<1x16xf32> to vector<2x16xf32>
    %474 = arith.addf %471, %473 : vector<2x16xf32>
    %c0_163 = arith.constant 0 : index
    %c0_164 = arith.constant 0 : index
    %475 = vector.load %arg12[%c0_163, %c0_164] : memref<2x16xf32, #tpu.memory_space<vmem>>, vector<2x16xf32>
    tpu.vector_store %arg12[%c0_163, %c0_164], %474 {strides = array<i32>} : memref<2x16xf32, #tpu.memory_space<vmem>>, vector<2x16xf32>,
    return
  }
}

</mosaic_0001>

<llo_original>
// kernel: lstm_rnn_forward.1
$region0: #{lstm_rnn_forward.1}
  #allocation0 [shape = 'u32[]', space=smem, size = 0x4, offset = 0x4, fixed_abs, tag = 'smem constant byte address 0x4 - core index']
  #allocation1 [shape = 'u32[144,128]{1,0:T(1,128)}', space=vmem, size = 0x12000, scoped, tag = 'internal scratch']
  #allocation2 [shape = 'f32[8,2,96]{2,1,0:T(2,128)}', space=vmem, size = 0x2000, scoped, tag = 'scratch operand']
  %s0 = inlined_call_operand.hbm [shape: f32[16,16], index: 0, kind: input, shape index: {}]
  %s1 = inlined_call_operand.vmem [shape: f32[16,96], index: 1, kind: input, shape index: {}]
  %s2 = inlined_call_operand.hbm [shape: f32[32,96], index: 2, kind: input, shape index: {}]
  %s3 = inlined_call_operand.hbm [shape: f32[1,96], index: 3, kind: input, shape index: {}]
  %s4 = inlined_call_operand.hbm [shape: f32[1,32], index: 4, kind: input, shape index: {}]
  %s5 = inlined_call_operand.hbm [shape: f32[32,96], index: 5, kind: input, shape index: {}]
  %s6 = inlined_call_operand.hbm [shape: f32[32,96], index: 6, kind: input, shape index: {}]
  %s7 = inlined_call_operand.hbm [shape: f32[1,96], index: 7, kind: input, shape index: {}]
  %s8 = inlined_call_operand.hbm [shape: f32[1,32], index: 8, kind: input, shape index: {}]
  %s9 = inlined_call_operand.vmem [shape: f32[32,16], index: 9, kind: input, shape index: {}]
  %s10 = inlined_call_operand.vmem [shape: f32[1,16], index: 10, kind: input, shape index: {}]
  %s11 = inlined_call_operand.hbm [shape: f32[2,2,32], index: 11, kind: input, shape index: {}, may-alias: {11,13}]
  %s12 = inlined_call_operand.hbm [shape: f32[2,16], index: 12, kind: output, shape index: {0}]
  %s13 = inlined_call_operand.hbm [shape: f32[2,2,32], index: 13, kind: output, shape index: {1}, may-alias: {11,13}]
  %14 = xla_tuple %s12, %s13
  %s15 = sld [smem:[#allocation0]]
  $region102: #{lstm_rnn_forward.1} parent=0
    _
  %s17 = ssub.s32 1, %s15
  %s18 = scalar_select 0, %s17, %s15
  $region1: #{lstm_rnn_forward.1} parent=0
    #allocation3 [shape = 'u8[8192]{0}', space=vmem, size = 0x2000, scoped, tag = 'input window, operand 0, single buffered']
    #allocation4 [shape = 's32[1]{0}', space=sflag, size = 0x4, scoped, tag = 'scoped memory for lstm_rnn_forward.1']
    #allocation5 [shape = 's32[1]{0}', space=sflag, size = 0x4, scoped, tag = 'scoped memory for lstm_rnn_forward.1']
    #allocation6 [shape = 'u8[16384]{0}', space=vmem, size = 0x4000, scoped, tag = 'input window, operand 2, single buffered']
    #allocation7 [shape = 's32[1]{0}', space=sflag, size = 0x4, scoped, tag = 'scoped memory for lstm_rnn_forward.1']
    #allocation8 [shape = 'u8[512]{0}', space=vmem, size = 0x400, scoped, tag = 'input window, operand 3, single buffered']
    #allocation9 [shape = 'u8[512]{0}', space=vmem, size = 0x400, scoped, tag = 'input window, operand 4, single buffered']
    #allocation10 [shape = 's32[1]{0}', space=sflag, size = 0x4, scoped, tag = 'scoped memory for lstm_rnn_forward.1']
    #allocation11 [shape = 'u8[16384]{0}', space=vmem, size = 0x4000, scoped, tag = 'input window, operand 5, single buffered']
    #allocation12 [shape = 'u8[16384]{0}', space=vmem, size = 0x4000, scoped, tag = 'input window, operand 6, single buffered']
    #allocation13 [shape = 's32[1]{0}', space=sflag, size = 0x4, scoped, tag = 'scoped memory for lstm_rnn_forward.1']
    #allocation14 [shape = 'u8[512]{0}', space=vmem, size = 0x400, scoped, tag = 'input window, operand 7, single buffered']
    #allocation15 [shape = 'u8[512]{0}', space=vmem, size = 0x400, scoped, tag = 'input window, operand 8, single buffered']
    #allocation16 [shape = 's32[1]{0}', space=sflag, size = 0x4, scoped, tag = 'scoped memory for lstm_rnn_forward.1']
    #allocation17 [shape = 'u8[2048]{0}', space=vmem, size = 0x800, scoped, tag = 'input window, operand 11, single buffered']
    #allocation18 [shape = 'u8[1024]{0}', space=vmem, size = 0x400, scoped, tag = 'output window, operand 0, single buffered']
    #allocation19 [shape = 'u8[2048]{0}', space=vmem, size = 0x800, scoped, tag = 'output window, operand 1, single buffered']
    #allocation20 [shape = 's32[1]{0}', space=sflag, size = 0x4, scoped, tag = 'scoped memory for lstm_rnn_forward.1']
    %19 = vsyncpa [#allocation4], 0
    %20 = vsyncpa [#allocation7], 0
    %21 = vsyncpa [#allocation10], 0
    %22 = vsyncpa [#allocation13], 0
    %23 = vsyncpa [#allocation16], 0
    %24 = vsyncpa [#allocation5], 0
    %25 = vsyncpa [#allocation20], 0
    // Predicated region
    $region2: #{lstm_rnn_forward.1} parent=1 // pred_check
      _
    $region3: #{lstm_rnn_forward.1} parent=1 // pred_check_branch
      %27 = sbr.rel (0) target = $region5
    $region4: #{lstm_rnn_forward.1} parent=1 // pred_region
      %s29 = ssub.s32 256, 256
      %30 = vsyncadd [#allocation4], %s29
      %s31 = sshll.u32 [#allocation3], 4
      %s32 = int_to_ptr.vmem [resolvable:$true] %s31
      %37 = dma.hbm_to_vmem [thread:$0]  %s0, 256, %s32, [#allocation4], 128, 128, 8
    $region5: #{lstm_rnn_forward.1} parent=1 // pred_fallthru
      _
    // Predicated region
    $region6: #{lstm_rnn_forward.1} parent=1 // pred_check
      _
    $region7: #{lstm_rnn_forward.1} parent=1 // pred_check_branch
      %39 = sbr.rel (0) target = $region9
    $region8: #{lstm_rnn_forward.1} parent=1 // pred_region
      _
    $region9: #{lstm_rnn_forward.1} parent=1 // pred_fallthru
      _
    // Predicated region
    $region10: #{lstm_rnn_forward.1} parent=1 // pred_check
      _
    $region11: #{lstm_rnn_forward.1} parent=1 // pred_check_branch
      %41 = sbr.rel (0) target = $region13
    $region12: #{lstm_rnn_forward.1} parent=1 // pred_region
      %s43 = ssub.s32 512, 512
      %44 = vsyncadd [#allocation7], %s43
      %s45 = sshll.u32 [#allocation6], 4
      %s46 = int_to_ptr.vmem [resolvable:$true] %s45
      %51 = dma.hbm_to_vmem [thread:$0]  %s2, 512, %s46, [#allocation7], 128, 128, 8
    $region13: #{lstm_rnn_forward.1} parent=1 // pred_fallthru
      _
    // Predicated region
    $region14: #{lstm_rnn_forward.1} parent=1 // pred_check
      _
    $region15: #{lstm_rnn_forward.1} parent=1 // pred_check_branch
      %53 = sbr.rel (0) target = $region17
    $region16: #{lstm_rnn_forward.1} parent=1 // pred_region
      %s55 = ssub.s32 16, 16
      %56 = vsyncadd [#allocation7], %s55
      %s58 = sshll.u32 [#allocation8], 4
      %s59 = int_to_ptr.vmem [resolvable:$true] %s58
      %61 = dma.hbm_to_vmem [thread:$0]  %s3, 16, %s59, [#allocation7]
    $region17: #{lstm_rnn_forward.1} parent=1 // pred_fallthru
      _
    // Predicated region
    $region18: #{lstm_rnn_forward.1} parent=1 // pred_check
      _
    $region19: #{lstm_rnn_forward.1} parent=1 // pred_check_branch
      %63 = sbr.rel (0) target = $region21
    $region20: #{lstm_rnn_forward.1} parent=1 // pred_region
      %s65 = ssub.s32 16, 16
      %66 = vsyncadd [#allocation10], %s65
      %s68 = sshll.u32 [#allocation9], 4
      %s69 = int_to_ptr.vmem [resolvable:$true] %s68
      %71 = dma.hbm_to_vmem [thread:$0]  %s4, 16, %s69, [#allocation10]
    $region21: #{lstm_rnn_forward.1} parent=1 // pred_fallthru
      _
    // Predicated region
    $region22: #{lstm_rnn_forward.1} parent=1 // pred_check
      _
    $region23: #{lstm_rnn_forward.1} parent=1 // pred_check_branch
      %73 = sbr.rel (0) target = $region25
    $region24: #{lstm_rnn_forward.1} parent=1 // pred_region
      %s75 = ssub.s32 512, 512
      %76 = vsyncadd [#allocation10], %s75
      %s77 = sshll.u32 [#allocation11], 4
      %s78 = int_to_ptr.vmem [resolvable:$true] %s77
      %83 = dma.hbm_to_vmem [thread:$0]  %s5, 512, %s78, [#allocation10], 128, 128, 8
    $region25: #{lstm_rnn_forward.1} parent=1 // pred_fallthru
      _
    // Predicated region
    $region26: #{lstm_rnn_forward.1} parent=1 // pred_check
      _
    $region27: #{lstm_rnn_forward.1} parent=1 // pred_check_branch
      %85 = sbr.rel (0) target = $region29
    $region28: #{lstm_rnn_forward.1} parent=1 // pred_region
      %s87 = ssub.s32 512, 512
      %88 = vsyncadd [#allocation13], %s87
      %s89 = sshll.u32 [#allocation12], 4
      %s90 = int_to_ptr.vmem [resolvable:$true] %s89
      %95 = dma.hbm_to_vmem [thread:$0]  %s6, 512, %s90, [#allocation13], 128, 128, 8
    $region29: #{lstm_rnn_forward.1} parent=1 // pred_fallthru
      _
    // Predicated region
    $region30: #{lstm_rnn_forward.1} parent=1 // pred_check
      _
    $region31: #{lstm_rnn_forward.1} parent=1 // pred_check_branch
      %97 = sbr.rel (0) target = $region33
    $region32: #{lstm_rnn_forward.1} parent=1 // pred_region
      %s99 = ssub.s32 16, 16
      %100 = vsyncadd [#allocation13], %s99
      %s102 = sshll.u32 [#allocation14], 4
      %s103 = int_to_ptr.vmem [resolvable:$true] %s102
      %105 = dma.hbm_to_vmem [thread:$0]  %s7, 16, %s103, [#allocation13]
    $region33: #{lstm_rnn_forward.1} parent=1 // pred_fallthru
      _
    // Predicated region
    $region34: #{lstm_rnn_forward.1} parent=1 // pred_check
      _
    $region35: #{lstm_rnn_forward.1} parent=1 // pred_check_branch
      %107 = sbr.rel (0) target = $region37
    $region36: #{lstm_rnn_forward.1} parent=1 // pred_region
      %s109 = ssub.s32 16, 16
      %110 = vsyncadd [#allocation16], %s109
      %s112 = sshll.u32 [#allocation15], 4
      %s113 = int_to_ptr.vmem [resolvable:$true] %s112
      %115 = dma.hbm_to_vmem [thread:$0]  %s8, 16, %s113, [#allocation16]
    $region37: #{lstm_rnn_forward.1} parent=1 // pred_fallthru
      _
    // Predicated region
    $region38: #{lstm_rnn_forward.1} parent=1 // pred_check
      _
    $region39: #{lstm_rnn_forward.1} parent=1 // pred_check_branch
      %117 = sbr.rel (0) target = $region41
    $region40: #{lstm_rnn_forward.1} parent=1 // pred_region
      _
    $region41: #{lstm_rnn_forward.1} parent=1 // pred_fallthru
      _
    // Predicated region
    $region42: #{lstm_rnn_forward.1} parent=1 // pred_check
      _
    $region43: #{lstm_rnn_forward.1} parent=1 // pred_check_branch
      %119 = sbr.rel (0) target = $region45
    $region44: #{lstm_rnn_forward.1} parent=1 // pred_region
      _
    $region45: #{lstm_rnn_forward.1} parent=1 // pred_fallthru
      _
    // Predicated region
    $region46: #{lstm_rnn_forward.1} parent=1 // pred_check
      _
    $region47: #{lstm_rnn_forward.1} parent=1 // pred_check_branch
      %121 = sbr.rel (0) target = $region49
    $region48: #{lstm_rnn_forward.1} parent=1 // pred_region
      %s123 = ssub.s32 64, 64
      %124 = vsyncadd [#allocation16], %s123
      %s125 = sshll.u32 [#allocation17], 4
      %s126 = int_to_ptr.vmem [resolvable:$true] %s125
      %131 = dma.hbm_to_vmem [thread:$0]  %s11, 64, %s126, [#allocation16], 32, 32, 2
    $region49: #{lstm_rnn_forward.1} parent=1 // pred_fallthru
      _
    // Predicated region
    $region50: #{lstm_rnn_forward.1} parent=1 // pred_check
      _
    $region51: #{lstm_rnn_forward.1} parent=1 // pred_check_branch
      %133 = sbr.rel (0) target = $region53
    $region52: #{lstm_rnn_forward.1} parent=1 // pred_region
      %134 = dma.done [#allocation4], 256
    $region53: #{lstm_rnn_forward.1} parent=1 // pred_fallthru
      _
    // Predicated region
    $region54: #{lstm_rnn_forward.1} parent=1 // pred_check
      _
    $region55: #{lstm_rnn_forward.1} parent=1 // pred_check_branch
      %136 = sbr.rel (0) target = $region57
    $region56: #{lstm_rnn_forward.1} parent=1 // pred_region
      %137 = dma.done [#allocation7], 512
    $region57: #{lstm_rnn_forward.1} parent=1 // pred_fallthru
      _
    // Predicated region
    $region58: #{lstm_rnn_forward.1} parent=1 // pred_check
      _
    $region59: #{lstm_rnn_forward.1} parent=1 // pred_check_branch
      %139 = sbr.rel (0) target = $region61
    $region60: #{lstm_rnn_forward.1} parent=1 // pred_region
      %140 = dma.done [#allocation7], 16
    $region61: #{lstm_rnn_forward.1} parent=1 // pred_fallthru
      _
    // Predicated region
    $region62: #{lstm_rnn_forward.1} parent=1 // pred_check
      _
    $region63: #{lstm_rnn_forward.1} parent=1 // pred_check_branch
      %142 = sbr.rel (0) target = $region65
    $region64: #{lstm_rnn_forward.1} parent=1 // pred_region
      %143 = dma.done [#allocation10], 16
    $region65: #{lstm_rnn_forward.1} parent=1 // pred_fallthru
      _
    // Predicated region
    $region66: #{lstm_rnn_forward.1} parent=1 // pred_check
      _
    $region67: #{lstm_rnn_forward.1} parent=1 // pred_check_branch
      %145 = sbr.rel (0) target = $region69
    $region68: #{lstm_rnn_forward.1} parent=1 // pred_region
      %146 = dma.done [#allocation10], 512
    $region69: #{lstm_rnn_forward.1} parent=1 // pred_fallthru
      _
    // Predicated region
    $region70: #{lstm_rnn_forward.1} parent=1 // pred_check
      _
    $region71: #{lstm_rnn_forward.1} parent=1 // pred_check_branch
      %148 = sbr.rel (0) target = $region73
    $region72: #{lstm_rnn_forward.1} parent=1 // pred_region
      %149 = dma.done [#allocation13], 512
    $region73: #{lstm_rnn_forward.1} parent=1 // pred_fallthru
      _
    // Predicated region
    $region74: #{lstm_rnn_forward.1} parent=1 // pred_check
      _
    $region75: #{lstm_rnn_forward.1} parent=1 // pred_check_branch
      %151 = sbr.rel (0) target = $region77
    $region76: #{lstm_rnn_forward.1} parent=1 // pred_region
      %152 = dma.done [#allocation13], 16
    $region77: #{lstm_rnn_forward.1} parent=1 // pred_fallthru
      _
    // Predicated region
    $region78: #{lstm_rnn_forward.1} parent=1 // pred_check
      _
    $region79: #{lstm_rnn_forward.1} parent=1 // pred_check_branch
      %154 = sbr.rel (0) target = $region81
    $region80: #{lstm_rnn_forward.1} parent=1 // pred_region
      %155 = dma.done [#allocation16], 16
    $region81: #{lstm_rnn_forward.1} parent=1 // pred_fallthru
      _
    // Predicated region
    $region82: #{lstm_rnn_forward.1} parent=1 // pred_check
      _
    $region83: #{lstm_rnn_forward.1} parent=1 // pred_check_branch
      %157 = sbr.rel (0) target = $region85
    $region84: #{lstm_rnn_forward.1} parent=1 // pred_region
      %158 = dma.done [#allocation16], 64
    $region85: #{lstm_rnn_forward.1} parent=1 // pred_fallthru
      _
    %v159 = vld [vmem:[%s1] sm:$0xff]
    %v160 = vld [vmem:[%s1 + $0x8] sm:$0xff]
    %v161 = vld [vmem:[#allocation6] sm:$0xff]
    %v162 = vld [vmem:[#allocation6 + $0x8] sm:$0xff]
    %v163 = vld [vmem:[#allocation6 + $0x10] sm:$0xff]
    %v164 = vld [vmem:[#allocation6 + $0x18] sm:$0xff]
    %v165 = vld [vmem:[#allocation8] sm:$0x1]
    %v166 = vld [vmem:[#allocation9] sm:$0x1]
    %v167 = vld [vmem:[#allocation3] sm:$0xff]
    %v168 = vld [vmem:[#allocation3 + $0x8] sm:$0xff]
    %v170 = vlaneseq
    %v171 = vshrl.u32 %v170, 7
    %v172 = vsub.s32 0, %v171
    %v173 = vrot.slane %v165, %v172
    %vm175 = vcmask 130048
    %v177 = vsel %vm175, %v167, 0
    %v180 = vsel %vm175, %v168, 0
    %182 = vmatprep.subr.mxu0 0.0
    %183 = vmatpush1.msra.mxu0 %v159
    %184 = vmatprep.subr.mxu0 0.0
    %185 = vmatpush1.msra.mxu0 %v160
    %186 = vmatprep.subr.mxu0 0.0
    %187 = vmatpush1.msra.mxu0 0.0
    %188 = vmatprep.subr.mxu0 0.0
    %189 = vmatpush1.msra.mxu0 0.0
    %190 = vmatprep.subr.mxu0 0.0
    %191 = vmatpush1.msra.mxu0 0.0
    %192 = vmatprep.subr.mxu0 0.0
    %193 = vmatpush1.msra.mxu0 0.0
    %194 = vmatprep.subr.mxu0 0.0
    %195 = vmatpush1.msra.mxu0 0.0
    %196 = vmatprep.subr.mxu0 0.0
    %197 = vmatpush1.msra.mxu0 0.0
    %198 = vmatprep.subr.mxu0 0.0
    %199 = vmatpush1.msra.mxu0 0.0
    %200 = vmatprep.subr.mxu0 0.0
    %201 = vmatpush1.msra.mxu0 0.0
    %202 = vmatprep.subr.mxu0 0.0
    %203 = vmatpush1.msra.mxu0 0.0
    %204 = vmatprep.subr.mxu0 0.0
    %205 = vmatpush1.msra.mxu0 0.0
    %206 = vmatprep.subr.mxu0 0.0
    %207 = vmatpush1.msra.mxu0 0.0
    %208 = vmatprep.subr.mxu0 0.0
    %209 = vmatpush1.msra.mxu0 0.0
    %210 = vmatprep.subr.mxu0 0.0
    %211 = vmatpush1.msra.mxu0 0.0
    %212 = vmatprep.subr.mxu0 0.0
    %213 = vmatpush1.msra.mxu0 0.0
    %214 = vmatprep.subr.mxu0 0.0
    %215 = vmatpush1.msra.mxu0 0.0
    %216 = vmatprep.subr.mxu0 0.0
    %217 = vmatpush1.msra.mxu0 0.0
    %218 = vmatprep.subr.mxu0 0.0
    %219 = vmatpush1.msra.mxu0 0.0
    %220 = vmatprep.subr.mxu0 0.0
    %221 = vmatpush1.msra.mxu0 0.0
    %222 = vmatprep.subr.mxu0 0.0
    %223 = vmatpush1.msra.mxu0 0.0
    %224 = vmatprep.subr.mxu0 0.0
    %225 = vmatpush1.msra.mxu0 0.0
    %226 = vmatprep.subr.mxu0 0.0
    %227 = vmatpush1.msra.mxu0 0.0
    %228 = vmatprep.subr.mxu0 0.0
    %229 = vmatpush1.msra.mxu0 0.0
    %230 = vmatprep.subr.mxu0 0.0
    %231 = vmatpush1.msra.mxu0 0.0
    %232 = vmatprep.subr.mxu0 0.0
    %233 = vmatpush1.msra.mxu0 0.0
    %234 = vmatprep.subr.mxu0 0.0
    %235 = vmatpush1.msra.mxu0 0.0
    %236 = vmatprep.subr.mxu0 0.0
    %237 = vmatpush1.msra.mxu0 0.0
    %238 = vmatprep.subr.mxu0 0.0
    %239 = vmatpush1.msra.mxu0 0.0
    %240 = vmatprep.subr.mxu0 0.0
    %241 = vmatpush1.msra.mxu0 0.0
    %242 = vmatprep.subr.mxu0 0.0
    %243 = vmatpush1.msra.mxu0 0.0
    %244 = vmatprep.subr.mxu0 0.0
    %245 = vmatpush1.msra.mxu0 0.0
    %246 = vmatprep.mubr.f32.mxu0 0.0
    %247 = vmatmul.mubr.f32.gmra.mrb[0].mxu0 %v177
    %v248 = vpop.f32.mrb[0].mxu0
    %v249 = vadd.f32 %v173, %v248
    %v250 = vpop.f32.mrb[0].mxu0
    %251 = vmatprep.mubr.f32.mxu0 0.0
    %252 = vmatmul.mubr.f32.gmra.mrb[0].mxu0 %v180
    %v253 = vpop.f32.mrb[0].mxu0
    %v254 = vadd.f32 %v173, %v253
    %v255 = vpop.f32.mrb[0].mxu0
    %256 = vdwg.mxu0
    %vm257 = vcmask 779264
    %258 = vst.msk [vmem:[#allocation2] sm:$0x3] %vm257, %v249
    %s259 = scalar_lea.vmem [#allocation2], 2
    %vm260 = vcmask 781314
    %261 = vst.msk [vmem:[%s259 - $0x2] sm:$0xc] %vm260, %v249
    %s262 = scalar_lea.vmem [#allocation2], 4
    %vm263 = vcmask 783364
    %264 = vst.msk [vmem:[%s262 - $0x4] sm:$0x30] %vm263, %v249
    %s265 = scalar_lea.vmem [#allocation2], 6
    %vm266 = vcmask 785414
    %267 = vst.msk [vmem:[%s265 - $0x6] sm:$0xc0] %vm266, %v249
    %s268 = scalar_lea.vmem [#allocation2], 8
    %269 = vst.msk [vmem:[%s268] sm:$0x3] %vm257, %v254
    %s270 = scalar_lea.vmem [#allocation2], 10
    %271 = vst.msk [vmem:[%s270 - $0x2] sm:$0xc] %vm260, %v254
    %s272 = scalar_lea.vmem [#allocation2], 12
    %273 = vst.msk [vmem:[%s272 - $0x4] sm:$0x30] %vm263, %v254
    %s274 = scalar_lea.vmem [#allocation2], 14
    %275 = vst.msk [vmem:[%s274 - $0x6] sm:$0xc0] %vm266, %v254
    %v276 = vld [vmem:[#allocation17] sm:$0x3]
    %v277 = vld [vmem:[#allocation2] sm:$0x3]
    %vm278 = vcmask 261120
    %v280 = vsel %vm278, %v276, 0
    %282 = vmatprep.subr.mxu0 0.0
    %283 = vmatpush1.msra.mxu0 %v161
    %284 = vmatprep.subr.mxu0 0.0
    %285 = vmatpush1.msra.mxu0 %v162
    %286 = vmatprep.subr.mxu0 0.0
    %287 = vmatpush1.msra.mxu0 %v163
    %288 = vmatprep.subr.mxu0 0.0
    %289 = vmatpush1.msra.mxu0 %v164
    %290 = vmatprep.subr.mxu0 0.0
    %291 = vmatpush1.msra.mxu0 0.0
    %292 = vmatprep.subr.mxu0 0.0
    %293 = vmatpush1.msra.mxu0 0.0
    %294 = vmatprep.subr.mxu0 0.0
    %295 = vmatpush1.msra.mxu0 0.0
    %296 = vmatprep.subr.mxu0 0.0
    %297 = vmatpush1.msra.mxu0 0.0
    %298 = vmatprep.subr.mxu0 0.0
    %299 = vmatpush1.msra.mxu0 0.0
    %300 = vmatprep.subr.mxu0 0.0
    %301 = vmatpush1.msra.mxu0 0.0
    %302 = vmatprep.subr.mxu0 0.0
    %303 = vmatpush1.msra.mxu0 0.0
    %304 = vmatprep.subr.mxu0 0.0
    %305 = vmatpush1.msra.mxu0 0.0
    %306 = vmatprep.subr.mxu0 0.0
    %307 = vmatpush1.msra.mxu0 0.0
    %308 = vmatprep.subr.mxu0 0.0
    %309 = vmatpush1.msra.mxu0 0.0
    %310 = vmatprep.subr.mxu0 0.0
    %311 = vmatpush1.msra.mxu0 0.0
    %312 = vmatprep.subr.mxu0 0.0
    %313 = vmatpush1.msra.mxu0 0.0
    %314 = vmatprep.subr.mxu0 0.0
    %315 = vmatpush1.msra.mxu0 0.0
    %316 = vmatprep.subr.mxu0 0.0
    %317 = vmatpush1.msra.mxu0 0.0
    %318 = vmatprep.subr.mxu0 0.0
    %319 = vmatpush1.msra.mxu0 0.0
    %320 = vmatprep.subr.mxu0 0.0
    %321 = vmatpush1.msra.mxu0 0.0
    %322 = vmatprep.subr.mxu0 0.0
    %323 = vmatpush1.msra.mxu0 0.0
    %324 = vmatprep.subr.mxu0 0.0
    %325 = vmatpush1.msra.mxu0 0.0
    %326 = vmatprep.subr.mxu0 0.0
    %327 = vmatpush1.msra.mxu0 0.0
    %328 = vmatprep.subr.mxu0 0.0
    %329 = vmatpush1.msra.mxu0 0.0
    %330 = vmatprep.subr.mxu0 0.0
    %331 = vmatpush1.msra.mxu0 0.0
    %332 = vmatprep.subr.mxu0 0.0
    %333 = vmatpush1.msra.mxu0 0.0
    %334 = vmatprep.subr.mxu0 0.0
    %335 = vmatpush1.msra.mxu0 0.0
    %336 = vmatprep.subr.mxu0 0.0
    %337 = vmatpush1.msra.mxu0 0.0
    %338 = vmatprep.subr.mxu0 0.0
    %339 = vmatpush1.msra.mxu0 0.0
    %340 = vmatprep.subr.mxu0 0.0
    %341 = vmatpush1.msra.mxu0 0.0
    %342 = vmatprep.subr.mxu0 0.0
    %343 = vmatpush1.msra.mxu0 0.0
    %344 = vmatprep.subr.mxu0 0.0
    %345 = vmatpush1.msra.mxu0 0.0
    %346 = vmatprep.mubr.f32.mxu0 0.0
    %347 = vmatmul.mubr.f32.gmra.mrb[0].mxu0 %v280
    %v348 = vpop.f32.mrb[0].mxu0
    %v349 = vadd.f32 0.0, %v348
    %v350 = vpop.f32.mrb[0].mxu0
    %351 = vdwg.mxu0
    %v352 = vadd.f32 %v277, %v349
    %v353 = vxor.u32 %v352, 2147483648
    %v354 = vmul.f32 %v353, 1.442695
    %v355 = vpow.pop %v354
    %v356 = vadd.f32 %v355, 1.0
    %v357 = vrcp.pop %v356
    %v358 = vmul.f32 1.0, %v357
    %v360 = vlaneseq
    %v361 = vshrl.u32 %v360, 7
    %v362 = vsub.s32 0, %v361
    %v363 = vrot.slane %v166, %v362
    %364 = vrot.lane.b32.xlu0 %v363, 64
    %v365 = vpop.permute.xlu0 %364
    %v367 = vadd.f32 %v349, %v365
    %369 = vrot.lane.b32.xlu0 %v367, 64
    %v370 = vpop.permute.xlu0 %369
    %v372 = vmul.f32 %v358, %v370
    %374 = vrot.lane.b32.xlu0 %v372, 64
    %v375 = vpop.permute.xlu0 %374
    %v377 = vadd.f32 %v277, %v375
    %v378 = vtanh.pop %v377
    %380 = vrot.lane.b32.xlu0 %v378, 64
    %v381 = vpop.permute.xlu0 %380
    %v383 = vsub.f32 %v276, %v381
    %385 = vrot.lane.b32.xlu0 %v383, 32
    %v386 = vpop.permute.xlu0 %385
    %v388 = vmul.f32 %v358, %v386
    %390 = vrot.lane.b32.xlu0 %v388, 32
    %v391 = vpop.permute.xlu0 %390
    %v393 = vadd.f32 %v378, %v391
    %v394 = vld [vmem:[%s259] sm:$0x3]
    %396 = vrot.lane.b32.xlu0 %v393, 64
    %v397 = vpop.permute.xlu0 %396
    %v398 = vsel %vm278, %v397, 0
    %400 = vmatprep.subr.mxu0 0.0
    %401 = vmatpush1.msra.mxu0 %v161
    %402 = vmatprep.subr.mxu0 0.0
    %403 = vmatpush1.msra.mxu0 %v162
    %404 = vmatprep.subr.mxu0 0.0
    %405 = vmatpush1.msra.mxu0 %v163
    %406 = vmatprep.subr.mxu0 0.0
    %407 = vmatpush1.msra.mxu0 %v164
    %408 = vmatprep.subr.mxu0 0.0
    %409 = vmatpush1.msra.mxu0 0.0
    %410 = vmatprep.subr.mxu0 0.0
    %411 = vmatpush1.msra.mxu0 0.0
    %412 = vmatprep.subr.mxu0 0.0
    %413 = vmatpush1.msra.mxu0 0.0
    %414 = vmatprep.subr.mxu0 0.0
    %415 = vmatpush1.msra.mxu0 0.0
    %416 = vmatprep.subr.mxu0 0.0
    %417 = vmatpush1.msra.mxu0 0.0
    %418 = vmatprep.subr.mxu0 0.0
    %419 = vmatpush1.msra.mxu0 0.0
    %420 = vmatprep.subr.mxu0 0.0
    %421 = vmatpush1.msra.mxu0 0.0
    %422 = vmatprep.subr.mxu0 0.0
    %423 = vmatpush1.msra.mxu0 0.0
    %424 = vmatprep.subr.mxu0 0.0
    %425 = vmatpush1.msra.mxu0 0.0
    %426 = vmatprep.subr.mxu0 0.0
    %427 = vmatpush1.msra.mxu0 0.0
    %428 = vmatprep.subr.mxu0 0.0
    %429 = vmatpush1.msra.mxu0 0.0
    %430 = vmatprep.subr.mxu0 0.0
    %431 = vmatpush1.msra.mxu0 0.0
    %432 = vmatprep.subr.mxu0 0.0
    %433 = vmatpush1.msra.mxu0 0.0
    %434 = vmatprep.subr.mxu0 0.0
    %435 = vmatpush1.msra.mxu0 0.0
    %436 = vmatprep.subr.mxu0 0.0
    %437 = vmatpush1.msra.mxu0 0.0
    %438 = vmatprep.subr.mxu0 0.0
    %439 = vmatpush1.msra.mxu0 0.0
    %440 = vmatprep.subr.mxu0 0.0
    %441 = vmatpush1.msra.mxu0 0.0
    %442 = vmatprep.subr.mxu0 0.0
    %443 = vmatpush1.msra.mxu0 0.0
    %444 = vmatprep.subr.mxu0 0.0
    %445 = vmatpush1.msra.mxu0 0.0
    %446 = vmatprep.subr.mxu0 0.0
    %447 = vmatpush1.msra.mxu0 0.0
    %448 = vmatprep.subr.mxu0 0.0
    %449 = vmatpush1.msra.mxu0 0.0
    %450 = vmatprep.subr.mxu0 0.0
    %451 = vmatpush1.msra.mxu0 0.0
    %452 = vmatprep.subr.mxu0 0.0
    %453 = vmatpush1.msra.mxu0 0.0
    %454 = vmatprep.subr.mxu0 0.0
    %455 = vmatpush1.msra.mxu0 0.0
    %456 = vmatprep.subr.mxu0 0.0
    %457 = vmatpush1.msra.mxu0 0.0
    %458 = vmatprep.subr.mxu0 0.0
    %459 = vmatpush1.msra.mxu0 0.0
    %460 = vmatprep.subr.mxu0 0.0
    %461 = vmatpush1.msra.mxu0 0.0
    %462 = vmatprep.subr.mxu0 0.0
    %463 = vmatpush1.msra.mxu0 0.0
    %464 = vmatprep.mubr.f32.mxu0 0.0
    %465 = vmatmul.mubr.f32.gmra.mrb[0].mxu0 %v398
    %v466 = vpop.f32.mrb[0].mxu0
    %v467 = vadd.f32 0.0, %v466
    %v468 = vpop.f32.mrb[0].mxu0
    %469 = vdwg.mxu0
    %v470 = vadd.f32 %v394, %v467
    %v471 = vxor.u32 %v470, 2147483648
    %v472 = vmul.f32 %v471, 1.442695
    %v473 = vpow.pop %v472
    %v474 = vadd.f32 %v473, 1.0
    %v475 = vrcp.pop %v474
    %v476 = vmul.f32 1.0, %v475
    %v477 = vadd.f32 %v467, %v365
    %479 = vrot.lane.b32.xlu0 %v477, 64
    %v480 = vpop.permute.xlu0 %479
    %v482 = vmul.f32 %v476, %v480
    %484 = vrot.lane.b32.xlu0 %v482, 64
    %v485 = vpop.permute.xlu0 %484
    %v487 = vadd.f32 %v394, %v485
    %v488 = vtanh.pop %v487
    %v489 = vsub.f32 %v393, %v488
    %491 = vrot.lane.b32.xlu0 %v489, 96
    %v492 = vpop.permute.xlu0 %491
    %v494 = vmul.f32 %v476, %v492
    %496 = vrot.lane.b32.xlu0 %v494, 32
    %v497 = vpop.permute.xlu0 %496
    %v499 = vadd.f32 %v488, %v497
    %v500 = vld [vmem:[%s262] sm:$0x3]
    %502 = vrot.lane.b32.xlu0 %v499, 64
    %v503 = vpop.permute.xlu0 %502
    %v504 = vsel %vm278, %v503, 0
    %506 = vmatprep.subr.mxu0 0.0
    %507 = vmatpush1.msra.mxu0 %v161
    %508 = vmatprep.subr.mxu0 0.0
    %509 = vmatpush1.msra.mxu0 %v162
    %510 = vmatprep.subr.mxu0 0.0
    %511 = vmatpush1.msra.mxu0 %v163
    %512 = vmatprep.subr.mxu0 0.0
    %513 = vmatpush1.msra.mxu0 %v164
    %514 = vmatprep.subr.mxu0 0.0
    %515 = vmatpush1.msra.mxu0 0.0
    %516 = vmatprep.subr.mxu0 0.0
    %517 = vmatpush1.msra.mxu0 0.0
    %518 = vmatprep.subr.mxu0 0.0
    %519 = vmatpush1.msra.mxu0 0.0
    %520 = vmatprep.subr.mxu0 0.0
    %521 = vmatpush1.msra.mxu0 0.0
    %522 = vmatprep.subr.mxu0 0.0
    %523 = vmatpush1.msra.mxu0 0.0
    %524 = vmatprep.subr.mxu0 0.0
    %525 = vmatpush1.msra.mxu0 0.0
    %526 = vmatprep.subr.mxu0 0.0
    %527 = vmatpush1.msra.mxu0 0.0
    %528 = vmatprep.subr.mxu0 0.0
    %529 = vmatpush1.msra.mxu0 0.0
    %530 = vmatprep.subr.mxu0 0.0
    %531 = vmatpush1.msra.mxu0 0.0
    %532 = vmatprep.subr.mxu0 0.0
    %533 = vmatpush1.msra.mxu0 0.0
    %534 = vmatprep.subr.mxu0 0.0
    %535 = vmatpush1.msra.mxu0 0.0
    %536 = vmatprep.subr.mxu0 0.0
    %537 = vmatpush1.msra.mxu0 0.0
    %538 = vmatprep.subr.mxu0 0.0
    %539 = vmatpush1.msra.mxu0 0.0
    %540 = vmatprep.subr.mxu0 0.0
    %541 = vmatpush1.msra.mxu0 0.0
    %542 = vmatprep.subr.mxu0 0.0
    %543 = vmatpush1.msra.mxu0 0.0
    %544 = vmatprep.subr.mxu0 0.0
    %545 = vmatpush1.msra.mxu0 0.0
    %546 = vmatprep.subr.mxu0 0.0
    %547 = vmatpush1.msra.mxu0 0.0
    %548 = vmatprep.subr.mxu0 0.0
    %549 = vmatpush1.msra.mxu0 0.0
    %550 = vmatprep.subr.mxu0 0.0
    %551 = vmatpush1.msra.mxu0 0.0
    %552 = vmatprep.subr.mxu0 0.0
    %553 = vmatpush1.msra.mxu0 0.0
    %554 = vmatprep.subr.mxu0 0.0
    %555 = vmatpush1.msra.mxu0 0.0
    %556 = vmatprep.subr.mxu0 0.0
    %557 = vmatpush1.msra.mxu0 0.0
    %558 = vmatprep.subr.mxu0 0.0
    %559 = vmatpush1.msra.mxu0 0.0
    %560 = vmatprep.subr.mxu0 0.0
    %561 = vmatpush1.msra.mxu0 0.0
    %562 = vmatprep.subr.mxu0 0.0
    %563 = vmatpush1.msra.mxu0 0.0
    %564 = vmatprep.subr.mxu0 0.0
    %565 = vmatpush1.msra.mxu0 0.0
    %566 = vmatprep.subr.mxu0 0.0
    %567 = vmatpush1.msra.mxu0 0.0
    %568 = vmatprep.subr.mxu0 0.0
    %569 = vmatpush1.msra.mxu0 0.0
    %570 = vmatprep.mubr.f32.mxu0 0.0
    %571 = vmatmul.mubr.f32.gmra.mrb[0].mxu0 %v504
    %v572 = vpop.f32.mrb[0].mxu0
    %v573 = vadd.f32 0.0, %v572
    %v574 = vpop.f32.mrb[0].mxu0
    %575 = vdwg.mxu0
    %v576 = vadd.f32 %v500, %v573
    %v577 = vxor.u32 %v576, 2147483648
    %v578 = vmul.f32 %v577, 1.442695
    %v579 = vpow.pop %v578
    %v580 = vadd.f32 %v579, 1.0
    %v581 = vrcp.pop %v580
    %v582 = vmul.f32 1.0, %v581
    %v583 = vadd.f32 %v573, %v365
    %585 = vrot.lane.b32.xlu0 %v583, 64
    %v586 = vpop.permute.xlu0 %585
    %v588 = vmul.f32 %v582, %v586
    %590 = vrot.lane.b32.xlu0 %v588, 64
    %v591 = vpop.permute.xlu0 %590
    %v593 = vadd.f32 %v500, %v591
    %v594 = vtanh.pop %v593
    %v595 = vsub.f32 %v499, %v594
    %597 = vrot.lane.b32.xlu0 %v595, 96
    %v598 = vpop.permute.xlu0 %597
    %v600 = vmul.f32 %v582, %v598
    %602 = vrot.lane.b32.xlu0 %v600, 32
    %v603 = vpop.permute.xlu0 %602
    %v605 = vadd.f32 %v594, %v603
    %v606 = vld [vmem:[%s265] sm:$0x3]
    %608 = vrot.lane.b32.xlu0 %v605, 64
    %v609 = vpop.permute.xlu0 %608
    %v610 = vsel %vm278, %v609, 0
    %612 = vmatprep.subr.mxu0 0.0
    %613 = vmatpush1.msra.mxu0 %v161
    %614 = vmatprep.subr.mxu0 0.0
    %615 = vmatpush1.msra.mxu0 %v162
    %616 = vmatprep.subr.mxu0 0.0
    %617 = vmatpush1.msra.mxu0 %v163
    %618 = vmatprep.subr.mxu0 0.0
    %619 = vmatpush1.msra.mxu0 %v164
    %620 = vmatprep.subr.mxu0 0.0
    %621 = vmatpush1.msra.mxu0 0.0
    %622 = vmatprep.subr.mxu0 0.0
    %623 = vmatpush1.msra.mxu0 0.0
    %624 = vmatprep.subr.mxu0 0.0
    %625 = vmatpush1.msra.mxu0 0.0
    %626 = vmatprep.subr.mxu0 0.0
    %627 = vmatpush1.msra.mxu0 0.0
    %628 = vmatprep.subr.mxu0 0.0
    %629 = vmatpush1.msra.mxu0 0.0
    %630 = vmatprep.subr.mxu0 0.0
    %631 = vmatpush1.msra.mxu0 0.0
    %632 = vmatprep.subr.mxu0 0.0
    %633 = vmatpush1.msra.mxu0 0.0
    %634 = vmatprep.subr.mxu0 0.0
    %635 = vmatpush1.msra.mxu0 0.0
    %636 = vmatprep.subr.mxu0 0.0
    %637 = vmatpush1.msra.mxu0 0.0
    %638 = vmatprep.subr.mxu0 0.0
    %639 = vmatpush1.msra.mxu0 0.0
    %640 = vmatprep.subr.mxu0 0.0
    %641 = vmatpush1.msra.mxu0 0.0
    %642 = vmatprep.subr.mxu0 0.0
    %643 = vmatpush1.msra.mxu0 0.0
    %644 = vmatprep.subr.mxu0 0.0
    %645 = vmatpush1.msra.mxu0 0.0
    %646 = vmatprep.subr.mxu0 0.0
    %647 = vmatpush1.msra.mxu0 0.0
    %648 = vmatprep.subr.mxu0 0.0
    %649 = vmatpush1.msra.mxu0 0.0
    %650 = vmatprep.subr.mxu0 0.0
    %651 = vmatpush1.msra.mxu0 0.0
    %652 = vmatprep.subr.mxu0 0.0
    %653 = vmatpush1.msra.mxu0 0.0
    %654 = vmatprep.subr.mxu0 0.0
    %655 = vmatpush1.msra.mxu0 0.0
    %656 = vmatprep.subr.mxu0 0.0
    %657 = vmatpush1.msra.mxu0 0.0
    %658 = vmatprep.subr.mxu0 0.0
    %659 = vmatpush1.msra.mxu0 0.0
    %660 = vmatprep.subr.mxu0 0.0
    %661 = vmatpush1.msra.mxu0 0.0
    %662 = vmatprep.subr.mxu0 0.0
    %663 = vmatpush1.msra.mxu0 0.0
    %664 = vmatprep.subr.mxu0 0.0
    %665 = vmatpush1.msra.mxu0 0.0
    %666 = vmatprep.subr.mxu0 0.0
    %667 = vmatpush1.msra.mxu0 0.0
    %668 = vmatprep.subr.mxu0 0.0
    %669 = vmatpush1.msra.mxu0 0.0
    %670 = vmatprep.subr.mxu0 0.0
    %671 = vmatpush1.msra.mxu0 0.0
    %672 = vmatprep.subr.mxu0 0.0
    %673 = vmatpush1.msra.mxu0 0.0
    %674 = vmatprep.subr.mxu0 0.0
    %675 = vmatpush1.msra.mxu0 0.0
    %676 = vmatprep.mubr.f32.mxu0 0.0
    %677 = vmatmul.mubr.f32.gmra.mrb[0].mxu0 %v610
    %v678 = vpop.f32.mrb[0].mxu0
    %v679 = vadd.f32 0.0, %v678
    %v680 = vpop.f32.mrb[0].mxu0
    %681 = vdwg.mxu0
    %v682 = vadd.f32 %v606, %v679
    %v683 = vxor.u32 %v682, 2147483648
    %v684 = vmul.f32 %v683, 1.442695
    %v685 = vpow.pop %v684
    %v686 = vadd.f32 %v685, 1.0
    %v687 = vrcp.pop %v686
    %v688 = vmul.f32 1.0, %v687
    %v689 = vadd.f32 %v679, %v365
    %691 = vrot.lane.b32.xlu0 %v689, 64
    %v692 = vpop.permute.xlu0 %691
    %v694 = vmul.f32 %v688, %v692
    %696 = vrot.lane.b32.xlu0 %v694, 64
    %v697 = vpop.permute.xlu0 %696
    %v699 = vadd.f32 %v606, %v697
    %v700 = vtanh.pop %v699
    %v701 = vsub.f32 %v605, %v700
    %703 = vrot.lane.b32.xlu0 %v701, 96
    %v704 = vpop.permute.xlu0 %703
    %v706 = vmul.f32 %v688, %v704
    %708 = vrot.lane.b32.xlu0 %v706, 32
    %v709 = vpop.permute.xlu0 %708
    %v711 = vadd.f32 %v700, %v709
    %v712 = vld [vmem:[%s268] sm:$0x3]
    %714 = vrot.lane.b32.xlu0 %v711, 64
    %v715 = vpop.permute.xlu0 %714
    %v716 = vsel %vm278, %v715, 0
    %718 = vmatprep.subr.mxu0 0.0
    %719 = vmatpush1.msra.mxu0 %v161
    %720 = vmatprep.subr.mxu0 0.0
    %721 = vmatpush1.msra.mxu0 %v162
    %722 = vmatprep.subr.mxu0 0.0
    %723 = vmatpush1.msra.mxu0 %v163
    %724 = vmatprep.subr.mxu0 0.0
    %725 = vmatpush1.msra.mxu0 %v164
    %726 = vmatprep.subr.mxu0 0.0
    %727 = vmatpush1.msra.mxu0 0.0
    %728 = vmatprep.subr.mxu0 0.0
    %729 = vmatpush1.msra.mxu0 0.0
    %730 = vmatprep.subr.mxu0 0.0
    %731 = vmatpush1.msra.mxu0 0.0
    %732 = vmatprep.subr.mxu0 0.0
    %733 = vmatpush1.msra.mxu0 0.0
    %734 = vmatprep.subr.mxu0 0.0
    %735 = vmatpush1.msra.mxu0 0.0
    %736 = vmatprep.subr.mxu0 0.0
    %737 = vmatpush1.msra.mxu0 0.0
    %738 = vmatprep.subr.mxu0 0.0
    %739 = vmatpush1.msra.mxu0 0.0
    %740 = vmatprep.subr.mxu0 0.0
    %741 = vmatpush1.msra.mxu0 0.0
    %742 = vmatprep.subr.mxu0 0.0
    %743 = vmatpush1.msra.mxu0 0.0
    %744 = vmatprep.subr.mxu0 0.0
    %745 = vmatpush1.msra.mxu0 0.0
    %746 = vmatprep.subr.mxu0 0.0
    %747 = vmatpush1.msra.mxu0 0.0
    %748 = vmatprep.subr.mxu0 0.0
    %749 = vmatpush1.msra.mxu0 0.0
    %750 = vmatprep.subr.mxu0 0.0
    %751 = vmatpush1.msra.mxu0 0.0
    %752 = vmatprep.subr.mxu0 0.0
    %753 = vmatpush1.msra.mxu0 0.0
    %754 = vmatprep.subr.mxu0 0.0
    %755 = vmatpush1.msra.mxu0 0.0
    %756 = vmatprep.subr.mxu0 0.0
    %757 = vmatpush1.msra.mxu0 0.0
    %758 = vmatprep.subr.mxu0 0.0
    %759 = vmatpush1.msra.mxu0 0.0
    %760 = vmatprep.subr.mxu0 0.0
    %761 = vmatpush1.msra.mxu0 0.0
    %762 = vmatprep.subr.mxu0 0.0
    %763 = vmatpush1.msra.mxu0 0.0
    %764 = vmatprep.subr.mxu0 0.0
    %765 = vmatpush1.msra.mxu0 0.0
    %766 = vmatprep.subr.mxu0 0.0
    %767 = vmatpush1.msra.mxu0 0.0
    %768 = vmatprep.subr.mxu0 0.0
    %769 = vmatpush1.msra.mxu0 0.0
    %770 = vmatprep.subr.mxu0 0.0
    %771 = vmatpush1.msra.mxu0 0.0
    %772 = vmatprep.subr.mxu0 0.0
    %773 = vmatpush1.msra.mxu0 0.0
    %774 = vmatprep.subr.mxu0 0.0
    %775 = vmatpush1.msra.mxu0 0.0
    %776 = vmatprep.subr.mxu0 0.0
    %777 = vmatpush1.msra.mxu0 0.0
    %778 = vmatprep.subr.mxu0 0.0
    %779 = vmatpush1.msra.mxu0 0.0
    %780 = vmatprep.subr.mxu0 0.0
    %781 = vmatpush1.msra.mxu0 0.0
    %782 = vmatprep.mubr.f32.mxu0 0.0
    %783 = vmatmul.mubr.f32.gmra.mrb[0].mxu0 %v716
    %v784 = vpop.f32.mrb[0].mxu0
    %v785 = vadd.f32 0.0, %v784
    %v786 = vpop.f32.mrb[0].mxu0
    %787 = vdwg.mxu0
    %v788 = vadd.f32 %v712, %v785
    %v789 = vxor.u32 %v788, 2147483648
    %v790 = vmul.f32 %v789, 1.442695
    %v791 = vpow.pop %v790
    %v792 = vadd.f32 %v791, 1.0
    %v793 = vrcp.pop %v792
    %v794 = vmul.f32 1.0, %v793
    %v795 = vadd.f32 %v785, %v365
    %797 = vrot.lane.b32.xlu0 %v795, 64
    %v798 = vpop.permute.xlu0 %797
    %v800 = vmul.f32 %v794, %v798
    %802 = vrot.lane.b32.xlu0 %v800, 64
    %v803 = vpop.permute.xlu0 %802
    %v805 = vadd.f32 %v712, %v803
    %v806 = vtanh.pop %v805
    %v807 = vsub.f32 %v711, %v806
    %809 = vrot.lane.b32.xlu0 %v807, 96
    %v810 = vpop.permute.xlu0 %809
    %v812 = vmul.f32 %v794, %v810
    %814 = vrot.lane.b32.xlu0 %v812, 32
    %v815 = vpop.permute.xlu0 %814
    %v817 = vadd.f32 %v806, %v815
    %v818 = vld [vmem:[%s270] sm:$0x3]
    %820 = vrot.lane.b32.xlu0 %v817, 64
    %v821 = vpop.permute.xlu0 %820
    %v822 = vsel %vm278, %v821, 0
    %824 = vmatprep.subr.mxu0 0.0
    %825 = vmatpush1.msra.mxu0 %v161
    %826 = vmatprep.subr.mxu0 0.0
    %827 = vmatpush1.msra.mxu0 %v162
    %828 = vmatprep.subr.mxu0 0.0
    %829 = vmatpush1.msra.mxu0 %v163
    %830 = vmatprep.subr.mxu0 0.0
    %831 = vmatpush1.msra.mxu0 %v164
    %832 = vmatprep.subr.mxu0 0.0
    %833 = vmatpush1.msra.mxu0 0.0
    %834 = vmatprep.subr.mxu0 0.0
    %835 = vmatpush1.msra.mxu0 0.0
    %836 = vmatprep.subr.mxu0 0.0
    %837 = vmatpush1.msra.mxu0 0.0
    %838 = vmatprep.subr.mxu0 0.0
    %839 = vmatpush1.msra.mxu0 0.0
    %840 = vmatprep.subr.mxu0 0.0
    %841 = vmatpush1.msra.mxu0 0.0
    %842 = vmatprep.subr.mxu0 0.0
    %843 = vmatpush1.msra.mxu0 0.0
    %844 = vmatprep.subr.mxu0 0.0
    %845 = vmatpush1.msra.mxu0 0.0
    %846 = vmatprep.subr.mxu0 0.0
    %847 = vmatpush1.msra.mxu0 0.0
    %848 = vmatprep.subr.mxu0 0.0
    %849 = vmatpush1.msra.mxu0 0.0
    %850 = vmatprep.subr.mxu0 0.0
    %851 = vmatpush1.msra.mxu0 0.0
    %852 = vmatprep.subr.mxu0 0.0
    %853 = vmatpush1.msra.mxu0 0.0
    %854 = vmatprep.subr.mxu0 0.0
    %855 = vmatpush1.msra.mxu0 0.0
    %856 = vmatprep.subr.mxu0 0.0
    %857 = vmatpush1.msra.mxu0 0.0
    %858 = vmatprep.subr.mxu0 0.0
    %859 = vmatpush1.msra.mxu0 0.0
    %860 = vmatprep.subr.mxu0 0.0
    %861 = vmatpush1.msra.mxu0 0.0
    %862 = vmatprep.subr.mxu0 0.0
    %863 = vmatpush1.msra.mxu0 0.0
    %864 = vmatprep.subr.mxu0 0.0
    %865 = vmatpush1.msra.mxu0 0.0
    %866 = vmatprep.subr.mxu0 0.0
    %867 = vmatpush1.msra.mxu0 0.0
    %868 = vmatprep.subr.mxu0 0.0
    %869 = vmatpush1.msra.mxu0 0.0
    %870 = vmatprep.subr.mxu0 0.0
    %871 = vmatpush1.msra.mxu0 0.0
    %872 = vmatprep.subr.mxu0 0.0
    %873 = vmatpush1.msra.mxu0 0.0
    %874 = vmatprep.subr.mxu0 0.0
    %875 = vmatpush1.msra.mxu0 0.0
    %876 = vmatprep.subr.mxu0 0.0
    %877 = vmatpush1.msra.mxu0 0.0
    %878 = vmatprep.subr.mxu0 0.0
    %879 = vmatpush1.msra.mxu0 0.0
    %880 = vmatprep.subr.mxu0 0.0
    %881 = vmatpush1.msra.mxu0 0.0
    %882 = vmatprep.subr.mxu0 0.0
    %883 = vmatpush1.msra.mxu0 0.0
    %884 = vmatprep.subr.mxu0 0.0
    %885 = vmatpush1.msra.mxu0 0.0
    %886 = vmatprep.subr.mxu0 0.0
    %887 = vmatpush1.msra.mxu0 0.0
    %888 = vmatprep.mubr.f32.mxu0 0.0
    %889 = vmatmul.mubr.f32.gmra.mrb[0].mxu0 %v822
    %v890 = vpop.f32.mrb[0].mxu0
    %v891 = vadd.f32 0.0, %v890
    %v892 = vpop.f32.mrb[0].mxu0
    %893 = vdwg.mxu0
    %v894 = vadd.f32 %v818, %v891
    %v895 = vxor.u32 %v894, 2147483648
    %v896 = vmul.f32 %v895, 1.442695
    %v897 = vpow.pop %v896
    %v898 = vadd.f32 %v897, 1.0
    %v899 = vrcp.pop %v898
    %v900 = vmul.f32 1.0, %v899
    %v901 = vadd.f32 %v891, %v365
    %903 = vrot.lane.b32.xlu0 %v901, 64
    %v904 = vpop.permute.xlu0 %903
    %v906 = vmul.f32 %v900, %v904
    %908 = vrot.lane.b32.xlu0 %v906, 64
    %v909 = vpop.permute.xlu0 %908
    %v911 = vadd.f32 %v818, %v909
    %v912 = vtanh.pop %v911
    %v913 = vsub.f32 %v817, %v912
    %915 = vrot.lane.b32.xlu0 %v913, 96
    %v916 = vpop.permute.xlu0 %915
    %v918 = vmul.f32 %v900, %v916
    %920 = vrot.lane.b32.xlu0 %v918, 32
    %v921 = vpop.permute.xlu0 %920
    %v923 = vadd.f32 %v912, %v921
    %v924 = vld [vmem:[%s272] sm:$0x3]
    %926 = vrot.lane.b32.xlu0 %v923, 64
    %v927 = vpop.permute.xlu0 %926
    %v928 = vsel %vm278, %v927, 0
    %930 = vmatprep.subr.mxu0 0.0
    %931 = vmatpush1.msra.mxu0 %v161
    %932 = vmatprep.subr.mxu0 0.0
    %933 = vmatpush1.msra.mxu0 %v162
    %934 = vmatprep.subr.mxu0 0.0
    %935 = vmatpush1.msra.mxu0 %v163
    %936 = vmatprep.subr.mxu0 0.0
    %937 = vmatpush1.msra.mxu0 %v164
    %938 = vmatprep.subr.mxu0 0.0
    %939 = vmatpush1.msra.mxu0 0.0
    %940 = vmatprep.subr.mxu0 0.0
    %941 = vmatpush1.msra.mxu0 0.0
    %942 = vmatprep.subr.mxu0 0.0
    %943 = vmatpush1.msra.mxu0 0.0
    %944 = vmatprep.subr.mxu0 0.0
    %945 = vmatpush1.msra.mxu0 0.0
    %946 = vmatprep.subr.mxu0 0.0
    %947 = vmatpush1.msra.mxu0 0.0
    %948 = vmatprep.subr.mxu0 0.0
    %949 = vmatpush1.msra.mxu0 0.0
    %950 = vmatprep.subr.mxu0 0.0
    %951 = vmatpush1.msra.mxu0 0.0
    %952 = vmatprep.subr.mxu0 0.0
    %953 = vmatpush1.msra.mxu0 0.0
    %954 = vmatprep.subr.mxu0 0.0
    %955 = vmatpush1.msra.mxu0 0.0
    %956 = vmatprep.subr.mxu0 0.0
    %957 = vmatpush1.msra.mxu0 0.0
    %958 = vmatprep.subr.mxu0 0.0
    %959 = vmatpush1.msra.mxu0 0.0
    %960 = vmatprep.subr.mxu0 0.0
    %961 = vmatpush1.msra.mxu0 0.0
    %962 = vmatprep.subr.mxu0 0.0
    %963 = vmatpush1.msra.mxu0 0.0
    %964 = vmatprep.subr.mxu0 0.0
    %965 = vmatpush1.msra.mxu0 0.0
    %966 = vmatprep.subr.mxu0 0.0
    %967 = vmatpush1.msra.mxu0 0.0
    %968 = vmatprep.subr.mxu0 0.0
    %969 = vmatpush1.msra.mxu0 0.0
    %970 = vmatprep.subr.mxu0 0.0
    %971 = vmatpush1.msra.mxu0 0.0
    %972 = vmatprep.subr.mxu0 0.0
    %973 = vmatpush1.msra.mxu0 0.0
    %974 = vmatprep.subr.mxu0 0.0
    %975 = vmatpush1.msra.mxu0 0.0
    %976 = vmatprep.subr.mxu0 0.0
    %977 = vmatpush1.msra.mxu0 0.0
    %978 = vmatprep.subr.mxu0 0.0
    %979 = vmatpush1.msra.mxu0 0.0
    %980 = vmatprep.subr.mxu0 0.0
    %981 = vmatpush1.msra.mxu0 0.0
    %982 = vmatprep.subr.mxu0 0.0
    %983 = vmatpush1.msra.mxu0 0.0
    %984 = vmatprep.subr.mxu0 0.0
    %985 = vmatpush1.msra.mxu0 0.0
    %986 = vmatprep.subr.mxu0 0.0
    %987 = vmatpush1.msra.mxu0 0.0
    %988 = vmatprep.subr.mxu0 0.0
    %989 = vmatpush1.msra.mxu0 0.0
    %990 = vmatprep.subr.mxu0 0.0
    %991 = vmatpush1.msra.mxu0 0.0
    %992 = vmatprep.subr.mxu0 0.0
    %993 = vmatpush1.msra.mxu0 0.0
    %994 = vmatprep.mubr.f32.mxu0 0.0
    %995 = vmatmul.mubr.f32.gmra.mrb[0].mxu0 %v928
    %v996 = vpop.f32.mrb[0].mxu0
    %v997 = vadd.f32 0.0, %v996
    %v998 = vpop.f32.mrb[0].mxu0
    %999 = vdwg.mxu0
    %v1000 = vadd.f32 %v924, %v997
    %v1001 = vxor.u32 %v1000, 2147483648
    %v1002 = vmul.f32 %v1001, 1.442695
    %v1003 = vpow.pop %v1002
    %v1004 = vadd.f32 %v1003, 1.0
    %v1005 = vrcp.pop %v1004
    %v1006 = vmul.f32 1.0, %v1005
    %v1007 = vadd.f32 %v997, %v365
    %1009 = vrot.lane.b32.xlu0 %v1007, 64
    %v1010 = vpop.permute.xlu0 %1009
    %v1012 = vmul.f32 %v1006, %v1010
    %1014 = vrot.lane.b32.xlu0 %v1012, 64
    %v1015 = vpop.permute.xlu0 %1014
    %v1017 = vadd.f32 %v924, %v1015
    %v1018 = vtanh.pop %v1017
    %v1019 = vsub.f32 %v923, %v1018
    %1021 = vrot.lane.b32.xlu0 %v1019, 96
    %v1022 = vpop.permute.xlu0 %1021
    %v1024 = vmul.f32 %v1006, %v1022
    %1026 = vrot.lane.b32.xlu0 %v1024, 32
    %v1027 = vpop.permute.xlu0 %1026
    %v1029 = vadd.f32 %v1018, %v1027
    %v1030 = vld [vmem:[%s274] sm:$0x3]
    %1032 = vrot.lane.b32.xlu0 %v1029, 64
    %v1033 = vpop.permute.xlu0 %1032
    %v1034 = vsel %vm278, %v1033, 0
    %1036 = vmatprep.subr.mxu0 0.0
    %1037 = vmatpush1.msra.mxu0 %v161
    %1038 = vmatprep.subr.mxu0 0.0
    %1039 = vmatpush1.msra.mxu0 %v162
    %1040 = vmatprep.subr.mxu0 0.0
    %1041 = vmatpush1.msra.mxu0 %v163
    %1042 = vmatprep.subr.mxu0 0.0
    %1043 = vmatpush1.msra.mxu0 %v164
    %1044 = vmatprep.subr.mxu0 0.0
    %1045 = vmatpush1.msra.mxu0 0.0
    %1046 = vmatprep.subr.mxu0 0.0
    %1047 = vmatpush1.msra.mxu0 0.0
    %1048 = vmatprep.subr.mxu0 0.0
    %1049 = vmatpush1.msra.mxu0 0.0
    %1050 = vmatprep.subr.mxu0 0.0
    %1051 = vmatpush1.msra.mxu0 0.0
    %1052 = vmatprep.subr.mxu0 0.0
    %1053 = vmatpush1.msra.mxu0 0.0
    %1054 = vmatprep.subr.mxu0 0.0
    %1055 = vmatpush1.msra.mxu0 0.0
    %1056 = vmatprep.subr.mxu0 0.0
    %1057 = vmatpush1.msra.mxu0 0.0
    %1058 = vmatprep.subr.mxu0 0.0
    %1059 = vmatpush1.msra.mxu0 0.0
    %1060 = vmatprep.subr.mxu0 0.0
    %1061 = vmatpush1.msra.mxu0 0.0
    %1062 = vmatprep.subr.mxu0 0.0
    %1063 = vmatpush1.msra.mxu0 0.0
    %1064 = vmatprep.subr.mxu0 0.0
    %1065 = vmatpush1.msra.mxu0 0.0
    %1066 = vmatprep.subr.mxu0 0.0
    %1067 = vmatpush1.msra.mxu0 0.0
    %1068 = vmatprep.subr.mxu0 0.0
    %1069 = vmatpush1.msra.mxu0 0.0
    %1070 = vmatprep.subr.mxu0 0.0
    %1071 = vmatpush1.msra.mxu0 0.0
    %1072 = vmatprep.subr.mxu0 0.0
    %1073 = vmatpush1.msra.mxu0 0.0
    %1074 = vmatprep.subr.mxu0 0.0
    %1075 = vmatpush1.msra.mxu0 0.0
    %1076 = vmatprep.subr.mxu0 0.0
    %1077 = vmatpush1.msra.mxu0 0.0
    %1078 = vmatprep.subr.mxu0 0.0
    %1079 = vmatpush1.msra.mxu0 0.0
    %1080 = vmatprep.subr.mxu0 0.0
    %1081 = vmatpush1.msra.mxu0 0.0
    %1082 = vmatprep.subr.mxu0 0.0
    %1083 = vmatpush1.msra.mxu0 0.0
    %1084 = vmatprep.subr.mxu0 0.0
    %1085 = vmatpush1.msra.mxu0 0.0
    %1086 = vmatprep.subr.mxu0 0.0
    %1087 = vmatpush1.msra.mxu0 0.0
    %1088 = vmatprep.subr.mxu0 0.0
    %1089 = vmatpush1.msra.mxu0 0.0
    %1090 = vmatprep.subr.mxu0 0.0
    %1091 = vmatpush1.msra.mxu0 0.0
    %1092 = vmatprep.subr.mxu0 0.0
    %1093 = vmatpush1.msra.mxu0 0.0
    %1094 = vmatprep.subr.mxu0 0.0
    %1095 = vmatpush1.msra.mxu0 0.0
    %1096 = vmatprep.subr.mxu0 0.0
    %1097 = vmatpush1.msra.mxu0 0.0
    %1098 = vmatprep.subr.mxu0 0.0
    %1099 = vmatpush1.msra.mxu0 0.0
    %1100 = vmatprep.mubr.f32.mxu0 0.0
    %1101 = vmatmul.mubr.f32.gmra.mrb[0].mxu0 %v1034
    %v1102 = vpop.f32.mrb[0].mxu0
    %v1103 = vadd.f32 0.0, %v1102
    %v1104 = vpop.f32.mrb[0].mxu0
    %1105 = vdwg.mxu0
    %v1106 = vadd.f32 %v1030, %v1103
    %v1107 = vxor.u32 %v1106, 2147483648
    %v1108 = vmul.f32 %v1107, 1.442695
    %v1109 = vpow.pop %v1108
    %v1110 = vadd.f32 %v1109, 1.0
    %v1111 = vrcp.pop %v1110
    %v1112 = vmul.f32 1.0, %v1111
    %v1113 = vadd.f32 %v1103, %v365
    %1115 = vrot.lane.b32.xlu0 %v1113, 64
    %v1116 = vpop.permute.xlu0 %1115
    %v1118 = vmul.f32 %v1112, %v1116
    %1120 = vrot.lane.b32.xlu0 %v1118, 64
    %v1121 = vpop.permute.xlu0 %1120
    %v1123 = vadd.f32 %v1030, %v1121
    %v1124 = vtanh.pop %v1123
    %v1125 = vsub.f32 %v1029, %v1124
    %1127 = vrot.lane.b32.xlu0 %v1125, 96
    %v1128 = vpop.permute.xlu0 %1127
    %v1130 = vmul.f32 %v1112, %v1128
    %1132 = vrot.lane.b32.xlu0 %v1130, 32
    %v1133 = vpop.permute.xlu0 %1132
    %v1135 = vadd.f32 %v1124, %v1133
    %1137 = vrot.lane.b32.xlu0 %v1135, 64
    %v1138 = vpop.permute.xlu0 %1137
    %vm1140 = vcmask 254976
    %1141 = vst.msk [vmem:[#allocation19] sm:$0x3] %vm1140, %v1138
    %v1142 = vld [vmem:[#allocation11] sm:$0xff]
    %v1143 = vld [vmem:[#allocation11 + $0x8] sm:$0xff]
    %v1144 = vld [vmem:[#allocation11 + $0x10] sm:$0xff]
    %v1145 = vld [vmem:[#allocation11 + $0x18] sm:$0xff]
    %v1146 = vld [vmem:[#allocation12] sm:$0xff]
    %v1147 = vld [vmem:[#allocation12 + $0x8] sm:$0xff]
    %v1148 = vld [vmem:[#allocation12 + $0x10] sm:$0xff]
    %v1149 = vld [vmem:[#allocation12 + $0x18] sm:$0xff]
    %v1150 = vld [vmem:[#allocation14] sm:$0x1]
    %v1151 = vld [vmem:[#allocation15] sm:$0x1]
    %v1153 = vlaneseq
    %v1154 = vshrl.u32 %v1153, 7
    %v1155 = vsub.s32 0, %v1154
    %v1156 = vrot.slane %v1150, %v1155
    %1158 = vmatprep.subr.mxu0 0.0
    %1159 = vmatpush1.msra.mxu0 %v1142
    %1160 = vmatprep.subr.mxu0 0.0
    %1161 = vmatpush1.msra.mxu0 %v1143
    %1162 = vmatprep.subr.mxu0 0.0
    %1163 = vmatpush1.msra.mxu0 %v1144
    %1164 = vmatprep.subr.mxu0 0.0
    %1165 = vmatpush1.msra.mxu0 %v1145
    %1166 = vmatprep.subr.mxu0 0.0
    %1167 = vmatpush1.msra.mxu0 0.0
    %1168 = vmatprep.subr.mxu0 0.0
    %1169 = vmatpush1.msra.mxu0 0.0
    %1170 = vmatprep.subr.mxu0 0.0
    %1171 = vmatpush1.msra.mxu0 0.0
    %1172 = vmatprep.subr.mxu0 0.0
    %1173 = vmatpush1.msra.mxu0 0.0
    %1174 = vmatprep.subr.mxu0 0.0
    %1175 = vmatpush1.msra.mxu0 0.0
    %1176 = vmatprep.subr.mxu0 0.0
    %1177 = vmatpush1.msra.mxu0 0.0
    %1178 = vmatprep.subr.mxu0 0.0
    %1179 = vmatpush1.msra.mxu0 0.0
    %1180 = vmatprep.subr.mxu0 0.0
    %1181 = vmatpush1.msra.mxu0 0.0
    %1182 = vmatprep.subr.mxu0 0.0
    %1183 = vmatpush1.msra.mxu0 0.0
    %1184 = vmatprep.subr.mxu0 0.0
    %1185 = vmatpush1.msra.mxu0 0.0
    %1186 = vmatprep.subr.mxu0 0.0
    %1187 = vmatpush1.msra.mxu0 0.0
    %1188 = vmatprep.subr.mxu0 0.0
    %1189 = vmatpush1.msra.mxu0 0.0
    %1190 = vmatprep.subr.mxu0 0.0
    %1191 = vmatpush1.msra.mxu0 0.0
    %1192 = vmatprep.subr.mxu0 0.0
    %1193 = vmatpush1.msra.mxu0 0.0
    %1194 = vmatprep.subr.mxu0 0.0
    %1195 = vmatpush1.msra.mxu0 0.0
    %1196 = vmatprep.subr.mxu0 0.0
    %1197 = vmatpush1.msra.mxu0 0.0
    %1198 = vmatprep.subr.mxu0 0.0
    %1199 = vmatpush1.msra.mxu0 0.0
    %1200 = vmatprep.subr.mxu0 0.0
    %1201 = vmatpush1.msra.mxu0 0.0
    %1202 = vmatprep.subr.mxu0 0.0
    %1203 = vmatpush1.msra.mxu0 0.0
    %1204 = vmatprep.subr.mxu0 0.0
    %1205 = vmatpush1.msra.mxu0 0.0
    %1206 = vmatprep.subr.mxu0 0.0
    %1207 = vmatpush1.msra.mxu0 0.0
    %1208 = vmatprep.subr.mxu0 0.0
    %1209 = vmatpush1.msra.mxu0 0.0
    %1210 = vmatprep.subr.mxu0 0.0
    %1211 = vmatpush1.msra.mxu0 0.0
    %1212 = vmatprep.subr.mxu0 0.0
    %1213 = vmatpush1.msra.mxu0 0.0
    %1214 = vmatprep.subr.mxu0 0.0
    %1215 = vmatpush1.msra.mxu0 0.0
    %1216 = vmatprep.subr.mxu0 0.0
    %1217 = vmatpush1.msra.mxu0 0.0
    %1218 = vmatprep.subr.mxu0 0.0
    %1219 = vmatpush1.msra.mxu0 0.0
    %1220 = vmatprep.subr.mxu0 0.0
    %1221 = vmatpush1.msra.mxu0 0.0
    %1222 = vmatprep.mubr.f32.mxu0 0.0
    %1223 = vmatmul.mubr.f32.gmra.mrb[0].mxu0 %v398
    %v1224 = vpop.f32.mrb[0].mxu0
    %v1225 = vadd.f32 %v1156, %v1224
    %v1226 = vpop.f32.mrb[0].mxu0
    %1227 = vdwg.mxu0
    %1228 = vst.msk [vmem:[#allocation2] sm:$0x3] %vm257, %v1225
    %1229 = vmatprep.subr.mxu0 0.0
    %1230 = vmatpush1.msra.mxu0 %v1142
    %1231 = vmatprep.subr.mxu0 0.0
    %1232 = vmatpush1.msra.mxu0 %v1143
    %1233 = vmatprep.subr.mxu0 0.0
    %1234 = vmatpush1.msra.mxu0 %v1144
    %1235 = vmatprep.subr.mxu0 0.0
    %1236 = vmatpush1.msra.mxu0 %v1145
    %1237 = vmatprep.subr.mxu0 0.0
    %1238 = vmatpush1.msra.mxu0 0.0
    %1239 = vmatprep.subr.mxu0 0.0
    %1240 = vmatpush1.msra.mxu0 0.0
    %1241 = vmatprep.subr.mxu0 0.0
    %1242 = vmatpush1.msra.mxu0 0.0
    %1243 = vmatprep.subr.mxu0 0.0
    %1244 = vmatpush1.msra.mxu0 0.0
    %1245 = vmatprep.subr.mxu0 0.0
    %1246 = vmatpush1.msra.mxu0 0.0
    %1247 = vmatprep.subr.mxu0 0.0
    %1248 = vmatpush1.msra.mxu0 0.0
    %1249 = vmatprep.subr.mxu0 0.0
    %1250 = vmatpush1.msra.mxu0 0.0
    %1251 = vmatprep.subr.mxu0 0.0
    %1252 = vmatpush1.msra.mxu0 0.0
    %1253 = vmatprep.subr.mxu0 0.0
    %1254 = vmatpush1.msra.mxu0 0.0
    %1255 = vmatprep.subr.mxu0 0.0
    %1256 = vmatpush1.msra.mxu0 0.0
    %1257 = vmatprep.subr.mxu0 0.0
    %1258 = vmatpush1.msra.mxu0 0.0
    %1259 = vmatprep.subr.mxu0 0.0
    %1260 = vmatpush1.msra.mxu0 0.0
    %1261 = vmatprep.subr.mxu0 0.0
    %1262 = vmatpush1.msra.mxu0 0.0
    %1263 = vmatprep.subr.mxu0 0.0
    %1264 = vmatpush1.msra.mxu0 0.0
    %1265 = vmatprep.subr.mxu0 0.0
    %1266 = vmatpush1.msra.mxu0 0.0
    %1267 = vmatprep.subr.mxu0 0.0
    %1268 = vmatpush1.msra.mxu0 0.0
    %1269 = vmatprep.subr.mxu0 0.0
    %1270 = vmatpush1.msra.mxu0 0.0
    %1271 = vmatprep.subr.mxu0 0.0
    %1272 = vmatpush1.msra.mxu0 0.0
    %1273 = vmatprep.subr.mxu0 0.0
    %1274 = vmatpush1.msra.mxu0 0.0
    %1275 = vmatprep.subr.mxu0 0.0
    %1276 = vmatpush1.msra.mxu0 0.0
    %1277 = vmatprep.subr.mxu0 0.0
    %1278 = vmatpush1.msra.mxu0 0.0
    %1279 = vmatprep.subr.mxu0 0.0
    %1280 = vmatpush1.msra.mxu0 0.0
    %1281 = vmatprep.subr.mxu0 0.0
    %1282 = vmatpush1.msra.mxu0 0.0
    %1283 = vmatprep.subr.mxu0 0.0
    %1284 = vmatpush1.msra.mxu0 0.0
    %1285 = vmatprep.subr.mxu0 0.0
    %1286 = vmatpush1.msra.mxu0 0.0
    %1287 = vmatprep.subr.mxu0 0.0
    %1288 = vmatpush1.msra.mxu0 0.0
    %1289 = vmatprep.subr.mxu0 0.0
    %1290 = vmatpush1.msra.mxu0 0.0
    %1291 = vmatprep.subr.mxu0 0.0
    %1292 = vmatpush1.msra.mxu0 0.0
    %1293 = vmatprep.mubr.f32.mxu0 0.0
    %1294 = vmatmul.mubr.f32.gmra.mrb[0].mxu0 %v504
    %v1295 = vpop.f32.mrb[0].mxu0
    %v1296 = vadd.f32 %v1156, %v1295
    %v1297 = vpop.f32.mrb[0].mxu0
    %1298 = vdwg.mxu0
    %1299 = vst.msk [vmem:[%s259] sm:$0x3] %vm257, %v1296
    %1300 = vmatprep.subr.mxu0 0.0
    %1301 = vmatpush1.msra.mxu0 %v1142
    %1302 = vmatprep.subr.mxu0 0.0
    %1303 = vmatpush1.msra.mxu0 %v1143
    %1304 = vmatprep.subr.mxu0 0.0
    %1305 = vmatpush1.msra.mxu0 %v1144
    %1306 = vmatprep.subr.mxu0 0.0
    %1307 = vmatpush1.msra.mxu0 %v1145
    %1308 = vmatprep.subr.mxu0 0.0
    %1309 = vmatpush1.msra.mxu0 0.0
    %1310 = vmatprep.subr.mxu0 0.0
    %1311 = vmatpush1.msra.mxu0 0.0
    %1312 = vmatprep.subr.mxu0 0.0
    %1313 = vmatpush1.msra.mxu0 0.0
    %1314 = vmatprep.subr.mxu0 0.0
    %1315 = vmatpush1.msra.mxu0 0.0
    %1316 = vmatprep.subr.mxu0 0.0
    %1317 = vmatpush1.msra.mxu0 0.0
    %1318 = vmatprep.subr.mxu0 0.0
    %1319 = vmatpush1.msra.mxu0 0.0
    %1320 = vmatprep.subr.mxu0 0.0
    %1321 = vmatpush1.msra.mxu0 0.0
    %1322 = vmatprep.subr.mxu0 0.0
    %1323 = vmatpush1.msra.mxu0 0.0
    %1324 = vmatprep.subr.mxu0 0.0
    %1325 = vmatpush1.msra.mxu0 0.0
    %1326 = vmatprep.subr.mxu0 0.0
    %1327 = vmatpush1.msra.mxu0 0.0
    %1328 = vmatprep.subr.mxu0 0.0
    %1329 = vmatpush1.msra.mxu0 0.0
    %1330 = vmatprep.subr.mxu0 0.0
    %1331 = vmatpush1.msra.mxu0 0.0
    %1332 = vmatprep.subr.mxu0 0.0
    %1333 = vmatpush1.msra.mxu0 0.0
    %1334 = vmatprep.subr.mxu0 0.0
    %1335 = vmatpush1.msra.mxu0 0.0
    %1336 = vmatprep.subr.mxu0 0.0
    %1337 = vmatpush1.msra.mxu0 0.0
    %1338 = vmatprep.subr.mxu0 0.0
    %1339 = vmatpush1.msra.mxu0 0.0
    %1340 = vmatprep.subr.mxu0 0.0
    %1341 = vmatpush1.msra.mxu0 0.0
    %1342 = vmatprep.subr.mxu0 0.0
    %1343 = vmatpush1.msra.mxu0 0.0
    %1344 = vmatprep.subr.mxu0 0.0
    %1345 = vmatpush1.msra.mxu0 0.0
    %1346 = vmatprep.subr.mxu0 0.0
    %1347 = vmatpush1.msra.mxu0 0.0
    %1348 = vmatprep.subr.mxu0 0.0
    %1349 = vmatpush1.msra.mxu0 0.0
    %1350 = vmatprep.subr.mxu0 0.0
    %1351 = vmatpush1.msra.mxu0 0.0
    %1352 = vmatprep.subr.mxu0 0.0
    %1353 = vmatpush1.msra.mxu0 0.0
    %1354 = vmatprep.subr.mxu0 0.0
    %1355 = vmatpush1.msra.mxu0 0.0
    %1356 = vmatprep.subr.mxu0 0.0
    %1357 = vmatpush1.msra.mxu0 0.0
    %1358 = vmatprep.subr.mxu0 0.0
    %1359 = vmatpush1.msra.mxu0 0.0
    %1360 = vmatprep.subr.mxu0 0.0
    %1361 = vmatpush1.msra.mxu0 0.0
    %1362 = vmatprep.subr.mxu0 0.0
    %1363 = vmatpush1.msra.mxu0 0.0
    %1364 = vmatprep.mubr.f32.mxu0 0.0
    %1365 = vmatmul.mubr.f32.gmra.mrb[0].mxu0 %v610
    %v1366 = vpop.f32.mrb[0].mxu0
    %v1367 = vadd.f32 %v1156, %v1366
    %v1368 = vpop.f32.mrb[0].mxu0
    %1369 = vdwg.mxu0
    %1370 = vst.msk [vmem:[%s262] sm:$0x3] %vm257, %v1367
    %1371 = vmatprep.subr.mxu0 0.0
    %1372 = vmatpush1.msra.mxu0 %v1142
    %1373 = vmatprep.subr.mxu0 0.0
    %1374 = vmatpush1.msra.mxu0 %v1143
    %1375 = vmatprep.subr.mxu0 0.0
    %1376 = vmatpush1.msra.mxu0 %v1144
    %1377 = vmatprep.subr.mxu0 0.0
    %1378 = vmatpush1.msra.mxu0 %v1145
    %1379 = vmatprep.subr.mxu0 0.0
    %1380 = vmatpush1.msra.mxu0 0.0
    %1381 = vmatprep.subr.mxu0 0.0
    %1382 = vmatpush1.msra.mxu0 0.0
    %1383 = vmatprep.subr.mxu0 0.0
    %1384 = vmatpush1.msra.mxu0 0.0
    %1385 = vmatprep.subr.mxu0 0.0
    %1386 = vmatpush1.msra.mxu0 0.0
    %1387 = vmatprep.subr.mxu0 0.0
    %1388 = vmatpush1.msra.mxu0 0.0
    %1389 = vmatprep.subr.mxu0 0.0
    %1390 = vmatpush1.msra.mxu0 0.0
    %1391 = vmatprep.subr.mxu0 0.0
    %1392 = vmatpush1.msra.mxu0 0.0
    %1393 = vmatprep.subr.mxu0 0.0
    %1394 = vmatpush1.msra.mxu0 0.0
    %1395 = vmatprep.subr.mxu0 0.0
    %1396 = vmatpush1.msra.mxu0 0.0
    %1397 = vmatprep.subr.mxu0 0.0
    %1398 = vmatpush1.msra.mxu0 0.0
    %1399 = vmatprep.subr.mxu0 0.0
    %1400 = vmatpush1.msra.mxu0 0.0
    %1401 = vmatprep.subr.mxu0 0.0
    %1402 = vmatpush1.msra.mxu0 0.0
    %1403 = vmatprep.subr.mxu0 0.0
    %1404 = vmatpush1.msra.mxu0 0.0
    %1405 = vmatprep.subr.mxu0 0.0
    %1406 = vmatpush1.msra.mxu0 0.0
    %1407 = vmatprep.subr.mxu0 0.0
    %1408 = vmatpush1.msra.mxu0 0.0
    %1409 = vmatprep.subr.mxu0 0.0
    %1410 = vmatpush1.msra.mxu0 0.0
    %1411 = vmatprep.subr.mxu0 0.0
    %1412 = vmatpush1.msra.mxu0 0.0
    %1413 = vmatprep.subr.mxu0 0.0
    %1414 = vmatpush1.msra.mxu0 0.0
    %1415 = vmatprep.subr.mxu0 0.0
    %1416 = vmatpush1.msra.mxu0 0.0
    %1417 = vmatprep.subr.mxu0 0.0
    %1418 = vmatpush1.msra.mxu0 0.0
    %1419 = vmatprep.subr.mxu0 0.0
    %1420 = vmatpush1.msra.mxu0 0.0
    %1421 = vmatprep.subr.mxu0 0.0
    %1422 = vmatpush1.msra.mxu0 0.0
    %1423 = vmatprep.subr.mxu0 0.0
    %1424 = vmatpush1.msra.mxu0 0.0
    %1425 = vmatprep.subr.mxu0 0.0
    %1426 = vmatpush1.msra.mxu0 0.0
    %1427 = vmatprep.subr.mxu0 0.0
    %1428 = vmatpush1.msra.mxu0 0.0
    %1429 = vmatprep.subr.mxu0 0.0
    %1430 = vmatpush1.msra.mxu0 0.0
    %1431 = vmatprep.subr.mxu0 0.0
    %1432 = vmatpush1.msra.mxu0 0.0
    %1433 = vmatprep.subr.mxu0 0.0
    %1434 = vmatpush1.msra.mxu0 0.0
    %1435 = vmatprep.mubr.f32.mxu0 0.0
    %1436 = vmatmul.mubr.f32.gmra.mrb[0].mxu0 %v716
    %v1437 = vpop.f32.mrb[0].mxu0
    %v1438 = vadd.f32 %v1156, %v1437
    %v1439 = vpop.f32.mrb[0].mxu0
    %1440 = vdwg.mxu0
    %1441 = vst.msk [vmem:[%s265] sm:$0x3] %vm257, %v1438
    %1442 = vmatprep.subr.mxu0 0.0
    %1443 = vmatpush1.msra.mxu0 %v1142
    %1444 = vmatprep.subr.mxu0 0.0
    %1445 = vmatpush1.msra.mxu0 %v1143
    %1446 = vmatprep.subr.mxu0 0.0
    %1447 = vmatpush1.msra.mxu0 %v1144
    %1448 = vmatprep.subr.mxu0 0.0
    %1449 = vmatpush1.msra.mxu0 %v1145
    %1450 = vmatprep.subr.mxu0 0.0
    %1451 = vmatpush1.msra.mxu0 0.0
    %1452 = vmatprep.subr.mxu0 0.0
    %1453 = vmatpush1.msra.mxu0 0.0
    %1454 = vmatprep.subr.mxu0 0.0
    %1455 = vmatpush1.msra.mxu0 0.0
    %1456 = vmatprep.subr.mxu0 0.0
    %1457 = vmatpush1.msra.mxu0 0.0
    %1458 = vmatprep.subr.mxu0 0.0
    %1459 = vmatpush1.msra.mxu0 0.0
    %1460 = vmatprep.subr.mxu0 0.0
    %1461 = vmatpush1.msra.mxu0 0.0
    %1462 = vmatprep.subr.mxu0 0.0
    %1463 = vmatpush1.msra.mxu0 0.0
    %1464 = vmatprep.subr.mxu0 0.0
    %1465 = vmatpush1.msra.mxu0 0.0
    %1466 = vmatprep.subr.mxu0 0.0
    %1467 = vmatpush1.msra.mxu0 0.0
    %1468 = vmatprep.subr.mxu0 0.0
    %1469 = vmatpush1.msra.mxu0 0.0
    %1470 = vmatprep.subr.mxu0 0.0
    %1471 = vmatpush1.msra.mxu0 0.0
    %1472 = vmatprep.subr.mxu0 0.0
    %1473 = vmatpush1.msra.mxu0 0.0
    %1474 = vmatprep.subr.mxu0 0.0
    %1475 = vmatpush1.msra.mxu0 0.0
    %1476 = vmatprep.subr.mxu0 0.0
    %1477 = vmatpush1.msra.mxu0 0.0
    %1478 = vmatprep.subr.mxu0 0.0
    %1479 = vmatpush1.msra.mxu0 0.0
    %1480 = vmatprep.subr.mxu0 0.0
    %1481 = vmatpush1.msra.mxu0 0.0
    %1482 = vmatprep.subr.mxu0 0.0
    %1483 = vmatpush1.msra.mxu0 0.0
    %1484 = vmatprep.subr.mxu0 0.0
    %1485 = vmatpush1.msra.mxu0 0.0
    %1486 = vmatprep.subr.mxu0 0.0
    %1487 = vmatpush1.msra.mxu0 0.0
    %1488 = vmatprep.subr.mxu0 0.0
    %1489 = vmatpush1.msra.mxu0 0.0
    %1490 = vmatprep.subr.mxu0 0.0
    %1491 = vmatpush1.msra.mxu0 0.0
    %1492 = vmatprep.subr.mxu0 0.0
    %1493 = vmatpush1.msra.mxu0 0.0
    %1494 = vmatprep.subr.mxu0 0.0
    %1495 = vmatpush1.msra.mxu0 0.0
    %1496 = vmatprep.subr.mxu0 0.0
    %1497 = vmatpush1.msra.mxu0 0.0
    %1498 = vmatprep.subr.mxu0 0.0
    %1499 = vmatpush1.msra.mxu0 0.0
    %1500 = vmatprep.subr.mxu0 0.0
    %1501 = vmatpush1.msra.mxu0 0.0
    %1502 = vmatprep.subr.mxu0 0.0
    %1503 = vmatpush1.msra.mxu0 0.0
    %1504 = vmatprep.subr.mxu0 0.0
    %1505 = vmatpush1.msra.mxu0 0.0
    %1506 = vmatprep.mubr.f32.mxu0 0.0
    %1507 = vmatmul.mubr.f32.gmra.mrb[0].mxu0 %v822
    %v1508 = vpop.f32.mrb[0].mxu0
    %v1509 = vadd.f32 %v1156, %v1508
    %v1510 = vpop.f32.mrb[0].mxu0
    %1511 = vdwg.mxu0
    %1512 = vst.msk [vmem:[%s268] sm:$0x3] %vm257, %v1509
    %1513 = vmatprep.subr.mxu0 0.0
    %1514 = vmatpush1.msra.mxu0 %v1142
    %1515 = vmatprep.subr.mxu0 0.0
    %1516 = vmatpush1.msra.mxu0 %v1143
    %1517 = vmatprep.subr.mxu0 0.0
    %1518 = vmatpush1.msra.mxu0 %v1144
    %1519 = vmatprep.subr.mxu0 0.0
    %1520 = vmatpush1.msra.mxu0 %v1145
    %1521 = vmatprep.subr.mxu0 0.0
    %1522 = vmatpush1.msra.mxu0 0.0
    %1523 = vmatprep.subr.mxu0 0.0
    %1524 = vmatpush1.msra.mxu0 0.0
    %1525 = vmatprep.subr.mxu0 0.0
    %1526 = vmatpush1.msra.mxu0 0.0
    %1527 = vmatprep.subr.mxu0 0.0
    %1528 = vmatpush1.msra.mxu0 0.0
    %1529 = vmatprep.subr.mxu0 0.0
    %1530 = vmatpush1.msra.mxu0 0.0
    %1531 = vmatprep.subr.mxu0 0.0
    %1532 = vmatpush1.msra.mxu0 0.0
    %1533 = vmatprep.subr.mxu0 0.0
    %1534 = vmatpush1.msra.mxu0 0.0
    %1535 = vmatprep.subr.mxu0 0.0
    %1536 = vmatpush1.msra.mxu0 0.0
    %1537 = vmatprep.subr.mxu0 0.0
    %1538 = vmatpush1.msra.mxu0 0.0
    %1539 = vmatprep.subr.mxu0 0.0
    %1540 = vmatpush1.msra.mxu0 0.0
    %1541 = vmatprep.subr.mxu0 0.0
    %1542 = vmatpush1.msra.mxu0 0.0
    %1543 = vmatprep.subr.mxu0 0.0
    %1544 = vmatpush1.msra.mxu0 0.0
    %1545 = vmatprep.subr.mxu0 0.0
    %1546 = vmatpush1.msra.mxu0 0.0
    %1547 = vmatprep.subr.mxu0 0.0
    %1548 = vmatpush1.msra.mxu0 0.0
    %1549 = vmatprep.subr.mxu0 0.0
    %1550 = vmatpush1.msra.mxu0 0.0
    %1551 = vmatprep.subr.mxu0 0.0
    %1552 = vmatpush1.msra.mxu0 0.0
    %1553 = vmatprep.subr.mxu0 0.0
    %1554 = vmatpush1.msra.mxu0 0.0
    %1555 = vmatprep.subr.mxu0 0.0
    %1556 = vmatpush1.msra.mxu0 0.0
    %1557 = vmatprep.subr.mxu0 0.0
    %1558 = vmatpush1.msra.mxu0 0.0
    %1559 = vmatprep.subr.mxu0 0.0
    %1560 = vmatpush1.msra.mxu0 0.0
    %1561 = vmatprep.subr.mxu0 0.0
    %1562 = vmatpush1.msra.mxu0 0.0
    %1563 = vmatprep.subr.mxu0 0.0
    %1564 = vmatpush1.msra.mxu0 0.0
    %1565 = vmatprep.subr.mxu0 0.0
    %1566 = vmatpush1.msra.mxu0 0.0
    %1567 = vmatprep.subr.mxu0 0.0
    %1568 = vmatpush1.msra.mxu0 0.0
    %1569 = vmatprep.subr.mxu0 0.0
    %1570 = vmatpush1.msra.mxu0 0.0
    %1571 = vmatprep.subr.mxu0 0.0
    %1572 = vmatpush1.msra.mxu0 0.0
    %1573 = vmatprep.subr.mxu0 0.0
    %1574 = vmatpush1.msra.mxu0 0.0
    %1575 = vmatprep.subr.mxu0 0.0
    %1576 = vmatpush1.msra.mxu0 0.0
    %1577 = vmatprep.mubr.f32.mxu0 0.0
    %1578 = vmatmul.mubr.f32.gmra.mrb[0].mxu0 %v928
    %v1579 = vpop.f32.mrb[0].mxu0
    %v1580 = vadd.f32 %v1156, %v1579
    %v1581 = vpop.f32.mrb[0].mxu0
    %1582 = vdwg.mxu0
    %1583 = vst.msk [vmem:[%s270] sm:$0x3] %vm257, %v1580
    %1584 = vmatprep.subr.mxu0 0.0
    %1585 = vmatpush1.msra.mxu0 %v1142
    %1586 = vmatprep.subr.mxu0 0.0
    %1587 = vmatpush1.msra.mxu0 %v1143
    %1588 = vmatprep.subr.mxu0 0.0
    %1589 = vmatpush1.msra.mxu0 %v1144
    %1590 = vmatprep.subr.mxu0 0.0
    %1591 = vmatpush1.msra.mxu0 %v1145
    %1592 = vmatprep.subr.mxu0 0.0
    %1593 = vmatpush1.msra.mxu0 0.0
    %1594 = vmatprep.subr.mxu0 0.0
    %1595 = vmatpush1.msra.mxu0 0.0
    %1596 = vmatprep.subr.mxu0 0.0
    %1597 = vmatpush1.msra.mxu0 0.0
    %1598 = vmatprep.subr.mxu0 0.0
    %1599 = vmatpush1.msra.mxu0 0.0
    %1600 = vmatprep.subr.mxu0 0.0
    %1601 = vmatpush1.msra.mxu0 0.0
    %1602 = vmatprep.subr.mxu0 0.0
    %1603 = vmatpush1.msra.mxu0 0.0
    %1604 = vmatprep.subr.mxu0 0.0
    %1605 = vmatpush1.msra.mxu0 0.0
    %1606 = vmatprep.subr.mxu0 0.0
    %1607 = vmatpush1.msra.mxu0 0.0
    %1608 = vmatprep.subr.mxu0 0.0
    %1609 = vmatpush1.msra.mxu0 0.0
    %1610 = vmatprep.subr.mxu0 0.0
    %1611 = vmatpush1.msra.mxu0 0.0
    %1612 = vmatprep.subr.mxu0 0.0
    %1613 = vmatpush1.msra.mxu0 0.0
    %1614 = vmatprep.subr.mxu0 0.0
    %1615 = vmatpush1.msra.mxu0 0.0
    %1616 = vmatprep.subr.mxu0 0.0
    %1617 = vmatpush1.msra.mxu0 0.0
    %1618 = vmatprep.subr.mxu0 0.0
    %1619 = vmatpush1.msra.mxu0 0.0
    %1620 = vmatprep.subr.mxu0 0.0
    %1621 = vmatpush1.msra.mxu0 0.0
    %1622 = vmatprep.subr.mxu0 0.0
    %1623 = vmatpush1.msra.mxu0 0.0
    %1624 = vmatprep.subr.mxu0 0.0
    %1625 = vmatpush1.msra.mxu0 0.0
    %1626 = vmatprep.subr.mxu0 0.0
    %1627 = vmatpush1.msra.mxu0 0.0
    %1628 = vmatprep.subr.mxu0 0.0
    %1629 = vmatpush1.msra.mxu0 0.0
    %1630 = vmatprep.subr.mxu0 0.0
    %1631 = vmatpush1.msra.mxu0 0.0
    %1632 = vmatprep.subr.mxu0 0.0
    %1633 = vmatpush1.msra.mxu0 0.0
    %1634 = vmatprep.subr.mxu0 0.0
    %1635 = vmatpush1.msra.mxu0 0.0
    %1636 = vmatprep.subr.mxu0 0.0
    %1637 = vmatpush1.msra.mxu0 0.0
    %1638 = vmatprep.subr.mxu0 0.0
    %1639 = vmatpush1.msra.mxu0 0.0
    %1640 = vmatprep.subr.mxu0 0.0
    %1641 = vmatpush1.msra.mxu0 0.0
    %1642 = vmatprep.subr.mxu0 0.0
    %1643 = vmatpush1.msra.mxu0 0.0
    %1644 = vmatprep.subr.mxu0 0.0
    %1645 = vmatpush1.msra.mxu0 0.0
    %1646 = vmatprep.subr.mxu0 0.0
    %1647 = vmatpush1.msra.mxu0 0.0
    %1648 = vmatprep.mubr.f32.mxu0 0.0
    %1649 = vmatmul.mubr.f32.gmra.mrb[0].mxu0 %v1034
    %v1650 = vpop.f32.mrb[0].mxu0
    %v1651 = vadd.f32 %v1156, %v1650
    %v1652 = vpop.f32.mrb[0].mxu0
    %1653 = vdwg.mxu0
    %1654 = vst.msk [vmem:[%s272] sm:$0x3] %vm257, %v1651
    %v1655 = vsel %vm278, %v1138, 0
    %1657 = vmatprep.subr.mxu0 0.0
    %1658 = vmatpush1.msra.mxu0 %v1142
    %1659 = vmatprep.subr.mxu0 0.0
    %1660 = vmatpush1.msra.mxu0 %v1143
    %1661 = vmatprep.subr.mxu0 0.0
    %1662 = vmatpush1.msra.mxu0 %v1144
    %1663 = vmatprep.subr.mxu0 0.0
    %1664 = vmatpush1.msra.mxu0 %v1145
    %1665 = vmatprep.subr.mxu0 0.0
    %1666 = vmatpush1.msra.mxu0 0.0
    %1667 = vmatprep.subr.mxu0 0.0
    %1668 = vmatpush1.msra.mxu0 0.0
    %1669 = vmatprep.subr.mxu0 0.0
    %1670 = vmatpush1.msra.mxu0 0.0
    %1671 = vmatprep.subr.mxu0 0.0
    %1672 = vmatpush1.msra.mxu0 0.0
    %1673 = vmatprep.subr.mxu0 0.0
    %1674 = vmatpush1.msra.mxu0 0.0
    %1675 = vmatprep.subr.mxu0 0.0
    %1676 = vmatpush1.msra.mxu0 0.0
    %1677 = vmatprep.subr.mxu0 0.0
    %1678 = vmatpush1.msra.mxu0 0.0
    %1679 = vmatprep.subr.mxu0 0.0
    %1680 = vmatpush1.msra.mxu0 0.0
    %1681 = vmatprep.subr.mxu0 0.0
    %1682 = vmatpush1.msra.mxu0 0.0
    %1683 = vmatprep.subr.mxu0 0.0
    %1684 = vmatpush1.msra.mxu0 0.0
    %1685 = vmatprep.subr.mxu0 0.0
    %1686 = vmatpush1.msra.mxu0 0.0
    %1687 = vmatprep.subr.mxu0 0.0
    %1688 = vmatpush1.msra.mxu0 0.0
    %1689 = vmatprep.subr.mxu0 0.0
    %1690 = vmatpush1.msra.mxu0 0.0
    %1691 = vmatprep.subr.mxu0 0.0
    %1692 = vmatpush1.msra.mxu0 0.0
    %1693 = vmatprep.subr.mxu0 0.0
    %1694 = vmatpush1.msra.mxu0 0.0
    %1695 = vmatprep.subr.mxu0 0.0
    %1696 = vmatpush1.msra.mxu0 0.0
    %1697 = vmatprep.subr.mxu0 0.0
    %1698 = vmatpush1.msra.mxu0 0.0
    %1699 = vmatprep.subr.mxu0 0.0
    %1700 = vmatpush1.msra.mxu0 0.0
    %1701 = vmatprep.subr.mxu0 0.0
    %1702 = vmatpush1.msra.mxu0 0.0
    %1703 = vmatprep.subr.mxu0 0.0
    %1704 = vmatpush1.msra.mxu0 0.0
    %1705 = vmatprep.subr.mxu0 0.0
    %1706 = vmatpush1.msra.mxu0 0.0
    %1707 = vmatprep.subr.mxu0 0.0
    %1708 = vmatpush1.msra.mxu0 0.0
    %1709 = vmatprep.subr.mxu0 0.0
    %1710 = vmatpush1.msra.mxu0 0.0
    %1711 = vmatprep.subr.mxu0 0.0
    %1712 = vmatpush1.msra.mxu0 0.0
    %1713 = vmatprep.subr.mxu0 0.0
    %1714 = vmatpush1.msra.mxu0 0.0
    %1715 = vmatprep.subr.mxu0 0.0
    %1716 = vmatpush1.msra.mxu0 0.0
    %1717 = vmatprep.subr.mxu0 0.0
    %1718 = vmatpush1.msra.mxu0 0.0
    %1719 = vmatprep.subr.mxu0 0.0
    %1720 = vmatpush1.msra.mxu0 0.0
    %1721 = vmatprep.mubr.f32.mxu0 0.0
    %1722 = vmatmul.mubr.f32.gmra.mrb[0].mxu0 %v1655
    %v1723 = vpop.f32.mrb[0].mxu0
    %v1724 = vadd.f32 %v1156, %v1723
    %v1725 = vpop.f32.mrb[0].mxu0
    %1726 = vdwg.mxu0
    %1727 = vst.msk [vmem:[%s274] sm:$0x3] %vm257, %v1724
    %s1728 = scalar_lea.vmem [#allocation17], 2
    %v1729 = vld [vmem:[%s1728] sm:$0x3]
    %v1730 = vld [vmem:[#allocation2] sm:$0x3]
    %v1732 = vsel %vm278, %v1729, 0
    %1734 = vmatprep.subr.mxu0 0.0
    %1735 = vmatpush1.msra.mxu0 %v1146
    %1736 = vmatprep.subr.mxu0 0.0
    %1737 = vmatpush1.msra.mxu0 %v1147
    %1738 = vmatprep.subr.mxu0 0.0
    %1739 = vmatpush1.msra.mxu0 %v1148
    %1740 = vmatprep.subr.mxu0 0.0
    %1741 = vmatpush1.msra.mxu0 %v1149
    %1742 = vmatprep.subr.mxu0 0.0
    %1743 = vmatpush1.msra.mxu0 0.0
    %1744 = vmatprep.subr.mxu0 0.0
    %1745 = vmatpush1.msra.mxu0 0.0
    %1746 = vmatprep.subr.mxu0 0.0
    %1747 = vmatpush1.msra.mxu0 0.0
    %1748 = vmatprep.subr.mxu0 0.0
    %1749 = vmatpush1.msra.mxu0 0.0
    %1750 = vmatprep.subr.mxu0 0.0
    %1751 = vmatpush1.msra.mxu0 0.0
    %1752 = vmatprep.subr.mxu0 0.0
    %1753 = vmatpush1.msra.mxu0 0.0
    %1754 = vmatprep.subr.mxu0 0.0
    %1755 = vmatpush1.msra.mxu0 0.0
    %1756 = vmatprep.subr.mxu0 0.0
    %1757 = vmatpush1.msra.mxu0 0.0
    %1758 = vmatprep.subr.mxu0 0.0
    %1759 = vmatpush1.msra.mxu0 0.0
    %1760 = vmatprep.subr.mxu0 0.0
    %1761 = vmatpush1.msra.mxu0 0.0
    %1762 = vmatprep.subr.mxu0 0.0
    %1763 = vmatpush1.msra.mxu0 0.0
    %1764 = vmatprep.subr.mxu0 0.0
    %1765 = vmatpush1.msra.mxu0 0.0
    %1766 = vmatprep.subr.mxu0 0.0
    %1767 = vmatpush1.msra.mxu0 0.0
    %1768 = vmatprep.subr.mxu0 0.0
    %1769 = vmatpush1.msra.mxu0 0.0
    %1770 = vmatprep.subr.mxu0 0.0
    %1771 = vmatpush1.msra.mxu0 0.0
    %1772 = vmatprep.subr.mxu0 0.0
    %1773 = vmatpush1.msra.mxu0 0.0
    %1774 = vmatprep.subr.mxu0 0.0
    %1775 = vmatpush1.msra.mxu0 0.0
    %1776 = vmatprep.subr.mxu0 0.0
    %1777 = vmatpush1.msra.mxu0 0.0
    %1778 = vmatprep.subr.mxu0 0.0
    %1779 = vmatpush1.msra.mxu0 0.0
    %1780 = vmatprep.subr.mxu0 0.0
    %1781 = vmatpush1.msra.mxu0 0.0
    %1782 = vmatprep.subr.mxu0 0.0
    %1783 = vmatpush1.msra.mxu0 0.0
    %1784 = vmatprep.subr.mxu0 0.0
    %1785 = vmatpush1.msra.mxu0 0.0
    %1786 = vmatprep.subr.mxu0 0.0
    %1787 = vmatpush1.msra.mxu0 0.0
    %1788 = vmatprep.subr.mxu0 0.0
    %1789 = vmatpush1.msra.mxu0 0.0
    %1790 = vmatprep.subr.mxu0 0.0
    %1791 = vmatpush1.msra.mxu0 0.0
    %1792 = vmatprep.subr.mxu0 0.0
    %1793 = vmatpush1.msra.mxu0 0.0
    %1794 = vmatprep.subr.mxu0 0.0
    %1795 = vmatpush1.msra.mxu0 0.0
    %1796 = vmatprep.subr.mxu0 0.0
    %1797 = vmatpush1.msra.mxu0 0.0
    %1798 = vmatprep.mubr.f32.mxu0 0.0
    %1799 = vmatmul.mubr.f32.gmra.mrb[0].mxu0 %v1732
    %v1800 = vpop.f32.mrb[0].mxu0
    %v1801 = vadd.f32 0.0, %v1800
    %v1802 = vpop.f32.mrb[0].mxu0
    %1803 = vdwg.mxu0
    %v1804 = vadd.f32 %v1730, %v1801
    %v1805 = vxor.u32 %v1804, 2147483648
    %v1806 = vmul.f32 %v1805, 1.442695
    %v1807 = vpow.pop %v1806
    %v1808 = vadd.f32 %v1807, 1.0
    %v1809 = vrcp.pop %v1808
    %v1810 = vmul.f32 1.0, %v1809
    %v1812 = vlaneseq
    %v1813 = vshrl.u32 %v1812, 7
    %v1814 = vsub.s32 0, %v1813
    %v1815 = vrot.slane %v1151, %v1814
    %1816 = vrot.lane.b32.xlu0 %v1815, 64
    %v1817 = vpop.permute.xlu0 %1816
    %v1819 = vadd.f32 %v1801, %v1817
    %1821 = vrot.lane.b32.xlu0 %v1819, 64
    %v1822 = vpop.permute.xlu0 %1821
    %v1824 = vmul.f32 %v1810, %v1822
    %1826 = vrot.lane.b32.xlu0 %v1824, 64
    %v1827 = vpop.permute.xlu0 %1826
    %v1829 = vadd.f32 %v1730, %v1827
    %v1830 = vtanh.pop %v1829
    %1832 = vrot.lane.b32.xlu0 %v1830, 64
    %v1833 = vpop.permute.xlu0 %1832
    %v1835 = vsub.f32 %v1729, %v1833
    %1837 = vrot.lane.b32.xlu0 %v1835, 32
    %v1838 = vpop.permute.xlu0 %1837
    %v1840 = vmul.f32 %v1810, %v1838
    %1842 = vrot.lane.b32.xlu0 %v1840, 32
    %v1843 = vpop.permute.xlu0 %1842
    %v1845 = vadd.f32 %v1830, %v1843
    %v1846 = vld [vmem:[%s259] sm:$0x3]
    %1848 = vrot.lane.b32.xlu0 %v1845, 64
    %v1849 = vpop.permute.xlu0 %1848
    %v1850 = vsel %vm278, %v1849, 0
    %1852 = vmatprep.subr.mxu0 0.0
    %1853 = vmatpush1.msra.mxu0 %v1146
    %1854 = vmatprep.subr.mxu0 0.0
    %1855 = vmatpush1.msra.mxu0 %v1147
    %1856 = vmatprep.subr.mxu0 0.0
    %1857 = vmatpush1.msra.mxu0 %v1148
    %1858 = vmatprep.subr.mxu0 0.0
    %1859 = vmatpush1.msra.mxu0 %v1149
    %1860 = vmatprep.subr.mxu0 0.0
    %1861 = vmatpush1.msra.mxu0 0.0
    %1862 = vmatprep.subr.mxu0 0.0
    %1863 = vmatpush1.msra.mxu0 0.0
    %1864 = vmatprep.subr.mxu0 0.0
    %1865 = vmatpush1.msra.mxu0 0.0
    %1866 = vmatprep.subr.mxu0 0.0
    %1867 = vmatpush1.msra.mxu0 0.0
    %1868 = vmatprep.subr.mxu0 0.0
    %1869 = vmatpush1.msra.mxu0 0.0
    %1870 = vmatprep.subr.mxu0 0.0
    %1871 = vmatpush1.msra.mxu0 0.0
    %1872 = vmatprep.subr.mxu0 0.0
    %1873 = vmatpush1.msra.mxu0 0.0
    %1874 = vmatprep.subr.mxu0 0.0
    %1875 = vmatpush1.msra.mxu0 0.0
    %1876 = vmatprep.subr.mxu0 0.0
    %1877 = vmatpush1.msra.mxu0 0.0
    %1878 = vmatprep.subr.mxu0 0.0
    %1879 = vmatpush1.msra.mxu0 0.0
    %1880 = vmatprep.subr.mxu0 0.0
    %1881 = vmatpush1.msra.mxu0 0.0
    %1882 = vmatprep.subr.mxu0 0.0
    %1883 = vmatpush1.msra.mxu0 0.0
    %1884 = vmatprep.subr.mxu0 0.0
    %1885 = vmatpush1.msra.mxu0 0.0
    %1886 = vmatprep.subr.mxu0 0.0
    %1887 = vmatpush1.msra.mxu0 0.0
    %1888 = vmatprep.subr.mxu0 0.0
    %1889 = vmatpush1.msra.mxu0 0.0
    %1890 = vmatprep.subr.mxu0 0.0
    %1891 = vmatpush1.msra.mxu0 0.0
    %1892 = vmatprep.subr.mxu0 0.0
    %1893 = vmatpush1.msra.mxu0 0.0
    %1894 = vmatprep.subr.mxu0 0.0
    %1895 = vmatpush1.msra.mxu0 0.0
    %1896 = vmatprep.subr.mxu0 0.0
    %1897 = vmatpush1.msra.mxu0 0.0
    %1898 = vmatprep.subr.mxu0 0.0
    %1899 = vmatpush1.msra.mxu0 0.0
    %1900 = vmatprep.subr.mxu0 0.0
    %1901 = vmatpush1.msra.mxu0 0.0
    %1902 = vmatprep.subr.mxu0 0.0
    %1903 = vmatpush1.msra.mxu0 0.0
    %1904 = vmatprep.subr.mxu0 0.0
    %1905 = vmatpush1.msra.mxu0 0.0
    %1906 = vmatprep.subr.mxu0 0.0
    %1907 = vmatpush1.msra.mxu0 0.0
    %1908 = vmatprep.subr.mxu0 0.0
    %1909 = vmatpush1.msra.mxu0 0.0
    %1910 = vmatprep.subr.mxu0 0.0
    %1911 = vmatpush1.msra.mxu0 0.0
    %1912 = vmatprep.subr.mxu0 0.0
    %1913 = vmatpush1.msra.mxu0 0.0
    %1914 = vmatprep.subr.mxu0 0.0
    %1915 = vmatpush1.msra.mxu0 0.0
    %1916 = vmatprep.mubr.f32.mxu0 0.0
    %1917 = vmatmul.mubr.f32.gmra.mrb[0].mxu0 %v1850
    %v1918 = vpop.f32.mrb[0].mxu0
    %v1919 = vadd.f32 0.0, %v1918
    %v1920 = vpop.f32.mrb[0].mxu0
    %1921 = vdwg.mxu0
    %v1922 = vadd.f32 %v1846, %v1919
    %v1923 = vxor.u32 %v1922, 2147483648
    %v1924 = vmul.f32 %v1923, 1.442695
    %v1925 = vpow.pop %v1924
    %v1926 = vadd.f32 %v1925, 1.0
    %v1927 = vrcp.pop %v1926
    %v1928 = vmul.f32 1.0, %v1927
    %v1929 = vadd.f32 %v1919, %v1817
    %1931 = vrot.lane.b32.xlu0 %v1929, 64
    %v1932 = vpop.permute.xlu0 %1931
    %v1934 = vmul.f32 %v1928, %v1932
    %1936 = vrot.lane.b32.xlu0 %v1934, 64
    %v1937 = vpop.permute.xlu0 %1936
    %v1939 = vadd.f32 %v1846, %v1937
    %v1940 = vtanh.pop %v1939
    %v1941 = vsub.f32 %v1845, %v1940
    %1943 = vrot.lane.b32.xlu0 %v1941, 96
    %v1944 = vpop.permute.xlu0 %1943
    %v1946 = vmul.f32 %v1928, %v1944
    %1948 = vrot.lane.b32.xlu0 %v1946, 32
    %v1949 = vpop.permute.xlu0 %1948
    %v1951 = vadd.f32 %v1940, %v1949
    %v1952 = vld [vmem:[%s262] sm:$0x3]
    %1954 = vrot.lane.b32.xlu0 %v1951, 64
    %v1955 = vpop.permute.xlu0 %1954
    %v1956 = vsel %vm278, %v1955, 0
    %1958 = vmatprep.subr.mxu0 0.0
    %1959 = vmatpush1.msra.mxu0 %v1146
    %1960 = vmatprep.subr.mxu0 0.0
    %1961 = vmatpush1.msra.mxu0 %v1147
    %1962 = vmatprep.subr.mxu0 0.0
    %1963 = vmatpush1.msra.mxu0 %v1148
    %1964 = vmatprep.subr.mxu0 0.0
    %1965 = vmatpush1.msra.mxu0 %v1149
    %1966 = vmatprep.subr.mxu0 0.0
    %1967 = vmatpush1.msra.mxu0 0.0
    %1968 = vmatprep.subr.mxu0 0.0
    %1969 = vmatpush1.msra.mxu0 0.0
    %1970 = vmatprep.subr.mxu0 0.0
    %1971 = vmatpush1.msra.mxu0 0.0
    %1972 = vmatprep.subr.mxu0 0.0
    %1973 = vmatpush1.msra.mxu0 0.0
    %1974 = vmatprep.subr.mxu0 0.0
    %1975 = vmatpush1.msra.mxu0 0.0
    %1976 = vmatprep.subr.mxu0 0.0
    %1977 = vmatpush1.msra.mxu0 0.0
    %1978 = vmatprep.subr.mxu0 0.0
    %1979 = vmatpush1.msra.mxu0 0.0
    %1980 = vmatprep.subr.mxu0 0.0
    %1981 = vmatpush1.msra.mxu0 0.0
    %1982 = vmatprep.subr.mxu0 0.0
    %1983 = vmatpush1.msra.mxu0 0.0
    %1984 = vmatprep.subr.mxu0 0.0
    %1985 = vmatpush1.msra.mxu0 0.0
    %1986 = vmatprep.subr.mxu0 0.0
    %1987 = vmatpush1.msra.mxu0 0.0
    %1988 = vmatprep.subr.mxu0 0.0
    %1989 = vmatpush1.msra.mxu0 0.0
    %1990 = vmatprep.subr.mxu0 0.0
    %1991 = vmatpush1.msra.mxu0 0.0
    %1992 = vmatprep.subr.mxu0 0.0
    %1993 = vmatpush1.msra.mxu0 0.0
    %1994 = vmatprep.subr.mxu0 0.0
    %1995 = vmatpush1.msra.mxu0 0.0
    %1996 = vmatprep.subr.mxu0 0.0
    %1997 = vmatpush1.msra.mxu0 0.0
    %1998 = vmatprep.subr.mxu0 0.0
    %1999 = vmatpush1.msra.mxu0 0.0
    %2000 = vmatprep.subr.mxu0 0.0
    %2001 = vmatpush1.msra.mxu0 0.0
    %2002 = vmatprep.subr.mxu0 0.0
    %2003 = vmatpush1.msra.mxu0 0.0
    %2004 = vmatprep.subr.mxu0 0.0
    %2005 = vmatpush1.msra.mxu0 0.0
    %2006 = vmatprep.subr.mxu0 0.0
    %2007 = vmatpush1.msra.mxu0 0.0
    %2008 = vmatprep.subr.mxu0 0.0
    %2009 = vmatpush1.msra.mxu0 0.0
    %2010 = vmatprep.subr.mxu0 0.0
    %2011 = vmatpush1.msra.mxu0 0.0
    %2012 = vmatprep.subr.mxu0 0.0
    %2013 = vmatpush1.msra.mxu0 0.0
    %2014 = vmatprep.subr.mxu0 0.0
    %2015 = vmatpush1.msra.mxu0 0.0
    %2016 = vmatprep.subr.mxu0 0.0
    %2017 = vmatpush1.msra.mxu0 0.0
    %2018 = vmatprep.subr.mxu0 0.0
    %2019 = vmatpush1.msra.mxu0 0.0
    %2020 = vmatprep.subr.mxu0 0.0
    %2021 = vmatpush1.msra.mxu0 0.0
    %2022 = vmatprep.mubr.f32.mxu0 0.0
    %2023 = vmatmul.mubr.f32.gmra.mrb[0].mxu0 %v1956
    %v2024 = vpop.f32.mrb[0].mxu0
    %v2025 = vadd.f32 0.0, %v2024
    %v2026 = vpop.f32.mrb[0].mxu0
    %2027 = vdwg.mxu0
    %v2028 = vadd.f32 %v1952, %v2025
    %v2029 = vxor.u32 %v2028, 2147483648
    %v2030 = vmul.f32 %v2029, 1.442695
    %v2031 = vpow.pop %v2030
    %v2032 = vadd.f32 %v2031, 1.0
    %v2033 = vrcp.pop %v2032
    %v2034 = vmul.f32 1.0, %v2033
    %v2035 = vadd.f32 %v2025, %v1817
    %2037 = vrot.lane.b32.xlu0 %v2035, 64
    %v2038 = vpop.permute.xlu0 %2037
    %v2040 = vmul.f32 %v2034, %v2038
    %2042 = vrot.lane.b32.xlu0 %v2040, 64
    %v2043 = vpop.permute.xlu0 %2042
    %v2045 = vadd.f32 %v1952, %v2043
    %v2046 = vtanh.pop %v2045
    %v2047 = vsub.f32 %v1951, %v2046
    %2049 = vrot.lane.b32.xlu0 %v2047, 96
    %v2050 = vpop.permute.xlu0 %2049
    %v2052 = vmul.f32 %v2034, %v2050
    %2054 = vrot.lane.b32.xlu0 %v2052, 32
    %v2055 = vpop.permute.xlu0 %2054
    %v2057 = vadd.f32 %v2046, %v2055
    %v2058 = vld [vmem:[%s265] sm:$0x3]
    %2060 = vrot.lane.b32.xlu0 %v2057, 64
    %v2061 = vpop.permute.xlu0 %2060
    %v2062 = vsel %vm278, %v2061, 0
    %2064 = vmatprep.subr.mxu0 0.0
    %2065 = vmatpush1.msra.mxu0 %v1146
    %2066 = vmatprep.subr.mxu0 0.0
    %2067 = vmatpush1.msra.mxu0 %v1147
    %2068 = vmatprep.subr.mxu0 0.0
    %2069 = vmatpush1.msra.mxu0 %v1148
    %2070 = vmatprep.subr.mxu0 0.0
    %2071 = vmatpush1.msra.mxu0 %v1149
    %2072 = vmatprep.subr.mxu0 0.0
    %2073 = vmatpush1.msra.mxu0 0.0
    %2074 = vmatprep.subr.mxu0 0.0
    %2075 = vmatpush1.msra.mxu0 0.0
    %2076 = vmatprep.subr.mxu0 0.0
    %2077 = vmatpush1.msra.mxu0 0.0
    %2078 = vmatprep.subr.mxu0 0.0
    %2079 = vmatpush1.msra.mxu0 0.0
    %2080 = vmatprep.subr.mxu0 0.0
    %2081 = vmatpush1.msra.mxu0 0.0
    %2082 = vmatprep.subr.mxu0 0.0
    %2083 = vmatpush1.msra.mxu0 0.0
    %2084 = vmatprep.subr.mxu0 0.0
    %2085 = vmatpush1.msra.mxu0 0.0
    %2086 = vmatprep.subr.mxu0 0.0
    %2087 = vmatpush1.msra.mxu0 0.0
    %2088 = vmatprep.subr.mxu0 0.0
    %2089 = vmatpush1.msra.mxu0 0.0
    %2090 = vmatprep.subr.mxu0 0.0
    %2091 = vmatpush1.msra.mxu0 0.0
    %2092 = vmatprep.subr.mxu0 0.0
    %2093 = vmatpush1.msra.mxu0 0.0
    %2094 = vmatprep.subr.mxu0 0.0
    %2095 = vmatpush1.msra.mxu0 0.0
    %2096 = vmatprep.subr.mxu0 0.0
    %2097 = vmatpush1.msra.mxu0 0.0
    %2098 = vmatprep.subr.mxu0 0.0
    %2099 = vmatpush1.msra.mxu0 0.0
    %2100 = vmatprep.subr.mxu0 0.0
    %2101 = vmatpush1.msra.mxu0 0.0
    %2102 = vmatprep.subr.mxu0 0.0
    %2103 = vmatpush1.msra.mxu0 0.0
    %2104 = vmatprep.subr.mxu0 0.0
    %2105 = vmatpush1.msra.mxu0 0.0
    %2106 = vmatprep.subr.mxu0 0.0
    %2107 = vmatpush1.msra.mxu0 0.0
    %2108 = vmatprep.subr.mxu0 0.0
    %2109 = vmatpush1.msra.mxu0 0.0
    %2110 = vmatprep.subr.mxu0 0.0
    %2111 = vmatpush1.msra.mxu0 0.0
    %2112 = vmatprep.subr.mxu0 0.0
    %2113 = vmatpush1.msra.mxu0 0.0
    %2114 = vmatprep.subr.mxu0 0.0
    %2115 = vmatpush1.msra.mxu0 0.0
    %2116 = vmatprep.subr.mxu0 0.0
    %2117 = vmatpush1.msra.mxu0 0.0
    %2118 = vmatprep.subr.mxu0 0.0
    %2119 = vmatpush1.msra.mxu0 0.0
    %2120 = vmatprep.subr.mxu0 0.0
    %2121 = vmatpush1.msra.mxu0 0.0
    %2122 = vmatprep.subr.mxu0 0.0
    %2123 = vmatpush1.msra.mxu0 0.0
    %2124 = vmatprep.subr.mxu0 0.0
    %2125 = vmatpush1.msra.mxu0 0.0
    %2126 = vmatprep.subr.mxu0 0.0
    %2127 = vmatpush1.msra.mxu0 0.0
    %2128 = vmatprep.mubr.f32.mxu0 0.0
    %2129 = vmatmul.mubr.f32.gmra.mrb[0].mxu0 %v2062
    %v2130 = vpop.f32.mrb[0].mxu0
    %v2131 = vadd.f32 0.0, %v2130
    %v2132 = vpop.f32.mrb[0].mxu0
    %2133 = vdwg.mxu0
    %v2134 = vadd.f32 %v2058, %v2131
    %v2135 = vxor.u32 %v2134, 2147483648
    %v2136 = vmul.f32 %v2135, 1.442695
    %v2137 = vpow.pop %v2136
    %v2138 = vadd.f32 %v2137, 1.0
    %v2139 = vrcp.pop %v2138
    %v2140 = vmul.f32 1.0, %v2139
    %v2141 = vadd.f32 %v2131, %v1817
    %2143 = vrot.lane.b32.xlu0 %v2141, 64
    %v2144 = vpop.permute.xlu0 %2143
    %v2146 = vmul.f32 %v2140, %v2144
    %2148 = vrot.lane.b32.xlu0 %v2146, 64
    %v2149 = vpop.permute.xlu0 %2148
    %v2151 = vadd.f32 %v2058, %v2149
    %v2152 = vtanh.pop %v2151
    %v2153 = vsub.f32 %v2057, %v2152
    %2155 = vrot.lane.b32.xlu0 %v2153, 96
    %v2156 = vpop.permute.xlu0 %2155
    %v2158 = vmul.f32 %v2140, %v2156
    %2160 = vrot.lane.b32.xlu0 %v2158, 32
    %v2161 = vpop.permute.xlu0 %2160
    %v2163 = vadd.f32 %v2152, %v2161
    %v2164 = vld [vmem:[%s268] sm:$0x3]
    %2166 = vrot.lane.b32.xlu0 %v2163, 64
    %v2167 = vpop.permute.xlu0 %2166
    %v2168 = vsel %vm278, %v2167, 0
    %2170 = vmatprep.subr.mxu0 0.0
    %2171 = vmatpush1.msra.mxu0 %v1146
    %2172 = vmatprep.subr.mxu0 0.0
    %2173 = vmatpush1.msra.mxu0 %v1147
    %2174 = vmatprep.subr.mxu0 0.0
    %2175 = vmatpush1.msra.mxu0 %v1148
    %2176 = vmatprep.subr.mxu0 0.0
    %2177 = vmatpush1.msra.mxu0 %v1149
    %2178 = vmatprep.subr.mxu0 0.0
    %2179 = vmatpush1.msra.mxu0 0.0
    %2180 = vmatprep.subr.mxu0 0.0
    %2181 = vmatpush1.msra.mxu0 0.0
    %2182 = vmatprep.subr.mxu0 0.0
    %2183 = vmatpush1.msra.mxu0 0.0
    %2184 = vmatprep.subr.mxu0 0.0
    %2185 = vmatpush1.msra.mxu0 0.0
    %2186 = vmatprep.subr.mxu0 0.0
    %2187 = vmatpush1.msra.mxu0 0.0
    %2188 = vmatprep.subr.mxu0 0.0
    %2189 = vmatpush1.msra.mxu0 0.0
    %2190 = vmatprep.subr.mxu0 0.0
    %2191 = vmatpush1.msra.mxu0 0.0
    %2192 = vmatprep.subr.mxu0 0.0
    %2193 = vmatpush1.msra.mxu0 0.0
    %2194 = vmatprep.subr.mxu0 0.0
    %2195 = vmatpush1.msra.mxu0 0.0
    %2196 = vmatprep.subr.mxu0 0.0
    %2197 = vmatpush1.msra.mxu0 0.0
    %2198 = vmatprep.subr.mxu0 0.0
    %2199 = vmatpush1.msra.mxu0 0.0
    %2200 = vmatprep.subr.mxu0 0.0
    %2201 = vmatpush1.msra.mxu0 0.0
    %2202 = vmatprep.subr.mxu0 0.0
    %2203 = vmatpush1.msra.mxu0 0.0
    %2204 = vmatprep.subr.mxu0 0.0
    %2205 = vmatpush1.msra.mxu0 0.0
    %2206 = vmatprep.subr.mxu0 0.0
    %2207 = vmatpush1.msra.mxu0 0.0
    %2208 = vmatprep.subr.mxu0 0.0
    %2209 = vmatpush1.msra.mxu0 0.0
    %2210 = vmatprep.subr.mxu0 0.0
    %2211 = vmatpush1.msra.mxu0 0.0
    %2212 = vmatprep.subr.mxu0 0.0
    %2213 = vmatpush1.msra.mxu0 0.0
    %2214 = vmatprep.subr.mxu0 0.0
    %2215 = vmatpush1.msra.mxu0 0.0
    %2216 = vmatprep.subr.mxu0 0.0
    %2217 = vmatpush1.msra.mxu0 0.0
    %2218 = vmatprep.subr.mxu0 0.0
    %2219 = vmatpush1.msra.mxu0 0.0
    %2220 = vmatprep.subr.mxu0 0.0
    %2221 = vmatpush1.msra.mxu0 0.0
    %2222 = vmatprep.subr.mxu0 0.0
    %2223 = vmatpush1.msra.mxu0 0.0
    %2224 = vmatprep.subr.mxu0 0.0
    %2225 = vmatpush1.msra.mxu0 0.0
    %2226 = vmatprep.subr.mxu0 0.0
    %2227 = vmatpush1.msra.mxu0 0.0
    %2228 = vmatprep.subr.mxu0 0.0
    %2229 = vmatpush1.msra.mxu0 0.0
    %2230 = vmatprep.subr.mxu0 0.0
    %2231 = vmatpush1.msra.mxu0 0.0
    %2232 = vmatprep.subr.mxu0 0.0
    %2233 = vmatpush1.msra.mxu0 0.0
    %2234 = vmatprep.mubr.f32.mxu0 0.0
    %2235 = vmatmul.mubr.f32.gmra.mrb[0].mxu0 %v2168
    %v2236 = vpop.f32.mrb[0].mxu0
    %v2237 = vadd.f32 0.0, %v2236
    %v2238 = vpop.f32.mrb[0].mxu0
    %2239 = vdwg.mxu0
    %v2240 = vadd.f32 %v2164, %v2237
    %v2241 = vxor.u32 %v2240, 2147483648
    %v2242 = vmul.f32 %v2241, 1.442695
    %v2243 = vpow.pop %v2242
    %v2244 = vadd.f32 %v2243, 1.0
    %v2245 = vrcp.pop %v2244
    %v2246 = vmul.f32 1.0, %v2245
    %v2247 = vadd.f32 %v2237, %v1817
    %2249 = vrot.lane.b32.xlu0 %v2247, 64
    %v2250 = vpop.permute.xlu0 %2249
    %v2252 = vmul.f32 %v2246, %v2250
    %2254 = vrot.lane.b32.xlu0 %v2252, 64
    %v2255 = vpop.permute.xlu0 %2254
    %v2257 = vadd.f32 %v2164, %v2255
    %v2258 = vtanh.pop %v2257
    %v2259 = vsub.f32 %v2163, %v2258
    %2261 = vrot.lane.b32.xlu0 %v2259, 96
    %v2262 = vpop.permute.xlu0 %2261
    %v2264 = vmul.f32 %v2246, %v2262
    %2266 = vrot.lane.b32.xlu0 %v2264, 32
    %v2267 = vpop.permute.xlu0 %2266
    %v2269 = vadd.f32 %v2258, %v2267
    %v2270 = vld [vmem:[%s270] sm:$0x3]
    %2272 = vrot.lane.b32.xlu0 %v2269, 64
    %v2273 = vpop.permute.xlu0 %2272
    %v2274 = vsel %vm278, %v2273, 0
    %2276 = vmatprep.subr.mxu0 0.0
    %2277 = vmatpush1.msra.mxu0 %v1146
    %2278 = vmatprep.subr.mxu0 0.0
    %2279 = vmatpush1.msra.mxu0 %v1147
    %2280 = vmatprep.subr.mxu0 0.0
    %2281 = vmatpush1.msra.mxu0 %v1148
    %2282 = vmatprep.subr.mxu0 0.0
    %2283 = vmatpush1.msra.mxu0 %v1149
    %2284 = vmatprep.subr.mxu0 0.0
    %2285 = vmatpush1.msra.mxu0 0.0
    %2286 = vmatprep.subr.mxu0 0.0
    %2287 = vmatpush1.msra.mxu0 0.0
    %2288 = vmatprep.subr.mxu0 0.0
    %2289 = vmatpush1.msra.mxu0 0.0
    %2290 = vmatprep.subr.mxu0 0.0
    %2291 = vmatpush1.msra.mxu0 0.0
    %2292 = vmatprep.subr.mxu0 0.0
    %2293 = vmatpush1.msra.mxu0 0.0
    %2294 = vmatprep.subr.mxu0 0.0
    %2295 = vmatpush1.msra.mxu0 0.0
    %2296 = vmatprep.subr.mxu0 0.0
    %2297 = vmatpush1.msra.mxu0 0.0
    %2298 = vmatprep.subr.mxu0 0.0
    %2299 = vmatpush1.msra.mxu0 0.0
    %2300 = vmatprep.subr.mxu0 0.0
    %2301 = vmatpush1.msra.mxu0 0.0
    %2302 = vmatprep.subr.mxu0 0.0
    %2303 = vmatpush1.msra.mxu0 0.0
    %2304 = vmatprep.subr.mxu0 0.0
    %2305 = vmatpush1.msra.mxu0 0.0
    %2306 = vmatprep.subr.mxu0 0.0
    %2307 = vmatpush1.msra.mxu0 0.0
    %2308 = vmatprep.subr.mxu0 0.0
    %2309 = vmatpush1.msra.mxu0 0.0
    %2310 = vmatprep.subr.mxu0 0.0
    %2311 = vmatpush1.msra.mxu0 0.0
    %2312 = vmatprep.subr.mxu0 0.0
    %2313 = vmatpush1.msra.mxu0 0.0
    %2314 = vmatprep.subr.mxu0 0.0
    %2315 = vmatpush1.msra.mxu0 0.0
    %2316 = vmatprep.subr.mxu0 0.0
    %2317 = vmatpush1.msra.mxu0 0.0
    %2318 = vmatprep.subr.mxu0 0.0
    %2319 = vmatpush1.msra.mxu0 0.0
    %2320 = vmatprep.subr.mxu0 0.0
    %2321 = vmatpush1.msra.mxu0 0.0
    %2322 = vmatprep.subr.mxu0 0.0
    %2323 = vmatpush1.msra.mxu0 0.0
    %2324 = vmatprep.subr.mxu0 0.0
    %2325 = vmatpush1.msra.mxu0 0.0
    %2326 = vmatprep.subr.mxu0 0.0
    %2327 = vmatpush1.msra.mxu0 0.0
    %2328 = vmatprep.subr.mxu0 0.0
    %2329 = vmatpush1.msra.mxu0 0.0
    %2330 = vmatprep.subr.mxu0 0.0
    %2331 = vmatpush1.msra.mxu0 0.0
    %2332 = vmatprep.subr.mxu0 0.0
    %2333 = vmatpush1.msra.mxu0 0.0
    %2334 = vmatprep.subr.mxu0 0.0
    %2335 = vmatpush1.msra.mxu0 0.0
    %2336 = vmatprep.subr.mxu0 0.0
    %2337 = vmatpush1.msra.mxu0 0.0
    %2338 = vmatprep.subr.mxu0 0.0
    %2339 = vmatpush1.msra.mxu0 0.0
    %2340 = vmatprep.mubr.f32.mxu0 0.0
    %2341 = vmatmul.mubr.f32.gmra.mrb[0].mxu0 %v2274
    %v2342 = vpop.f32.mrb[0].mxu0
    %v2343 = vadd.f32 0.0, %v2342
    %v2344 = vpop.f32.mrb[0].mxu0
    %2345 = vdwg.mxu0
    %v2346 = vadd.f32 %v2270, %v2343
    %v2347 = vxor.u32 %v2346, 2147483648
    %v2348 = vmul.f32 %v2347, 1.442695
    %v2349 = vpow.pop %v2348
    %v2350 = vadd.f32 %v2349, 1.0
    %v2351 = vrcp.pop %v2350
    %v2352 = vmul.f32 1.0, %v2351
    %v2353 = vadd.f32 %v2343, %v1817
    %2355 = vrot.lane.b32.xlu0 %v2353, 64
    %v2356 = vpop.permute.xlu0 %2355
    %v2358 = vmul.f32 %v2352, %v2356
    %2360 = vrot.lane.b32.xlu0 %v2358, 64
    %v2361 = vpop.permute.xlu0 %2360
    %v2363 = vadd.f32 %v2270, %v2361
    %v2364 = vtanh.pop %v2363
    %v2365 = vsub.f32 %v2269, %v2364
    %2367 = vrot.lane.b32.xlu0 %v2365, 96
    %v2368 = vpop.permute.xlu0 %2367
    %v2370 = vmul.f32 %v2352, %v2368
    %2372 = vrot.lane.b32.xlu0 %v2370, 32
    %v2373 = vpop.permute.xlu0 %2372
    %v2375 = vadd.f32 %v2364, %v2373
    %v2376 = vld [vmem:[%s272] sm:$0x3]
    %2378 = vrot.lane.b32.xlu0 %v2375, 64
    %v2379 = vpop.permute.xlu0 %2378
    %v2380 = vsel %vm278, %v2379, 0
    %2382 = vmatprep.subr.mxu0 0.0
    %2383 = vmatpush1.msra.mxu0 %v1146
    %2384 = vmatprep.subr.mxu0 0.0
    %2385 = vmatpush1.msra.mxu0 %v1147
    %2386 = vmatprep.subr.mxu0 0.0
    %2387 = vmatpush1.msra.mxu0 %v1148
    %2388 = vmatprep.subr.mxu0 0.0
    %2389 = vmatpush1.msra.mxu0 %v1149
    %2390 = vmatprep.subr.mxu0 0.0
    %2391 = vmatpush1.msra.mxu0 0.0
    %2392 = vmatprep.subr.mxu0 0.0
    %2393 = vmatpush1.msra.mxu0 0.0
    %2394 = vmatprep.subr.mxu0 0.0
    %2395 = vmatpush1.msra.mxu0 0.0
    %2396 = vmatprep.subr.mxu0 0.0
    %2397 = vmatpush1.msra.mxu0 0.0
    %2398 = vmatprep.subr.mxu0 0.0
    %2399 = vmatpush1.msra.mxu0 0.0
    %2400 = vmatprep.subr.mxu0 0.0
    %2401 = vmatpush1.msra.mxu0 0.0
    %2402 = vmatprep.subr.mxu0 0.0
    %2403 = vmatpush1.msra.mxu0 0.0
    %2404 = vmatprep.subr.mxu0 0.0
    %2405 = vmatpush1.msra.mxu0 0.0
    %2406 = vmatprep.subr.mxu0 0.0
    %2407 = vmatpush1.msra.mxu0 0.0
    %2408 = vmatprep.subr.mxu0 0.0
    %2409 = vmatpush1.msra.mxu0 0.0
    %2410 = vmatprep.subr.mxu0 0.0
    %2411 = vmatpush1.msra.mxu0 0.0
    %2412 = vmatprep.subr.mxu0 0.0
    %2413 = vmatpush1.msra.mxu0 0.0
    %2414 = vmatprep.subr.mxu0 0.0
    %2415 = vmatpush1.msra.mxu0 0.0
    %2416 = vmatprep.subr.mxu0 0.0
    %2417 = vmatpush1.msra.mxu0 0.0
    %2418 = vmatprep.subr.mxu0 0.0
    %2419 = vmatpush1.msra.mxu0 0.0
    %2420 = vmatprep.subr.mxu0 0.0
    %2421 = vmatpush1.msra.mxu0 0.0
    %2422 = vmatprep.subr.mxu0 0.0
    %2423 = vmatpush1.msra.mxu0 0.0
    %2424 = vmatprep.subr.mxu0 0.0
    %2425 = vmatpush1.msra.mxu0 0.0
    %2426 = vmatprep.subr.mxu0 0.0
    %2427 = vmatpush1.msra.mxu0 0.0
    %2428 = vmatprep.subr.mxu0 0.0
    %2429 = vmatpush1.msra.mxu0 0.0
    %2430 = vmatprep.subr.mxu0 0.0
    %2431 = vmatpush1.msra.mxu0 0.0
    %2432 = vmatprep.subr.mxu0 0.0
    %2433 = vmatpush1.msra.mxu0 0.0
    %2434 = vmatprep.subr.mxu0 0.0
    %2435 = vmatpush1.msra.mxu0 0.0
    %2436 = vmatprep.subr.mxu0 0.0
    %2437 = vmatpush1.msra.mxu0 0.0
    %2438 = vmatprep.subr.mxu0 0.0
    %2439 = vmatpush1.msra.mxu0 0.0
    %2440 = vmatprep.subr.mxu0 0.0
    %2441 = vmatpush1.msra.mxu0 0.0
    %2442 = vmatprep.subr.mxu0 0.0
    %2443 = vmatpush1.msra.mxu0 0.0
    %2444 = vmatprep.subr.mxu0 0.0
    %2445 = vmatpush1.msra.mxu0 0.0
    %2446 = vmatprep.mubr.f32.mxu0 0.0
    %2447 = vmatmul.mubr.f32.gmra.mrb[0].mxu0 %v2380
    %v2448 = vpop.f32.mrb[0].mxu0
    %v2449 = vadd.f32 0.0, %v2448
    %v2450 = vpop.f32.mrb[0].mxu0
    %2451 = vdwg.mxu0
    %v2452 = vadd.f32 %v2376, %v2449
    %v2453 = vxor.u32 %v2452, 2147483648
    %v2454 = vmul.f32 %v2453, 1.442695
    %v2455 = vpow.pop %v2454
    %v2456 = vadd.f32 %v2455, 1.0
    %v2457 = vrcp.pop %v2456
    %v2458 = vmul.f32 1.0, %v2457
    %v2459 = vadd.f32 %v2449, %v1817
    %2461 = vrot.lane.b32.xlu0 %v2459, 64
    %v2462 = vpop.permute.xlu0 %2461
    %v2464 = vmul.f32 %v2458, %v2462
    %2466 = vrot.lane.b32.xlu0 %v2464, 64
    %v2467 = vpop.permute.xlu0 %2466
    %v2469 = vadd.f32 %v2376, %v2467
    %v2470 = vtanh.pop %v2469
    %v2471 = vsub.f32 %v2375, %v2470
    %2473 = vrot.lane.b32.xlu0 %v2471, 96
    %v2474 = vpop.permute.xlu0 %2473
    %v2476 = vmul.f32 %v2458, %v2474
    %2478 = vrot.lane.b32.xlu0 %v2476, 32
    %v2479 = vpop.permute.xlu0 %2478
    %v2481 = vadd.f32 %v2470, %v2479
    %v2482 = vld [vmem:[%s274] sm:$0x3]
    %2484 = vrot.lane.b32.xlu0 %v2481, 64
    %v2485 = vpop.permute.xlu0 %2484
    %v2486 = vsel %vm278, %v2485, 0
    %2488 = vmatprep.subr.mxu0 0.0
    %2489 = vmatpush1.msra.mxu0 %v1146
    %2490 = vmatprep.subr.mxu0 0.0
    %2491 = vmatpush1.msra.mxu0 %v1147
    %2492 = vmatprep.subr.mxu0 0.0
    %2493 = vmatpush1.msra.mxu0 %v1148
    %2494 = vmatprep.subr.mxu0 0.0
    %2495 = vmatpush1.msra.mxu0 %v1149
    %2496 = vmatprep.subr.mxu0 0.0
    %2497 = vmatpush1.msra.mxu0 0.0
    %2498 = vmatprep.subr.mxu0 0.0
    %2499 = vmatpush1.msra.mxu0 0.0
    %2500 = vmatprep.subr.mxu0 0.0
    %2501 = vmatpush1.msra.mxu0 0.0
    %2502 = vmatprep.subr.mxu0 0.0
    %2503 = vmatpush1.msra.mxu0 0.0
    %2504 = vmatprep.subr.mxu0 0.0
    %2505 = vmatpush1.msra.mxu0 0.0
    %2506 = vmatprep.subr.mxu0 0.0
    %2507 = vmatpush1.msra.mxu0 0.0
    %2508 = vmatprep.subr.mxu0 0.0
    %2509 = vmatpush1.msra.mxu0 0.0
    %2510 = vmatprep.subr.mxu0 0.0
    %2511 = vmatpush1.msra.mxu0 0.0
    %2512 = vmatprep.subr.mxu0 0.0
    %2513 = vmatpush1.msra.mxu0 0.0
    %2514 = vmatprep.subr.mxu0 0.0
    %2515 = vmatpush1.msra.mxu0 0.0
    %2516 = vmatprep.subr.mxu0 0.0
    %2517 = vmatpush1.msra.mxu0 0.0
    %2518 = vmatprep.subr.mxu0 0.0
    %2519 = vmatpush1.msra.mxu0 0.0
    %2520 = vmatprep.subr.mxu0 0.0
    %2521 = vmatpush1.msra.mxu0 0.0
    %2522 = vmatprep.subr.mxu0 0.0
    %2523 = vmatpush1.msra.mxu0 0.0
    %2524 = vmatprep.subr.mxu0 0.0
    %2525 = vmatpush1.msra.mxu0 0.0
    %2526 = vmatprep.subr.mxu0 0.0
    %2527 = vmatpush1.msra.mxu0 0.0
    %2528 = vmatprep.subr.mxu0 0.0
    %2529 = vmatpush1.msra.mxu0 0.0
    %2530 = vmatprep.subr.mxu0 0.0
    %2531 = vmatpush1.msra.mxu0 0.0
    %2532 = vmatprep.subr.mxu0 0.0
    %2533 = vmatpush1.msra.mxu0 0.0
    %2534 = vmatprep.subr.mxu0 0.0
    %2535 = vmatpush1.msra.mxu0 0.0
    %2536 = vmatprep.subr.mxu0 0.0
    %2537 = vmatpush1.msra.mxu0 0.0
    %2538 = vmatprep.subr.mxu0 0.0
    %2539 = vmatpush1.msra.mxu0 0.0
    %2540 = vmatprep.subr.mxu0 0.0
    %2541 = vmatpush1.msra.mxu0 0.0
    %2542 = vmatprep.subr.mxu0 0.0
    %2543 = vmatpush1.msra.mxu0 0.0
    %2544 = vmatprep.subr.mxu0 0.0
    %2545 = vmatpush1.msra.mxu0 0.0
    %2546 = vmatprep.subr.mxu0 0.0
    %2547 = vmatpush1.msra.mxu0 0.0
    %2548 = vmatprep.subr.mxu0 0.0
    %2549 = vmatpush1.msra.mxu0 0.0
    %2550 = vmatprep.subr.mxu0 0.0
    %2551 = vmatpush1.msra.mxu0 0.0
    %2552 = vmatprep.mubr.f32.mxu0 0.0
    %2553 = vmatmul.mubr.f32.gmra.mrb[0].mxu0 %v2486
    %v2554 = vpop.f32.mrb[0].mxu0
    %v2555 = vadd.f32 0.0, %v2554
    %v2556 = vpop.f32.mrb[0].mxu0
    %2557 = vdwg.mxu0
    %v2558 = vadd.f32 %v2482, %v2555
    %v2559 = vxor.u32 %v2558, 2147483648
    %v2560 = vmul.f32 %v2559, 1.442695
    %v2561 = vpow.pop %v2560
    %v2562 = vadd.f32 %v2561, 1.0
    %v2563 = vrcp.pop %v2562
    %v2564 = vmul.f32 1.0, %v2563
    %v2565 = vadd.f32 %v2555, %v1817
    %2567 = vrot.lane.b32.xlu0 %v2565, 64
    %v2568 = vpop.permute.xlu0 %2567
    %v2570 = vmul.f32 %v2564, %v2568
    %2572 = vrot.lane.b32.xlu0 %v2570, 64
    %v2573 = vpop.permute.xlu0 %2572
    %v2575 = vadd.f32 %v2482, %v2573
    %v2576 = vtanh.pop %v2575
    %v2577 = vsub.f32 %v2481, %v2576
    %2579 = vrot.lane.b32.xlu0 %v2577, 96
    %v2580 = vpop.permute.xlu0 %2579
    %v2582 = vmul.f32 %v2564, %v2580
    %2584 = vrot.lane.b32.xlu0 %v2582, 32
    %v2585 = vpop.permute.xlu0 %2584
    %v2587 = vadd.f32 %v2576, %v2585
    %2589 = vrot.lane.b32.xlu0 %v2587, 64
    %v2590 = vpop.permute.xlu0 %2589
    %s2592 = scalar_lea.vmem [#allocation19], 2
    %2593 = vst.msk [vmem:[%s2592] sm:$0x3] %vm1140, %v2590
    %v2594 = vld [vmem:[%s9] sm:$0xff]
    %v2595 = vld [vmem:[%s9 + $0x8] sm:$0xff]
    %v2596 = vld [vmem:[%s9 + $0x10] sm:$0xff]
    %v2597 = vld [vmem:[%s9 + $0x18] sm:$0xff]
    %v2598 = vld [vmem:[%s10] sm:$0x1]
    %v2600 = vlaneseq
    %v2601 = vshrl.u32 %v2600, 7
    %v2602 = vsub.s32 0, %v2601
    %v2603 = vrot.slane %v2598, %v2602
    %v2605 = vsel %vm278, %v2590, 0
    %2607 = vmatprep.subr.mxu0 0.0
    %2608 = vmatpush1.msra.mxu0 %v2594
    %2609 = vmatprep.subr.mxu0 0.0
    %2610 = vmatpush1.msra.mxu0 %v2595
    %2611 = vmatprep.subr.mxu0 0.0
    %2612 = vmatpush1.msra.mxu0 %v2596
    %2613 = vmatprep.subr.mxu0 0.0
    %2614 = vmatpush1.msra.mxu0 %v2597
    %2615 = vmatprep.subr.mxu0 0.0
    %2616 = vmatpush1.msra.mxu0 0.0
    %2617 = vmatprep.subr.mxu0 0.0
    %2618 = vmatpush1.msra.mxu0 0.0
    %2619 = vmatprep.subr.mxu0 0.0
    %2620 = vmatpush1.msra.mxu0 0.0
    %2621 = vmatprep.subr.mxu0 0.0
    %2622 = vmatpush1.msra.mxu0 0.0
    %2623 = vmatprep.subr.mxu0 0.0
    %2624 = vmatpush1.msra.mxu0 0.0
    %2625 = vmatprep.subr.mxu0 0.0
    %2626 = vmatpush1.msra.mxu0 0.0
    %2627 = vmatprep.subr.mxu0 0.0
    %2628 = vmatpush1.msra.mxu0 0.0
    %2629 = vmatprep.subr.mxu0 0.0
    %2630 = vmatpush1.msra.mxu0 0.0
    %2631 = vmatprep.subr.mxu0 0.0
    %2632 = vmatpush1.msra.mxu0 0.0
    %2633 = vmatprep.subr.mxu0 0.0
    %2634 = vmatpush1.msra.mxu0 0.0
    %2635 = vmatprep.subr.mxu0 0.0
    %2636 = vmatpush1.msra.mxu0 0.0
    %2637 = vmatprep.subr.mxu0 0.0
    %2638 = vmatpush1.msra.mxu0 0.0
    %2639 = vmatprep.subr.mxu0 0.0
    %2640 = vmatpush1.msra.mxu0 0.0
    %2641 = vmatprep.subr.mxu0 0.0
    %2642 = vmatpush1.msra.mxu0 0.0
    %2643 = vmatprep.subr.mxu0 0.0
    %2644 = vmatpush1.msra.mxu0 0.0
    %2645 = vmatprep.subr.mxu0 0.0
    %2646 = vmatpush1.msra.mxu0 0.0
    %2647 = vmatprep.subr.mxu0 0.0
    %2648 = vmatpush1.msra.mxu0 0.0
    %2649 = vmatprep.subr.mxu0 0.0
    %2650 = vmatpush1.msra.mxu0 0.0
    %2651 = vmatprep.subr.mxu0 0.0
    %2652 = vmatpush1.msra.mxu0 0.0
    %2653 = vmatprep.subr.mxu0 0.0
    %2654 = vmatpush1.msra.mxu0 0.0
    %2655 = vmatprep.subr.mxu0 0.0
    %2656 = vmatpush1.msra.mxu0 0.0
    %2657 = vmatprep.subr.mxu0 0.0
    %2658 = vmatpush1.msra.mxu0 0.0
    %2659 = vmatprep.subr.mxu0 0.0
    %2660 = vmatpush1.msra.mxu0 0.0
    %2661 = vmatprep.subr.mxu0 0.0
    %2662 = vmatpush1.msra.mxu0 0.0
    %2663 = vmatprep.subr.mxu0 0.0
    %2664 = vmatpush1.msra.mxu0 0.0
    %2665 = vmatprep.subr.mxu0 0.0
    %2666 = vmatpush1.msra.mxu0 0.0
    %2667 = vmatprep.subr.mxu0 0.0
    %2668 = vmatpush1.msra.mxu0 0.0
    %2669 = vmatprep.subr.mxu0 0.0
    %2670 = vmatpush1.msra.mxu0 0.0
    %2671 = vmatprep.mubr.f32.mxu0 0.0
    %2672 = vmatmul.mubr.f32.gmra.mrb[0].mxu0 %v2605
    %v2673 = vpop.f32.mrb[0].mxu0
    %v2674 = vadd.f32 %v2603, %v2673
    %v2675 = vpop.f32.mrb[0].mxu0
    %2676 = vdwg.mxu0
    %vm2677 = vcmask 123904
    %2678 = vst.msk [vmem:[#allocation18] sm:$0x3] %vm2677, %v2674
    // Predicated region
    $region86: #{lstm_rnn_forward.1} parent=1 // pred_check
      _
    $region87: #{lstm_rnn_forward.1} parent=1 // pred_check_branch
      %2680 = sbr.rel (0) target = $region89
    $region88: #{lstm_rnn_forward.1} parent=1 // pred_region
      %s2682 = ssub.s32 32, 32
      %2683 = vsyncadd [#allocation5], %s2682
      %s2685 = sshll.u32 [#allocation18], 4
      %s2686 = int_to_ptr.vmem [resolvable:$true] %s2685
      %2688 = dma.vmem_to_hbm [thread:$0]  %s2686, 32, %s12, [#allocation5]
    $region89: #{lstm_rnn_forward.1} parent=1 // pred_fallthru
      _
    // Predicated region
    $region90: #{lstm_rnn_forward.1} parent=1 // pred_check
      _
    $region91: #{lstm_rnn_forward.1} parent=1 // pred_check_branch
      %2690 = sbr.rel (0) target = $region93
    $region92: #{lstm_rnn_forward.1} parent=1 // pred_region
      %s2692 = ssub.s32 64, 64
      %2693 = vsyncadd [#allocation20], %s2692
      %s2694 = sshll.u32 [#allocation19], 4
      %s2695 = int_to_ptr.vmem [resolvable:$true] %s2694
      %2700 = dma.vmem_to_hbm [thread:$0]  %s2695, 64, %s13, [#allocation20], 32, 32, 2
    $region93: #{lstm_rnn_forward.1} parent=1 // pred_fallthru
      _
    // Predicated region
    $region94: #{lstm_rnn_forward.1} parent=1 // pred_check
      _
    $region95: #{lstm_rnn_forward.1} parent=1 // pred_check_branch
      %2702 = sbr.rel (0) target = $region97
    $region96: #{lstm_rnn_forward.1} parent=1 // pred_region
      %2703 = dma.done [#allocation5], 32
    $region97: #{lstm_rnn_forward.1} parent=1 // pred_fallthru
      _
    // Predicated region
    $region98: #{lstm_rnn_forward.1} parent=1 // pred_check
      _
    $region99: #{lstm_rnn_forward.1} parent=1 // pred_check_branch
      %2705 = sbr.rel (0) target = $region101
    $region100: #{lstm_rnn_forward.1} parent=1 // pred_region
      %2706 = dma.done [#allocation20], 64
    $region101: #{lstm_rnn_forward.1} parent=1 // pred_fallthru
      _
    %2707 = vsyncpa [#allocation4], 1
    %2708 = vsyncpa [#allocation7], 1
    %2709 = vsyncpa [#allocation10], 1
    %2710 = vsyncpa [#allocation13], 1
    %2711 = vsyncpa [#allocation16], 1
    %2712 = vsyncpa [#allocation5], 1
    %2713 = vsyncpa [#allocation20], 1

</llo_original>
